<compile_context>
chip_gen: v7x
topology: tpu7x:2x2x1
jax: 0.10.0
libtpu: 0.0.40
codegen_flags: <defaults>
</compile_context>

<pallas_src>
import functools

import jax
import jax.numpy as jnp
from jax import lax
from jax.experimental import pallas as pl
from jax.experimental.pallas import tpu as pltpu

EPS = 1e-5
LANE = 128
_VMEM_LIMIT_BYTES = 32 * 1024 * 1024   # explicit scoped-VMEM budget; safe on v5e/v6e/v7x
_DEFAULT_ROW_TILE = 4096               # retune per generation (raise on v7x w/ bf16 intermediates)


# ------------------------------- small helpers ------------------------------ #

def _round_up(x, m):
    return (x + m - 1) // m * m


def _pick_row_tile(m, target, bytes_per_row=None):
    """Largest multiple-of-8 divisor of m that is <= target and fits the VMEM budget."""
    t = min(m, target)
    if bytes_per_row:
        t = min(t, max(8, (_VMEM_LIMIT_BYTES // 3) // max(bytes_per_row, 1)))
    t -= t % 8
    while t >= 8:
        if m % t == 0:
            return t
        t -= 8
    # TODO(synk): masked ragged-tail tiling instead of falling back to one full block.
    return m


def _pad_last(a, to):
    pad = to - a.shape[-1]
    if pad == 0:
        return a
    return jnp.pad(a, [(0, 0)] * (a.ndim - 1) + [(0, pad)])


def _pad2(a, rows, cols):
    return jnp.pad(a, ((0, rows - a.shape[0]), (0, cols - a.shape[1])))


def _fold_bn(partial_stats, gamma, beta, m):
    """partial_stats: (G, 2, C) per-grid-step [sum; sumsq] -> folded (scale, shift)."""
    # NOTE: E[x^2]-E[x]^2 in f32; fine at these magnitudes (post-BN activations are O(1)).
    stats = jnp.sum(partial_stats, axis=0)            # (2, C)
    mean = stats[0] / m
    var = jnp.maximum(stats[1] / m - mean * mean, 0.0)
    scale = gamma * lax.rsqrt(var + EPS)
    shift = beta - mean * scale
    return jnp.stack([scale, shift], axis=0)           # (2, C) f32


# ------------------------------- Pallas kernels ----------------------------- #

def _mm_stats_kernel(x_ref, w_ref, y_ref, stats_ref, *, cdt):
    """y = x @ w (MXU, cdt operands, f32 acc); per-step partial BN stats of y."""
    y = jnp.dot(x_ref[...].astype(cdt), w_ref[...], preferred_element_type=jnp.float32)
    y_ref[...] = y.astype(y_ref.dtype)
    stats_ref[0:1, :] = jnp.sum(y, axis=0, keepdims=True)
    stats_ref[1:2, :] = jnp.sum(y * y, axis=0, keepdims=True)


def _bnrelu_mm_stats_kernel(x_ref, ss_ref, w_ref, y_ref, stats_ref, *, cdt):
    """a = relu(x*scale + shift) (previous BN, folded); y = a @ w; partial stats of y."""
    a = jnp.maximum(x_ref[...].astype(jnp.float32) * ss_ref[0:1, :] + ss_ref[1:2, :], 0.0)
    y = jnp.dot(a.astype(cdt), w_ref[...], preferred_element_type=jnp.float32)
    y_ref[...] = y.astype(y_ref.dtype)
    stats_ref[0:1, :] = jnp.sum(y, axis=0, keepdims=True)
    stats_ref[1:2, :] = jnp.sum(y * y, axis=0, keepdims=True)


def _bnrelu_conv3x3_stats_kernel(y1_ref, ss_ref, w_ref, y2_ref, stats_ref, *, H, W, cdt):
    """Per image: a = relu(bn1(y1)); 3x3 conv (pad=1, stride=1) via an in-VMEM im2col
    (HW, 9C) operand and a single long-K MXU matmul; per-step partial BN2 stats."""
    hw = H * W
    c = y1_ref.shape[-1]

    # bn1 (folded scale/shift) + relu, upcast from the stored intermediate dtype.
    a = jnp.maximum(y1_ref[...].astype(jnp.float32) * ss_ref[0:1, :] + ss_ref[1:2, :], 0.0)

    # Column-border masking applied to the *source* once per dw (those columns are never
    # legitimately read by that tap), then cast to the MXU dtype once per variant
    # (3 casts + 2 selects total, hoisted out of the 9-tap loop).
    col = lax.broadcasted_iota(jnp.int32, (hw, 1), 0) % W
    variants = {
        -1: jnp.where(col == W - 1, 0.0, a).astype(cdt),   # sources for dw = -1 taps
        0: a.astype(cdt),
        1: jnp.where(col == 0, 0.0, a).astype(cdt),        # sources for dw = +1 taps
    }

    # Zero-pad (W+1) flat rows above and below so every (dh, dw) shift is a plain
    # static slice (top/bottom image borders read the zero pad; no row masks).
    zpad = jnp.zeros((W + 1, c), cdt)
    padded = {dw: jnp.concatenate([zpad, v, zpad], axis=0) for dw, v in variants.items()}

    # im2col in VMEM: (HW, 9*C), tap order k = (dh+1)*3 + (dw+1) matches the weight layout.
    taps = []
    for dh in (-1, 0, 1):
        for dw in (-1, 0, 1):
            start = (1 + dh) * W + dw + 1               # static slice offset
            taps.append(padded[dw][start:start + hw, :])
    cols = jnp.concatenate(taps, axis=-1)               # (HW, 9*C) in cdt

    # Single long-K MXU matmul; the conv output is stored exactly once.
    y2 = jnp.dot(cols, w_ref[...], preferred_element_type=jnp.float32)
    y2_ref[...] = y2.astype(y2_ref.dtype)
    stats_ref[0:1, :] = jnp.sum(y2, axis=0, keepdims=True)
    stats_ref[1:2, :] = jnp.sum(y2 * y2, axis=0, keepdims=True)


def _bn_add_relu_kernel(y_ref, ss_ref, res_ref, o_ref):
    o_ref[...] = jnp.maximum(
        y_ref[...].astype(jnp.float32) * ss_ref[0:1, :] + ss_ref[1:2, :] + res_ref[...], 0.0)


# ---------------------------- pallas_call wrappers --------------------------- #

def _conv1x1_stats(x_flat, w, ss, *, row_tile, cdt, out_dtype):
    """[optional folded BN+ReLU] + 1x1 conv (matmul) + per-step BN-stats, row-tiled."""
    m, k_cols = x_flat.shape
    cout = w.shape[-1]
    in_bytes = jnp.dtype(x_flat.dtype).itemsize
    out_bytes = jnp.dtype(out_dtype).itemsize
    tm = _pick_row_tile(m, row_tile, bytes_per_row=2 * (k_cols * in_bytes + cout * out_bytes))
    grid_m = m // tm
    flops = 2 * m * k_cols * cout
    bytes_acc = (m * k_cols * in_bytes + w.size * jnp.dtype(w.dtype).itemsize
                 + m * cout * out_bytes + grid_m * 2 * cout * 4)

    if ss is None:
        kernel = functools.partial(_mm_stats_kernel, cdt=cdt)
        in_specs = [
            pl.BlockSpec((tm, k_cols), lambda i: (i, 0)),
            pl.BlockSpec((k_cols, cout), lambda i: (0, 0)),
        ]
        args = (x_flat, w)
    else:
        kernel = functools.partial(_bnrelu_mm_stats_kernel, cdt=cdt)
        in_specs = [
            pl.BlockSpec((tm, k_cols), lambda i: (i, 0)),
            pl.BlockSpec((2, k_cols), lambda i: (0, 0)),
            pl.BlockSpec((k_cols, cout), lambda i: (0, 0)),
        ]
        args = (x_flat, ss, w)

    y, stats = pl.pallas_call(
        kernel,
        grid=(grid_m,),
        in_specs=in_specs,
        out_specs=[
            pl.BlockSpec((tm, cout), lambda i: (i, 0)),
            pl.BlockSpec((None, 2, cout), lambda i: (i, 0, 0)),   # per-step partial stats
        ],
        out_shape=[
            jax.ShapeDtypeStruct((m, cout), out_dtype),
            jax.ShapeDtypeStruct((grid_m, 2, cout), jnp.float32),
        ],
        compiler_params=pltpu.CompilerParams(
            dimension_semantics=("parallel",),                    # no resident accumulator
            vmem_limit_bytes=_VMEM_LIMIT_BYTES),
        cost_estimate=pl.CostEstimate(flops=flops, transcendentals=0,
                                      bytes_accessed=bytes_acc),
    )(*args)
    return y, stats


def _conv3x3_stats(y1_img, ss, w_flat, *, H, W, cdt, out_dtype):
    """bn1+relu fused with the 3x3 conv (im2col + one long-K matmul), one image per step."""
    n, hw, c = y1_img.shape
    cout = w_flat.shape[-1]
    in_bytes = jnp.dtype(y1_img.dtype).itemsize
    out_bytes = jnp.dtype(out_dtype).itemsize
    flops = 2 * n * hw * (9 * c) * cout
    bytes_acc = (n * hw * c * in_bytes + w_flat.size * jnp.dtype(w_flat.dtype).itemsize
                 + n * hw * cout * out_bytes + n * 2 * cout * 4)
    kernel = functools.partial(_bnrelu_conv3x3_stats_kernel, H=H, W=W, cdt=cdt)
    # TODO(synk): tile H (with halo rows) for very large feature maps; whole-image
    # blocks are comfortably within the VMEM budget for ResNet bottleneck sizes.
    y2, stats = pl.pallas_call(
        kernel,
        grid=(n,),
        in_specs=[
            pl.BlockSpec((None, hw, c), lambda i: (i, 0, 0)),
            pl.BlockSpec((2, c), lambda i: (0, 0)),
            pl.BlockSpec((9 * c, cout), lambda i: (0, 0)),
        ],
        out_specs=[
            pl.BlockSpec((None, hw, cout), lambda i: (i, 0, 0)),
            pl.BlockSpec((None, 2, cout), lambda i: (i, 0, 0)),   # per-step partial stats
        ],
        out_shape=[
            jax.ShapeDtypeStruct((n, hw, cout), out_dtype),
            jax.ShapeDtypeStruct((n, 2, cout), jnp.float32),
        ],
        compiler_params=pltpu.CompilerParams(
            dimension_semantics=("parallel",),
            vmem_limit_bytes=_VMEM_LIMIT_BYTES),
        cost_estimate=pl.CostEstimate(flops=flops, transcendentals=0,
                                      bytes_accessed=bytes_acc),
    )(y1_img, ss, w_flat)
    return y2, stats


def _bn_add_relu(y3, ss, res, *, row_tile):
    """bn3 (folded) + identity residual + ReLU; elementwise, output aliases y3's buffer."""
    m, c = y3.shape
    tm = _pick_row_tile(m, row_tile, bytes_per_row=2 * 3 * c * 4)
    return pl.pallas_call(
        _bn_add_relu_kernel,
        grid=(m // tm,),
        in_specs=[
            pl.BlockSpec((tm, c), lambda i: (i, 0)),
            pl.BlockSpec((2, c), lambda i: (0, 0)),
            pl.BlockSpec((tm, c), lambda i: (i, 0)),
        ],
        out_specs=pl.BlockSpec((tm, c), lambda i: (i, 0)),
        out_shape=jax.ShapeDtypeStruct((m, c), jnp.float32),
        input_output_aliases={0: 0},                      # reuse y3's HBM buffer
        compiler_params=pltpu.CompilerParams(
            dimension_semantics=("parallel",),
            vmem_limit_bytes=_VMEM_LIMIT_BYTES),
        cost_estimate=pl.CostEstimate(flops=3 * m * c, transcendentals=0,
                                      bytes_accessed=3 * m * c * 4),
    )(y3, ss, res)


# --------------------------------- forward ---------------------------------- #

@functools.partial(jax.jit, static_argnames=("stride", "compute_dtype", "row_tile"))
def bottleneck_forward(x_nchw, params, stride=1, compute_dtype=jnp.bfloat16,
                       row_tile=_DEFAULT_ROW_TILE):
    """x_nchw: (N, inplanes, H, W) float32 -> (N, planes*4, H, W) float32."""
    (w1, g1, b1, w2, g2, b2, w3, g3, b3) = params
    n, cin, hgt, wid = x_nchw.shape
    planes = w1.shape[0]
    cout = w3.shape[0]

    # Module defaults: stride=1, downsample=None -> identity residual.
    assert stride == 1, "only the module-default stride=1 path is implemented"
    assert cin == cout, "identity residual requires inplanes == planes * expansion"

    cin_p = _round_up(cin, LANE)
    cp = _round_up(planes, LANE)
    cout_p = _round_up(cout, LANE)
    m = n * hgt * wid
    hw = hgt * wid
    cdt = compute_dtype

    # NCHW -> NHWC rows; zero-pad channels to a lane-dense multiple of 128.
    x_flat = _pad_last(jnp.transpose(x_nchw, (0, 2, 3, 1)).reshape(m, cin), cin_p)

    # Weights: 1x1 convs are (Cin, Cout) matmuls; the 3x3 is a (9*Cin, Cout) long-K matmul
    # whose row blocks follow the tap order k = kh*3 + kw.  Pad + cast (bf16 MXU).
    w1m = _pad2(w1.reshape(planes, cin).T, cin_p, cp).astype(cdt)
    w2r = jnp.transpose(w2, (2, 3, 1, 0))                                   # (kh, kw, in, out)
    w2m = jnp.pad(w2r, ((0, 0), (0, 0), (0, cp - planes), (0, cp - planes))
                  ).reshape(9 * cp, cp).astype(cdt)
    w3m = _pad2(w3.reshape(cout, planes).T, cp, cout_p).astype(cdt)

    g1p, b1p = _pad_last(g1, cp), _pad_last(b1, cp)
    g2p, b2p = _pad_last(g2, cp), _pad_last(b2, cp)
    g3p, b3p = _pad_last(g3, cout_p), _pad_last(b3, cout_p)

    # Stage 1: conv1 (1x1) + bn1 partial stats; y1 stored in the compute dtype.
    y1, st1 = _conv1x1_stats(x_flat, w1m, None, row_tile=row_tile, cdt=cdt, out_dtype=cdt)
    ss1 = _fold_bn(st1, g1p, b1p, m)

    # Stage 2: bn1+relu fused with conv2 (3x3, im2col + one matmul) + bn2 partial stats.
    y2, st2 = _conv3x3_stats(y1.reshape(n, hw, cp), ss1, w2m,
                             H=hgt, W=wid, cdt=cdt, out_dtype=cdt)
    ss2 = _fold_bn(st2, g2p, b2p, m)

    # Stage 3: bn2+relu fused with conv3 (1x1) + bn3 partial stats; y3 stays f32
    # (residual precision + buffer aliasing with the final output).
    y3, st3 = _conv1x1_stats(y2.reshape(m, cp), w3m, ss2,
                             row_tile=row_tile, cdt=cdt, out_dtype=jnp.float32)
    ss3 = _fold_bn(st3, g3p, b3p, m)

    # Stage 4: bn3 + identity residual + relu (aliases y3's buffer).
    out = _bn_add_relu(y3, ss3, x_flat, row_tile=row_tile)

    out = out.reshape(n, hgt, wid, cout_p)[..., :cout]
    return jnp.transpose(out, (0, 3, 1, 2))


# ------------------------------ pure-JAX reference --------------------------- #

def _ref_conv(x, wgt, stride=1, padding=0, conv_dtype=jnp.float32):
    return lax.conv_general_dilated(
        x.astype(conv_dtype), wgt.astype(conv_dtype), (stride, stride),
        [(padding, padding)] * 2,
        dimension_numbers=("NCHW", "OIHW", "NCHW"),
        preferred_element_type=jnp.float32)


def _ref_bn(x, g, b):
    mean = x.mean(axis=(0, 2, 3), keepdims=True)
    var = jnp.square(x - mean).mean(axis=(0, 2, 3), keepdims=True)
    return (x - mean) / jnp.sqrt(var + EPS) * g.reshape(1, -1, 1, 1) + b.reshape(1, -1, 1, 1)


@functools.partial(jax.jit, static_argnames=("stride", "conv_dtype"))
def bottleneck_reference(x, params, stride=1, conv_dtype=jnp.float32):
    (w1, g1, b1, w2, g2, b2, w3, g3, b3) = params
    out = jax.nn.relu(_ref_bn(_ref_conv(x, w1, conv_dtype=conv_dtype), g1, b1))
    out = jax.nn.relu(_ref_bn(_ref_conv(out, w2, stride=stride, padding=1,
                                        conv_dtype=conv_dtype), g2, b2))
    out = _ref_bn(_ref_conv(out, w3, conv_dtype=conv_dtype), g3, b3)
    return jax.nn.relu(out + x)


# ----------------------------------- main ------------------------------------ #

if __name__ == "__main__":
    N, H, W = 2, 16, 16
    planes = 4
    inplanes = planes * 4          # identity residual requires inplanes == planes * expansion
    stride = 1

    key = jax.random.PRNGKey(0)
    ks = jax.random.split(key, 10)
    f32 = jnp.float32

    w1 = 0.2 * jax.random.normal(ks[0], (planes, inplanes, 1, 1), f32)
    w2 = 0.2 * jax.random.normal(ks[1], (planes, planes, 3, 3), f32)
    w3 = 0.2 * jax.random.normal(ks[2], (planes * 4, planes, 1, 1), f32)
    g1 = 1.0 + 0.1 * jax.random.normal(ks[3], (planes,), f32)
    b1 = 0.1 * jax.random.normal(ks[4], (planes,), f32)
    g2 = 1.0 + 0.1 * jax.random.normal(ks[5], (planes,), f32)
    b2 = 0.1 * jax.random.normal(ks[6], (planes,), f32)
    g3 = 1.0 + 0.1 * jax.random.normal(ks[7], (planes * 4,), f32)
    b3 = 0.1 * jax.random.normal(ks[8], (planes * 4,), f32)
    params = (w1, g1, b1, w2, g2, b2, w3, g3, b3)

    x = jax.random.normal(ks[9], (N, inplanes, H, W), f32)

    # 1) Exact-semantics check: f32 operands and f32 intermediates vs the f32 reference.
    #    row_tile=128 forces multi-step grids so the per-step partial-stats reduction is
    #    exercised across tiles.
    out_f32 = jax.block_until_ready(
        bottleneck_forward(x, params, stride=stride, compute_dtype=jnp.float32, row_tile=128))
    ref_f32 = jax.block_until_ready(bottleneck_reference(x, params, stride=stride))
    assert out_f32.shape == (N, planes * 4, H, W)
    err_f32 = float(jnp.max(jnp.abs(out_f32 - ref_f32)))
    assert err_f32 < 1e-3, f"f32 path mismatch: {err_f32}"

    # 2) Performance path: bf16 MXU operands + bf16-stored intermediates (f32 accumulation
    #    and f32 BN math), compared against a reference using bf16 conv operands.
    out_bf16 = jax.block_until_ready(
        bottleneck_forward(x, params, stride=stride, compute_dtype=jnp.bfloat16, row_tile=128))
    ref_bf16 = jax.block_until_ready(
        bottleneck_reference(x, params, stride=stride, conv_dtype=jnp.bfloat16))
    err_bf16 = float(jnp.max(jnp.abs(out_bf16 - ref_bf16)))
    assert err_bf16 < 5e-2, f"bf16 path mismatch: {err_bf16}"

    print("KERNEL_OK")
</pallas_src>

<mosaic_0001>
module attributes {stable_mosaic.version = 11 : i64} {
  func.func @_mm_stats_kernel(%arg0: i32, %arg1: memref<128x128xf32, #tpu.memory_space<vmem>>, %arg2: memref<128x128xf32, #tpu.memory_space<vmem>>, %arg3: memref<128x128xf32, #tpu.memory_space<vmem>>, %arg4: memref<1x2x128xf32, #tpu.memory_space<vmem>>) attributes {dimension_semantics = [#tpu.dimension_semantics<parallel>], iteration_bounds = array<i64: 4>, scalar_prefetch = 0 : i64, scratch_operands = 0 : i64, tpu.core_type = #tpu.core_type<tc>, window_params = [{transform_indices = @transform_0, window_bounds = array<i64: 128, 128>}, {pipeline_mode = #tpu.pipeline_mode<synchronous>, transform_indices = @transform_1, window_bounds = array<i64: 128, 128>}, {transform_indices = @transform_2, window_bounds = array<i64: 128, 128>}, {transform_indices = @transform_3, window_bounds = array<i64: 1, 2, 128>}]} {
    %c0 = arith.constant 0 : index
    %c0_0 = arith.constant 0 : index
    %0 = vector.load %arg1[%c0, %c0_0] : memref<128x128xf32, #tpu.memory_space<vmem>>, vector<128x128xf32>
    %c0_1 = arith.constant 0 : index
    %c0_2 = arith.constant 0 : index
    %1 = vector.load %arg2[%c0_1, %c0_2] : memref<128x128xf32, #tpu.memory_space<vmem>>, vector<128x128xf32>
    %cst = arith.constant dense<0.000000e+00> : vector<128x128xf32>
    %2 = tpu.matmul %0, %1, %cst {dimension_numbers = #tpu.dot_dimension_numbers<[1], [0], [0], [1], [0, 0, 1, 1], [], []>} : vector<128x128xf32>, vector<128x128xf32>, vector<128x128xf32> -> vector<128x128xf32>
    %c0_3 = arith.constant 0 : index
    %c0_4 = arith.constant 0 : index
    %3 = vector.load %arg3[%c0_3, %c0_4] : memref<128x128xf32, #tpu.memory_space<vmem>>, vector<128x128xf32>
    tpu.vector_store %arg3[%c0_3, %c0_4], %2 {strides = array<i32>} : memref<128x128xf32, #tpu.memory_space<vmem>>, vector<128x128xf32>,
    %cst_5 = arith.constant dense<0.000000e+00> : vector<128xf32>
    %4 = vector.multi_reduction <add>, %2, %cst_5 [0] : vector<128x128xf32> to vector<128xf32>
    %5 = vector.shape_cast %4 : vector<128xf32> to vector<1x128xf32>
    %c0_6 = arith.constant 0 : index
    %c0_7 = arith.constant 0 : index
    %c0_8 = arith.constant 0 : index
    %6 = vector.load %arg4[%c0_6, %c0_7, %c0_8] : memref<1x2x128xf32, #tpu.memory_space<vmem>>, vector<1x1x128xf32>
    %7 = vector.shape_cast %6 : vector<1x1x128xf32> to vector<1x128xf32>
    %8 = vector.shape_cast %5 : vector<1x128xf32> to vector<1x1x128xf32>
    tpu.vector_store %arg4[%c0_6, %c0_7, %c0_8], %8 {strides = array<i32>} : memref<1x2x128xf32, #tpu.memory_space<vmem>>, vector<1x1x128xf32>,
    %9 = arith.mulf %2, %2 : vector<128x128xf32>
    %cst_9 = arith.constant dense<0.000000e+00> : vector<128xf32>
    %10 = vector.multi_reduction <add>, %9, %cst_9 [0] : vector<128x128xf32> to vector<128xf32>
    %11 = vector.shape_cast %10 : vector<128xf32> to vector<1x128xf32>
    %c0_10 = arith.constant 0 : index
    %c1 = arith.constant 1 : index
    %c0_11 = arith.constant 0 : index
    %12 = vector.load %arg4[%c0_10, %c1, %c0_11] : memref<1x2x128xf32, #tpu.memory_space<vmem>>, vector<1x1x128xf32>
    %13 = vector.shape_cast %12 : vector<1x1x128xf32> to vector<1x128xf32>
    %14 = vector.shape_cast %11 : vector<1x128xf32> to vector<1x1x128xf32>
    tpu.vector_store %arg4[%c0_10, %c1, %c0_11], %14 {strides = array<i32>} : memref<1x2x128xf32, #tpu.memory_space<vmem>>, vector<1x1x128xf32>,
    return
  }
  func.func @transform_0(%arg0: i32) -> (i32, i32) {
    %c0_i32 = arith.constant 0 : i32
    %c0_i32_0 = arith.constant 0 : i32
    return %arg0, %c0_i32 : i32, i32
  }
  func.func @transform_1(%arg0: i32) -> (i32, i32) {
    %c0_i32 = arith.constant 0 : i32
    %c0_i32_0 = arith.constant 0 : i32
    %c0_i32_1 = arith.constant 0 : i32
    return %c0_i32, %c0_i32_0 : i32, i32
  }
  func.func @transform_2(%arg0: i32) -> (i32, i32) {
    %c0_i32 = arith.constant 0 : i32
    %c0_i32_0 = arith.constant 0 : i32
    return %arg0, %c0_i32 : i32, i32
  }
  func.func @transform_3(%arg0: i32) -> (i32, i32, i32) {
    %c0_i32 = arith.constant 0 : i32
    %c0_i32_0 = arith.constant 0 : i32
    %c0_i32_1 = arith.constant 0 : i32
    return %arg0, %c0_i32, %c0_i32_0 : i32, i32, i32
  }
}

module attributes {stable_mosaic.version = 11 : i64} {
  func.func @_bnrelu_mm_stats_kernel(%arg0: i32, %arg1: memref<128x128xf32, #tpu.memory_space<vmem>>, %arg2: memref<2x128xf32, #tpu.memory_space<vmem>>, %arg3: memref<128x128xf32, #tpu.memory_space<vmem>>, %arg4: memref<128x128xf32, #tpu.memory_space<vmem>>, %arg5: memref<1x2x128xf32, #tpu.memory_space<vmem>>) attributes {dimension_semantics = [#tpu.dimension_semantics<parallel>], iteration_bounds = array<i64: 4>, scalar_prefetch = 0 : i64, scratch_operands = 0 : i64, tpu.core_type = #tpu.core_type<tc>, window_params = [{transform_indices = @transform_0, window_bounds = array<i64: 128, 128>}, {pipeline_mode = #tpu.pipeline_mode<synchronous>, transform_indices = @transform_1, window_bounds = array<i64: 2, 128>}, {pipeline_mode = #tpu.pipeline_mode<synchronous>, transform_indices = @transform_2, window_bounds = array<i64: 128, 128>}, {transform_indices = @transform_3, window_bounds = array<i64: 128, 128>}, {transform_indices = @transform_4, window_bounds = array<i64: 1, 2, 128>}]} {
    %c0 = arith.constant 0 : index
    %c0_0 = arith.constant 0 : index
    %0 = vector.load %arg1[%c0, %c0_0] : memref<128x128xf32, #tpu.memory_space<vmem>>, vector<128x128xf32>
    %c0_1 = arith.constant 0 : index
    %c0_2 = arith.constant 0 : index
    %1 = vector.load %arg2[%c0_1, %c0_2] : memref<2x128xf32, #tpu.memory_space<vmem>>, vector<1x128xf32>
    %2 = vector.broadcast %1 : vector<1x128xf32> to vector<128x128xf32>
    %3 = arith.mulf %0, %2 : vector<128x128xf32>
    %c1 = arith.constant 1 : index
    %c0_3 = arith.constant 0 : index
    %4 = vector.load %arg2[%c1, %c0_3] : memref<2x128xf32, #tpu.memory_space<vmem>>, vector<1x128xf32>
    %5 = vector.broadcast %4 : vector<1x128xf32> to vector<128x128xf32>
    %6 = arith.addf %3, %5 : vector<128x128xf32>
    %cst = arith.constant 0.000000e+00 : f32
    %7 = vector.broadcast %cst : f32 to vector<128x128xf32>
    %8 = arith.maximumf %6, %7 : vector<128x128xf32>
    %c0_4 = arith.constant 0 : index
    %c0_5 = arith.constant 0 : index
    %9 = vector.load %arg3[%c0_4, %c0_5] : memref<128x128xf32, #tpu.memory_space<vmem>>, vector<128x128xf32>
    %cst_6 = arith.constant dense<0.000000e+00> : vector<128x128xf32>
    %10 = tpu.matmul %8, %9, %cst_6 {dimension_numbers = #tpu.dot_dimension_numbers<[1], [0], [0], [1], [0, 0, 1, 1], [], []>} : vector<128x128xf32>, vector<128x128xf32>, vector<128x128xf32> -> vector<128x128xf32>
    %c0_7 = arith.constant 0 : index
    %c0_8 = arith.constant 0 : index
    %11 = vector.load %arg4[%c0_7, %c0_8] : memref<128x128xf32, #tpu.memory_space<vmem>>, vector<128x128xf32>
    tpu.vector_store %arg4[%c0_7, %c0_8], %10 {strides = array<i32>} : memref<128x128xf32, #tpu.memory_space<vmem>>, vector<128x128xf32>,
    %cst_9 = arith.constant dense<0.000000e+00> : vector<128xf32>
    %12 = vector.multi_reduction <add>, %10, %cst_9 [0] : vector<128x128xf32> to vector<128xf32>
    %13 = vector.shape_cast %12 : vector<128xf32> to vector<1x128xf32>
    %c0_10 = arith.constant 0 : index
    %c0_11 = arith.constant 0 : index
    %c0_12 = arith.constant 0 : index
    %14 = vector.load %arg5[%c0_10, %c0_11, %c0_12] : memref<1x2x128xf32, #tpu.memory_space<vmem>>, vector<1x1x128xf32>
    %15 = vector.shape_cast %14 : vector<1x1x128xf32> to vector<1x128xf32>
    %16 = vector.shape_cast %13 : vector<1x128xf32> to vector<1x1x128xf32>
    tpu.vector_store %arg5[%c0_10, %c0_11, %c0_12], %16 {strides = array<i32>} : memref<1x2x128xf32, #tpu.memory_space<vmem>>, vector<1x1x128xf32>,
    %17 = arith.mulf %10, %10 : vector<128x128xf32>
    %cst_13 = arith.constant dense<0.000000e+00> : vector<128xf32>
    %18 = vector.multi_reduction <add>, %17, %cst_13 [0] : vector<128x128xf32> to vector<128xf32>
    %19 = vector.shape_cast %18 : vector<128xf32> to vector<1x128xf32>
    %c0_14 = arith.constant 0 : index
    %c1_15 = arith.constant 1 : index
    %c0_16 = arith.constant 0 : index
    %20 = vector.load %arg5[%c0_14, %c1_15, %c0_16] : memref<1x2x128xf32, #tpu.memory_space<vmem>>, vector<1x1x128xf32>
    %21 = vector.shape_cast %20 : vector<1x1x128xf32> to vector<1x128xf32>
    %22 = vector.shape_cast %19 : vector<1x128xf32> to vector<1x1x128xf32>
    tpu.vector_store %arg5[%c0_14, %c1_15, %c0_16], %22 {strides = array<i32>} : memref<1x2x128xf32, #tpu.memory_space<vmem>>, vector<1x1x128xf32>,
    return
  }
  func.func @transform_0(%arg0: i32) -> (i32, i32) {
    %c0_i32 = arith.constant 0 : i32
    %c0_i32_0 = arith.constant 0 : i32
    return %arg0, %c0_i32 : i32, i32
  }
  func.func @transform_1(%arg0: i32) -> (i32, i32) {
    %c0_i32 = arith.constant 0 : i32
    %c0_i32_0 = arith.constant 0 : i32
    %c0_i32_1 = arith.constant 0 : i32
    return %c0_i32, %c0_i32_0 : i32, i32
  }
  func.func @transform_2(%arg0: i32) -> (i32, i32) {
    %c0_i32 = arith.constant 0 : i32
    %c0_i32_0 = arith.constant 0 : i32
    %c0_i32_1 = arith.constant 0 : i32
    return %c0_i32, %c0_i32_0 : i32, i32
  }
  func.func @transform_3(%arg0: i32) -> (i32, i32) {
    %c0_i32 = arith.constant 0 : i32
    %c0_i32_0 = arith.constant 0 : i32
    return %arg0, %c0_i32 : i32, i32
  }
  func.func @transform_4(%arg0: i32) -> (i32, i32, i32) {
    %c0_i32 = arith.constant 0 : i32
    %c0_i32_0 = arith.constant 0 : i32
    %c0_i32_1 = arith.constant 0 : i32
    return %arg0, %c0_i32, %c0_i32_0 : i32, i32, i32
  }
}

module attributes {stable_mosaic.version = 11 : i64} {
  func.func @_bnrelu_conv3x3_stats_kernel(%arg0: i32, %arg1: memref<1x256x128xf32, #tpu.memory_space<vmem>>, %arg2: memref<2x128xf32, #tpu.memory_space<vmem>>, %arg3: memref<1152x128xf32, #tpu.memory_space<vmem>>, %arg4: memref<1x256x128xf32, #tpu.memory_space<vmem>>, %arg5: memref<1x2x128xf32, #tpu.memory_space<vmem>>) attributes {dimension_semantics = [#tpu.dimension_semantics<parallel>], iteration_bounds = array<i64: 2>, scalar_prefetch = 0 : i64, scratch_operands = 0 : i64, tpu.core_type = #tpu.core_type<tc>, window_params = [{transform_indices = @transform_0, window_bounds = array<i64: 1, 256, 128>}, {pipeline_mode = #tpu.pipeline_mode<synchronous>, transform_indices = @transform_1, window_bounds = array<i64: 2, 128>}, {pipeline_mode = #tpu.pipeline_mode<synchronous>, transform_indices = @transform_2, window_bounds = array<i64: 1152, 128>}, {transform_indices = @transform_3, window_bounds = array<i64: 1, 256, 128>}, {transform_indices = @transform_4, window_bounds = array<i64: 1, 2, 128>}]} {
    %c0 = arith.constant 0 : index
    %c0_0 = arith.constant 0 : index
    %c0_1 = arith.constant 0 : index
    %0 = vector.load %arg1[%c0, %c0_0, %c0_1] : memref<1x256x128xf32, #tpu.memory_space<vmem>>, vector<1x256x128xf32>
    %1 = vector.shape_cast %0 : vector<1x256x128xf32> to vector<256x128xf32>
    %c0_2 = arith.constant 0 : index
    %c0_3 = arith.constant 0 : index
    %2 = vector.load %arg2[%c0_2, %c0_3] : memref<2x128xf32, #tpu.memory_space<vmem>>, vector<1x128xf32>
    %3 = vector.broadcast %2 : vector<1x128xf32> to vector<256x128xf32>
    %4 = arith.mulf %1, %3 : vector<256x128xf32>
    %c1 = arith.constant 1 : index
    %c0_4 = arith.constant 0 : index
    %5 = vector.load %arg2[%c1, %c0_4] : memref<2x128xf32, #tpu.memory_space<vmem>>, vector<1x128xf32>
    %6 = vector.broadcast %5 : vector<1x128xf32> to vector<256x128xf32>
    %7 = arith.addf %4, %6 : vector<256x128xf32>
    %cst = arith.constant 0.000000e+00 : f32
    %8 = vector.broadcast %cst : f32 to vector<256x128xf32>
    %9 = arith.maximumf %7, %8 : vector<256x128xf32>
    %10 = tpu.iota {dimensions = array<i32: 0>} : vector<256x1xi32>
    %c16_i32 = arith.constant 16 : i32
    %c0_i32 = arith.constant 0 : i32
    %11 = arith.cmpi eq, %c16_i32, %c0_i32 : i32
    %c1_i32 = arith.constant 1 : i32
    %12 = arith.select %11, %c1_i32, %c16_i32 : i32
    %13 = vector.broadcast %12 : i32 to vector<256x1xi32>
    %14 = arith.remsi %10, %13 : vector<256x1xi32>
    %c0_i32_5 = arith.constant 0 : i32
    %15 = vector.broadcast %c0_i32_5 : i32 to vector<256x1xi32>
    %16 = arith.cmpi ne, %14, %15 : vector<256x1xi32>
    %c0_i32_6 = arith.constant 0 : i32
    %17 = vector.broadcast %c0_i32_6 : i32 to vector<256x1xi32>
    %18 = arith.cmpi slt, %14, %17 : vector<256x1xi32>
    %c0_i32_7 = arith.constant 0 : i32
    %19 = arith.cmpi slt, %12, %c0_i32_7 : i32
    %20 = vector.broadcast %19 : i1 to vector<256x1xi1>
    %21 = vector.broadcast %20 : vector<256x1xi1> to vector<256x1xi1>
    %22 = arith.xori %18, %21 : vector<256x1xi1>
    %23 = arith.andi %22, %16 : vector<256x1xi1>
    %24 = vector.broadcast %12 : i32 to vector<256x1xi32>
    %25 = arith.addi %14, %24 : vector<256x1xi32>
    %26 = arith.select %23, %25, %14 : vector<256x1xi1>, vector<256x1xi32>
    %c15_i32 = arith.constant 15 : i32
    %27 = vector.broadcast %c15_i32 : i32 to vector<256x1xi32>
    %28 = arith.cmpi eq, %26, %27 : vector<256x1xi32>
    %cst_8 = arith.constant 0.000000e+00 : f32
    %29 = vector.shape_cast %28 : vector<256x1xi1> to vector<256x1xi1>
    %30 = vector.broadcast %29 : vector<256x1xi1> to vector<256x128xi1>
    %31 = vector.broadcast %cst_8 : f32 to vector<256x128xf32>
    %32 = arith.select %30, %31, %9 : vector<256x128xi1>, vector<256x128xf32>
    %c0_i32_9 = arith.constant 0 : i32
    %33 = vector.broadcast %c0_i32_9 : i32 to vector<256x1xi32>
    %34 = arith.cmpi eq, %26, %33 : vector<256x1xi32>
    %cst_10 = arith.constant 0.000000e+00 : f32
    %35 = vector.shape_cast %34 : vector<256x1xi1> to vector<256x1xi1>
    %36 = vector.broadcast %35 : vector<256x1xi1> to vector<256x128xi1>
    %37 = vector.broadcast %cst_10 : f32 to vector<256x128xf32>
    %38 = arith.select %36, %37, %9 : vector<256x128xi1>, vector<256x128xf32>
    %cst_11 = arith.constant 0.000000e+00 : f32
    %39 = vector.broadcast %cst_11 : f32 to vector<17x128xf32>
    %40 = tpu.concatenate %39, %32, %39 in 0 : vector<17x128xf32>, vector<256x128xf32>, vector<17x128xf32> -> vector<290x128xf32>
    %41 = tpu.concatenate %39, %9, %39 in 0 : vector<17x128xf32>, vector<256x128xf32>, vector<17x128xf32> -> vector<290x128xf32>
    %42 = tpu.concatenate %39, %38, %39 in 0 : vector<17x128xf32>, vector<256x128xf32>, vector<17x128xf32> -> vector<290x128xf32>
    %43 = vector.extract_strided_slice %40 {offsets = [0, 0], sizes = [256, 128], strides = [1, 1]} : vector<290x128xf32> to vector<256x128xf32>
    %44 = vector.extract_strided_slice %41 {offsets = [1, 0], sizes = [256, 128], strides = [1, 1]} : vector<290x128xf32> to vector<256x128xf32>
    %45 = vector.extract_strided_slice %42 {offsets = [2, 0], sizes = [256, 128], strides = [1, 1]} : vector<290x128xf32> to vector<256x128xf32>
    %46 = vector.extract_strided_slice %40 {offsets = [16, 0], sizes = [256, 128], strides = [1, 1]} : vector<290x128xf32> to vector<256x128xf32>
    %47 = vector.extract_strided_slice %41 {offsets = [17, 0], sizes = [256, 128], strides = [1, 1]} : vector<290x128xf32> to vector<256x128xf32>
    %48 = vector.extract_strided_slice %42 {offsets = [18, 0], sizes = [256, 128], strides = [1, 1]} : vector<290x128xf32> to vector<256x128xf32>
    %49 = vector.extract_strided_slice %40 {offsets = [32, 0], sizes = [256, 128], strides = [1, 1]} : vector<290x128xf32> to vector<256x128xf32>
    %50 = vector.extract_strided_slice %41 {offsets = [33, 0], sizes = [256, 128], strides = [1, 1]} : vector<290x128xf32> to vector<256x128xf32>
    %51 = vector.extract_strided_slice %42 {offsets = [34, 0], sizes = [256, 128], strides = [1, 1]} : vector<290x128xf32> to vector<256x128xf32>
    %52 = tpu.concatenate %43, %44, %45, %46, %47, %48, %49, %50, %51 in 1 : vector<256x128xf32>, vector<256x128xf32>, vector<256x128xf32>, vector<256x128xf32>, vector<256x128xf32>, vector<256x128xf32>, vector<256x128xf32>, vector<256x128xf32>, vector<256x128xf32> -> vector<256x1152xf32>
    %c0_12 = arith.constant 0 : index
    %c0_13 = arith.constant 0 : index
    %53 = vector.load %arg3[%c0_12, %c0_13] : memref<1152x128xf32, #tpu.memory_space<vmem>>, vector<1152x128xf32>
    %cst_14 = arith.constant dense<0.000000e+00> : vector<256x128xf32>
    %54 = tpu.matmul %52, %53, %cst_14 {dimension_numbers = #tpu.dot_dimension_numbers<[1], [0], [0], [1], [0, 0, 1, 1], [], []>} : vector<256x1152xf32>, vector<1152x128xf32>, vector<256x128xf32> -> vector<256x128xf32>
    %c0_15 = arith.constant 0 : index
    %c0_16 = arith.constant 0 : index
    %c0_17 = arith.constant 0 : index
    %55 = vector.load %arg4[%c0_15, %c0_16, %c0_17] : memref<1x256x128xf32, #tpu.memory_space<vmem>>, vector<1x256x128xf32>
    %56 = vector.shape_cast %55 : vector<1x256x128xf32> to vector<256x128xf32>
    %57 = vector.shape_cast %54 : vector<256x128xf32> to vector<1x256x128xf32>
    tpu.vector_store %arg4[%c0_15, %c0_16, %c0_17], %57 {strides = array<i32>} : memref<1x256x128xf32, #tpu.memory_space<vmem>>, vector<1x256x128xf32>,
    %cst_18 = arith.constant dense<0.000000e+00> : vector<128xf32>
    %58 = vector.multi_reduction <add>, %54, %cst_18 [0] : vector<256x128xf32> to vector<128xf32>
    %59 = vector.shape_cast %58 : vector<128xf32> to vector<1x128xf32>
    %c0_19 = arith.constant 0 : index
    %c0_20 = arith.constant 0 : index
    %c0_21 = arith.constant 0 : index
    %60 = vector.load %arg5[%c0_19, %c0_20, %c0_21] : memref<1x2x128xf32, #tpu.memory_space<vmem>>, vector<1x1x128xf32>
    %61 = vector.shape_cast %60 : vector<1x1x128xf32> to vector<1x128xf32>
    %62 = vector.shape_cast %59 : vector<1x128xf32> to vector<1x1x128xf32>
    tpu.vector_store %arg5[%c0_19, %c0_20, %c0_21], %62 {strides = array<i32>} : memref<1x2x128xf32, #tpu.memory_space<vmem>>, vector<1x1x128xf32>,
    %63 = arith.mulf %54, %54 : vector<256x128xf32>
    %cst_22 = arith.constant dense<0.000000e+00> : vector<128xf32>
    %64 = vector.multi_reduction <add>, %63, %cst_22 [0] : vector<256x128xf32> to vector<128xf32>
    %65 = vector.shape_cast %64 : vector<128xf32> to vector<1x128xf32>
    %c0_23 = arith.constant 0 : index
    %c1_24 = arith.constant 1 : index
    %c0_25 = arith.constant 0 : index
    %66 = vector.load %arg5[%c0_23, %c1_24, %c0_25] : memref<1x2x128xf32, #tpu.memory_space<vmem>>, vector<1x1x128xf32>
    %67 = vector.shape_cast %66 : vector<1x1x128xf32> to vector<1x128xf32>
    %68 = vector.shape_cast %65 : vector<1x128xf32> to vector<1x1x128xf32>
    tpu.vector_store %arg5[%c0_23, %c1_24, %c0_25], %68 {strides = array<i32>} : memref<1x2x128xf32, #tpu.memory_space<vmem>>, vector<1x1x128xf32>,
    return
  }
  func.func @transform_0(%arg0: i32) -> (i32, i32, i32) {
    %c0_i32 = arith.constant 0 : i32
    %c0_i32_0 = arith.constant 0 : i32
    %c0_i32_1 = arith.constant 0 : i32
    return %arg0, %c0_i32, %c0_i32_0 : i32, i32, i32
  }
  func.func @transform_1(%arg0: i32) -> (i32, i32) {
    %c0_i32 = arith.constant 0 : i32
    %c0_i32_0 = arith.constant 0 : i32
    %c0_i32_1 = arith.constant 0 : i32
    return %c0_i32, %c0_i32_0 : i32, i32
  }
  func.func @transform_2(%arg0: i32) -> (i32, i32) {
    %c0_i32 = arith.constant 0 : i32
    %c0_i32_0 = arith.constant 0 : i32
    %c0_i32_1 = arith.constant 0 : i32
    return %c0_i32, %c0_i32_0 : i32, i32
  }
  func.func @transform_3(%arg0: i32) -> (i32, i32, i32) {
    %c0_i32 = arith.constant 0 : i32
    %c0_i32_0 = arith.constant 0 : i32
    %c0_i32_1 = arith.constant 0 : i32
    return %arg0, %c0_i32, %c0_i32_0 : i32, i32, i32
  }
  func.func @transform_4(%arg0: i32) -> (i32, i32, i32) {
    %c0_i32 = arith.constant 0 : i32
    %c0_i32_0 = arith.constant 0 : i32
    %c0_i32_1 = arith.constant 0 : i32
    return %arg0, %c0_i32, %c0_i32_0 : i32, i32, i32
  }
}

module attributes {stable_mosaic.version = 11 : i64} {
  func.func @_bn_add_relu_kernel(%arg0: i32, %arg1: memref<128x128xf32, #tpu.memory_space<vmem>>, %arg2: memref<2x128xf32, #tpu.memory_space<vmem>>, %arg3: memref<128x128xf32, #tpu.memory_space<vmem>>, %arg4: memref<128x128xf32, #tpu.memory_space<vmem>>) attributes {dimension_semantics = [#tpu.dimension_semantics<parallel>], iteration_bounds = array<i64: 4>, scalar_prefetch = 0 : i64, scratch_operands = 0 : i64, tpu.core_type = #tpu.core_type<tc>, window_params = [{transform_indices = @transform_0, window_bounds = array<i64: 128, 128>}, {pipeline_mode = #tpu.pipeline_mode<synchronous>, transform_indices = @transform_1, window_bounds = array<i64: 2, 128>}, {transform_indices = @transform_2, window_bounds = array<i64: 128, 128>}, {transform_indices = @transform_3, window_bounds = array<i64: 128, 128>}]} {
    %c0 = arith.constant 0 : index
    %c0_0 = arith.constant 0 : index
    %0 = vector.load %arg1[%c0, %c0_0] : memref<128x128xf32, #tpu.memory_space<vmem>>, vector<128x128xf32>
    %c0_1 = arith.constant 0 : index
    %c0_2 = arith.constant 0 : index
    %1 = vector.load %arg2[%c0_1, %c0_2] : memref<2x128xf32, #tpu.memory_space<vmem>>, vector<1x128xf32>
    %2 = vector.broadcast %1 : vector<1x128xf32> to vector<128x128xf32>
    %3 = arith.mulf %0, %2 : vector<128x128xf32>
    %c1 = arith.constant 1 : index
    %c0_3 = arith.constant 0 : index
    %4 = vector.load %arg2[%c1, %c0_3] : memref<2x128xf32, #tpu.memory_space<vmem>>, vector<1x128xf32>
    %5 = vector.broadcast %4 : vector<1x128xf32> to vector<128x128xf32>
    %6 = arith.addf %3, %5 : vector<128x128xf32>
    %c0_4 = arith.constant 0 : index
    %c0_5 = arith.constant 0 : index
    %7 = vector.load %arg3[%c0_4, %c0_5] : memref<128x128xf32, #tpu.memory_space<vmem>>, vector<128x128xf32>
    %8 = arith.addf %6, %7 : vector<128x128xf32>
    %cst = arith.constant 0.000000e+00 : f32
    %9 = vector.broadcast %cst : f32 to vector<128x128xf32>
    %10 = arith.maximumf %8, %9 : vector<128x128xf32>
    %c0_6 = arith.constant 0 : index
    %c0_7 = arith.constant 0 : index
    %11 = vector.load %arg4[%c0_6, %c0_7] : memref<128x128xf32, #tpu.memory_space<vmem>>, vector<128x128xf32>
    tpu.vector_store %arg4[%c0_6, %c0_7], %10 {strides = array<i32>} : memref<128x128xf32, #tpu.memory_space<vmem>>, vector<128x128xf32>,
    return
  }
  func.func @transform_0(%arg0: i32) -> (i32, i32) {
    %c0_i32 = arith.constant 0 : i32
    %c0_i32_0 = arith.constant 0 : i32
    return %arg0, %c0_i32 : i32, i32
  }
  func.func @transform_1(%arg0: i32) -> (i32, i32) {
    %c0_i32 = arith.constant 0 : i32
    %c0_i32_0 = arith.constant 0 : i32
    %c0_i32_1 = arith.constant 0 : i32
    return %c0_i32, %c0_i32_0 : i32, i32
  }
  func.func @transform_2(%arg0: i32) -> (i32, i32) {
    %c0_i32 = arith.constant 0 : i32
    %c0_i32_0 = arith.constant 0 : i32
    return %arg0, %c0_i32 : i32, i32
  }
  func.func @transform_3(%arg0: i32) -> (i32, i32) {
    %c0_i32 = arith.constant 0 : i32
    %c0_i32_0 = arith.constant 0 : i32
    return %arg0, %c0_i32 : i32, i32
  }
}

</mosaic_0001>

<llo_original>
// kernel: bottleneck_forward.4
$region0: #{bottleneck_forward.4}
  #allocation0 [shape = 'u32[]', space=smem, size = 0x4, offset = 0x4, fixed_abs, tag = 'smem constant byte address 0x4 - core index']
  #allocation1 [shape = 'u32[144,128]{1,0:T(1,128)}', space=vmem, size = 0x12000, scoped, tag = 'internal scratch']
  %s0 = inlined_call_operand.vmem [shape: f32[512,128], index: 0, kind: input, shape index: {}]
  %s1 = inlined_call_operand.vmem [shape: f32[128,128], index: 1, kind: input, shape index: {}]
  %s2 = inlined_call_operand.vmem [shape: f32[512,128], index: 2, kind: output, shape index: {0}]
  %s3 = inlined_call_operand.vmem [shape: f32[4,2,128], index: 3, kind: output, shape index: {1}]
  %4 = xla_tuple %s2, %s3
  %s5 = sld [smem:[#allocation0]]
  $region49: #{bottleneck_forward.4} parent=0
    _
  %s7 = ssub.s32 1, %s5
  %s8 = scalar_select 0, %s7, %s5
  loop: start=0, step=1, limit=6
  $region2: #{bottleneck_forward.4} parent=0 // loop_pre_header
    _
  $region3: #{bottleneck_forward.4} parent=0 // loop_header
    %s10 = sphi 0, %s14
    %p11 = scmp.ge.s32.totalorder %s10, 6
    %s20 = sphi 0, %s22
    %s23 = sphi 0, %s20
    %s24 = sphi 0, %s23
    %s40 = sphi 0, %s24
    %s44 = sphi 0, %s44
    %s46 = sphi 0, %s44
    %s47 = sphi 0, %s46
    %s61 = sphi 0, %s47
    %s67 = sphi 0, %s69
    %s70 = sphi 0, %s67
    %s71 = sphi 0, %s70
    %s87 = sphi 0, %s71
    %s93 = sphi 0, %s95
    %s96 = sphi 0, %s93
    %s97 = sphi 0, %s96
    %s113 = sphi 0, %s97
  $region4: #{bottleneck_forward.4} parent=0 // loop_header_branch
    %13 = sbr.rel (%p11) target = $region8
  $region5: #{bottleneck_forward.4} parent=0 // loop_body
    %s15 = ssub.s32 %s10, 1
    %s16 = ssub.s32 %s10, 2
    %s17 = sadd.s32 %s10, 1
    %s18 = ssub.s32 %s10, %s17
    %p19 = scmp.eq.s32.totalorder %s18, 0
    %s21 = sadd.s32 %s20, 1
    %s22 = scalar_select %p19, %s20, %s21
    %p25 = pneg %p19
    %p26 = scmp.eq.s32.totalorder %s10, 3
    %p27 = por %p25, %p26
    %p28 = scmp.ne.s32.totalorder %s20, %s23
    %p29 = scmp.eq.s32.totalorder %s10, 0
    %p30 = por %p28, %p29
    %p31 = scmp.ne.s32.totalorder %s20, %s23
    %p32 = scmp.eq.s32.totalorder %s15, 3
    %p33 = por %p31, %p32
    %p34 = scmp.ne.s32.totalorder %s23, %s24
    %p35 = scmp.eq.s32.totalorder %s15, 0
    %p36 = por %p34, %p35
    %p37 = scmp.ne.s32.totalorder %s23, %s24
    %p38 = scmp.eq.s32.totalorder %s16, 3
    %p39 = por %p37, %p38
    %p41 = scmp.ne.s32.totalorder %s24, %s40
    %p42 = scmp.eq.s32.totalorder %s16, 0
    %p43 = por %p41, %p42
    %s45 = sadd.s32 %s44, 1
    %p48 = scmp.eq.s32.totalorder %s10, 3
    %p49 = scmp.ne.s32.totalorder %s44, %s46
    %p50 = scmp.eq.s32.totalorder %s10, 0
    %p51 = por %p49, %p50
    %p52 = scmp.ne.s32.totalorder %s44, %s46
    %p53 = scmp.eq.s32.totalorder %s15, 3
    %p54 = por %p52, %p53
    %p55 = scmp.ne.s32.totalorder %s46, %s47
    %p56 = scmp.eq.s32.totalorder %s15, 0
    %p57 = por %p55, %p56
    %p58 = scmp.ne.s32.totalorder %s46, %s47
    %p59 = scmp.eq.s32.totalorder %s16, 3
    %p60 = por %p58, %p59
    %p62 = scmp.ne.s32.totalorder %s47, %s61
    %p63 = scmp.eq.s32.totalorder %s16, 0
    %p64 = por %p62, %p63
    %s65 = ssub.s32 %s10, %s17
    %p66 = scmp.eq.s32.totalorder %s65, 0
    %s68 = sadd.s32 %s67, 1
    %s69 = scalar_select %p66, %s67, %s68
    %p72 = pneg %p66
    %p73 = scmp.eq.s32.totalorder %s10, 3
    %p74 = por %p72, %p73
    %p75 = scmp.ne.s32.totalorder %s67, %s70
    %p76 = scmp.eq.s32.totalorder %s10, 0
    %p77 = por %p75, %p76
    %p78 = scmp.ne.s32.totalorder %s67, %s70
    %p79 = scmp.eq.s32.totalorder %s15, 3
    %p80 = por %p78, %p79
    %p81 = scmp.ne.s32.totalorder %s70, %s71
    %p82 = scmp.eq.s32.totalorder %s15, 0
    %p83 = por %p81, %p82
    %p84 = scmp.ne.s32.totalorder %s70, %s71
    %p85 = scmp.eq.s32.totalorder %s16, 3
    %p86 = por %p84, %p85
    %p88 = scmp.ne.s32.totalorder %s71, %s87
    %p89 = scmp.eq.s32.totalorder %s16, 0
    %p90 = por %p88, %p89
    %s91 = ssub.s32 %s10, %s17
    %p92 = scmp.eq.s32.totalorder %s91, 0
    %s94 = sadd.s32 %s93, 1
    %s95 = scalar_select %p92, %s93, %s94
    %p98 = pneg %p92
    %p99 = scmp.eq.s32.totalorder %s10, 3
    %p100 = por %p98, %p99
    %p101 = scmp.ne.s32.totalorder %s93, %s96
    %p102 = scmp.eq.s32.totalorder %s10, 0
    %p103 = por %p101, %p102
    %p104 = scmp.ne.s32.totalorder %s93, %s96
    %p105 = scmp.eq.s32.totalorder %s15, 3
    %p106 = por %p104, %p105
    %p107 = scmp.ne.s32.totalorder %s96, %s97
    %p108 = scmp.eq.s32.totalorder %s15, 0
    %p109 = por %p107, %p108
    %p110 = scmp.ne.s32.totalorder %s96, %s97
    %p111 = scmp.eq.s32.totalorder %s16, 3
    %p112 = por %p110, %p111
    %p114 = scmp.ne.s32.totalorder %s97, %s113
    %p115 = scmp.eq.s32.totalorder %s16, 0
    %p116 = por %p114, %p115
    %p117 = scmp.le.s32.totalorder 1, %s10
    %p118 = scmp.lt.s32.totalorder %s10, 5
    %p119 = pnand %p117, %p118
    %p120 = pneg %p119
    // Predicated region
    $region9: #{bottleneck_forward.4} parent=5 // pred_check
      _
    $region10: #{bottleneck_forward.4} parent=5 // pred_check_branch
      %122 = sbr.rel (%p119) target = $region12
    $region11: #{bottleneck_forward.4} parent=5 // pred_region
      %s123 = ssub.s32 %s10, 1
      // Predicated region
      $region13: #{bottleneck_forward.4} parent=11 // pred_check
        %p124 = pneg %p57
      $region14: #{bottleneck_forward.4} parent=11 // pred_check_branch
        %126 = sbr.rel (%p124) target = $region16
      $region15: #{bottleneck_forward.4} parent=11 // pred_region
        _
      $region16: #{bottleneck_forward.4} parent=11 // pred_fallthru
        _
    $region12: #{bottleneck_forward.4} parent=5 // pred_fallthru
      _
    %p127 = scmp.lt.s32.totalorder %s10, 4
    // Predicated region
    $region17: #{bottleneck_forward.4} parent=5 // pred_check
      %p128 = pneg %p127
    $region18: #{bottleneck_forward.4} parent=5 // pred_check_branch
      %130 = sbr.rel (%p128) target = $region20
    $region19: #{bottleneck_forward.4} parent=5 // pred_region
      // Predicated region
      $region21: #{bottleneck_forward.4} parent=19 // pred_check
        %p131 = pneg %p30
      $region22: #{bottleneck_forward.4} parent=19 // pred_check_branch
        %133 = sbr.rel (%p131) target = $region24
      $region23: #{bottleneck_forward.4} parent=19 // pred_region
        %s134 = smul.u32 16, %s10
        %p135 = scmp.lt.s32.totalorder %s134, 63
        %s136 = scalar_select %p135, %s134, 63
        %s137 = smul.addr %s136, 8
        %s138 = scalar_lea.vmem %s0, %s137
        %s139 = smul.u32 16, %s10
      $region24: #{bottleneck_forward.4} parent=19 // pred_fallthru
        _
    $region20: #{bottleneck_forward.4} parent=5 // pred_fallthru
      _
    %p140 = scmp.le.s32.totalorder 1, %s10
    %p141 = scmp.lt.s32.totalorder %s10, 5
    %p142 = pnand %p140, %p141
    %p143 = pneg %p142
    // Predicated region
    $region25: #{bottleneck_forward.4} parent=5 // pred_check
      _
    $region26: #{bottleneck_forward.4} parent=5 // pred_check_branch
      %145 = sbr.rel (%p142) target = $region28
    $region27: #{bottleneck_forward.4} parent=5 // pred_region
      %s146 = ssub.s32 %s10, 1
      %s147 = smul.u32 16, %s15
      %p148 = scmp.lt.s32.totalorder %s147, 63
      %s149 = scalar_select %p148, %s147, 63
      %s150 = smul.addr %s149, 8
      %s151 = scalar_lea.vmem %s0, %s150
      %p152 = pneg %p36
      %p153 = pneg %p33
      %p154 = pneg %p57
      %p155 = pneg %p54
      %p156 = pneg %p83
      %p157 = pneg %p80
      %s158 = smul.u32 16, %s15
      %p159 = scmp.lt.s32.totalorder %s158, 63
      %s160 = scalar_select %p159, %s158, 63
      %s161 = smul.addr %s160, 8
      %s162 = scalar_lea.vmem %s2, %s161
      %p163 = pneg %p109
      %p164 = pneg %p106
      %p165 = scmp.lt.s32.totalorder %s15, 3
      %s166 = scalar_select %p165, %s15, 3
      %s167 = smul.addr %s166, 2
      %s168 = scalar_lea.vmem %s3, %s167
      %s169 = smul.u32 16, %s15
      %p170 = scmp.lt.s32.totalorder %s169, 63
      %s171 = scalar_select %p170, %s169, 63
      %s172 = smul.addr %s171, 8
      %s173 = scalar_lea.vmem %s0, %s172
      %s174 = smul.u32 16, %s15
      %s175 = smul.u32 16, %s15
      %p176 = scmp.lt.s32.totalorder %s175, 63
      %s177 = scalar_select %p176, %s175, 63
      %s178 = smul.addr %s177, 8
      %s179 = scalar_lea.vmem %s2, %s178
      %s180 = smul.u32 16, %s15
      %p181 = scmp.lt.s32.totalorder %s15, 3
      %s182 = scalar_select %p181, %s15, 3
      %s183 = smul.addr %s182, 2
      %s184 = scalar_lea.vmem %s3, %s183
      %v185 = vld [vmem:[%s173] sm:$0xff]
      %v186 = vld [vmem:[%s173 + $0x8] sm:$0xff]
      %v187 = vld [vmem:[%s173 + $0x10] sm:$0xff]
      %v188 = vld [vmem:[%s173 + $0x18] sm:$0xff]
      %v189 = vld [vmem:[%s173 + $0x20] sm:$0xff]
      %v190 = vld [vmem:[%s173 + $0x28] sm:$0xff]
      %v191 = vld [vmem:[%s173 + $0x30] sm:$0xff]
      %v192 = vld [vmem:[%s173 + $0x38] sm:$0xff]
      %v193 = vld [vmem:[%s173 + $0x40] sm:$0xff]
      %v194 = vld [vmem:[%s173 + $0x48] sm:$0xff]
      %v195 = vld [vmem:[%s173 + $0x50] sm:$0xff]
      %v196 = vld [vmem:[%s173 + $0x58] sm:$0xff]
      %v197 = vld [vmem:[%s173 + $0x60] sm:$0xff]
      %v198 = vld [vmem:[%s173 + $0x68] sm:$0xff]
      %v199 = vld [vmem:[%s173 + $0x70] sm:$0xff]
      %v200 = vld [vmem:[%s173 + $0x78] sm:$0xff]
      %v201 = vld [vmem:[%s1] sm:$0xff]
      %v202 = vld [vmem:[%s1 + $0x8] sm:$0xff]
      %v203 = vld [vmem:[%s1 + $0x10] sm:$0xff]
      %v204 = vld [vmem:[%s1 + $0x18] sm:$0xff]
      %v205 = vld [vmem:[%s1 + $0x20] sm:$0xff]
      %v206 = vld [vmem:[%s1 + $0x28] sm:$0xff]
      %v207 = vld [vmem:[%s1 + $0x30] sm:$0xff]
      %v208 = vld [vmem:[%s1 + $0x38] sm:$0xff]
      %v209 = vld [vmem:[%s1 + $0x40] sm:$0xff]
      %v210 = vld [vmem:[%s1 + $0x48] sm:$0xff]
      %v211 = vld [vmem:[%s1 + $0x50] sm:$0xff]
      %v212 = vld [vmem:[%s1 + $0x58] sm:$0xff]
      %v213 = vld [vmem:[%s1 + $0x60] sm:$0xff]
      %v214 = vld [vmem:[%s1 + $0x68] sm:$0xff]
      %v215 = vld [vmem:[%s1 + $0x70] sm:$0xff]
      %v216 = vld [vmem:[%s1 + $0x78] sm:$0xff]
      %217 = vmatprep.subr.mxu0 0.0
      %218 = vmatpush1.msra.mxu0 %v201
      %219 = vmatprep.subr.mxu0 0.0
      %220 = vmatpush1.msra.mxu0 %v202
      %221 = vmatprep.subr.mxu0 0.0
      %222 = vmatpush1.msra.mxu0 %v203
      %223 = vmatprep.subr.mxu0 0.0
      %224 = vmatpush1.msra.mxu0 %v204
      %225 = vmatprep.subr.mxu0 0.0
      %226 = vmatpush1.msra.mxu0 %v205
      %227 = vmatprep.subr.mxu0 0.0
      %228 = vmatpush1.msra.mxu0 %v206
      %229 = vmatprep.subr.mxu0 0.0
      %230 = vmatpush1.msra.mxu0 %v207
      %231 = vmatprep.subr.mxu0 0.0
      %232 = vmatpush1.msra.mxu0 %v208
      %233 = vmatprep.subr.mxu0 0.0
      %234 = vmatpush1.msra.mxu0 %v209
      %235 = vmatprep.subr.mxu0 0.0
      %236 = vmatpush1.msra.mxu0 %v210
      %237 = vmatprep.subr.mxu0 0.0
      %238 = vmatpush1.msra.mxu0 %v211
      %239 = vmatprep.subr.mxu0 0.0
      %240 = vmatpush1.msra.mxu0 %v212
      %241 = vmatprep.subr.mxu0 0.0
      %242 = vmatpush1.msra.mxu0 %v213
      %243 = vmatprep.subr.mxu0 0.0
      %244 = vmatpush1.msra.mxu0 %v214
      %245 = vmatprep.subr.mxu0 0.0
      %246 = vmatpush1.msra.mxu0 %v215
      %247 = vmatprep.subr.mxu0 0.0
      %248 = vmatpush1.msra.mxu0 %v216
      %249 = vmatprep.subr.mxu0 0.0
      %250 = vmatpush1.msra.mxu0 0.0
      %251 = vmatprep.subr.mxu0 0.0
      %252 = vmatpush1.msra.mxu0 0.0
      %253 = vmatprep.subr.mxu0 0.0
      %254 = vmatpush1.msra.mxu0 0.0
      %255 = vmatprep.subr.mxu0 0.0
      %256 = vmatpush1.msra.mxu0 0.0
      %257 = vmatprep.subr.mxu0 0.0
      %258 = vmatpush1.msra.mxu0 0.0
      %259 = vmatprep.subr.mxu0 0.0
      %260 = vmatpush1.msra.mxu0 0.0
      %261 = vmatprep.subr.mxu0 0.0
      %262 = vmatpush1.msra.mxu0 0.0
      %263 = vmatprep.subr.mxu0 0.0
      %264 = vmatpush1.msra.mxu0 0.0
      %265 = vmatprep.subr.mxu0 0.0
      %266 = vmatpush1.msra.mxu0 0.0
      %267 = vmatprep.subr.mxu0 0.0
      %268 = vmatpush1.msra.mxu0 0.0
      %269 = vmatprep.subr.mxu0 0.0
      %270 = vmatpush1.msra.mxu0 0.0
      %271 = vmatprep.subr.mxu0 0.0
      %272 = vmatpush1.msra.mxu0 0.0
      %273 = vmatprep.subr.mxu0 0.0
      %274 = vmatpush1.msra.mxu0 0.0
      %275 = vmatprep.subr.mxu0 0.0
      %276 = vmatpush1.msra.mxu0 0.0
      %277 = vmatprep.subr.mxu0 0.0
      %278 = vmatpush1.msra.mxu0 0.0
      %279 = vmatprep.subr.mxu0 0.0
      %280 = vmatpush1.msra.mxu0 0.0
      %281 = vmatprep.mubr.f32.mxu0 0.0
      %282 = vmatmul.mubr.f32.gmra.mrb[0].mxu0 %v185
      %v283 = vpop.f32.mrb[0].mxu0
      %v284 = vadd.f32 0.0, %v283
      %v285 = vpop.f32.mrb[0].mxu0
      %286 = vmatprep.mubr.f32.mxu0 0.0
      %287 = vmatmul.mubr.f32.gmra.mrb[0].mxu0 %v186
      %v288 = vpop.f32.mrb[0].mxu0
      %v289 = vadd.f32 0.0, %v288
      %v290 = vpop.f32.mrb[0].mxu0
      %291 = vmatprep.mubr.f32.mxu0 0.0
      %292 = vmatmul.mubr.f32.gmra.mrb[0].mxu0 %v187
      %v293 = vpop.f32.mrb[0].mxu0
      %v294 = vadd.f32 0.0, %v293
      %v295 = vpop.f32.mrb[0].mxu0
      %296 = vmatprep.mubr.f32.mxu0 0.0
      %297 = vmatmul.mubr.f32.gmra.mrb[0].mxu0 %v188
      %v298 = vpop.f32.mrb[0].mxu0
      %v299 = vadd.f32 0.0, %v298
      %v300 = vpop.f32.mrb[0].mxu0
      %301 = vmatprep.mubr.f32.mxu0 0.0
      %302 = vmatmul.mubr.f32.gmra.mrb[0].mxu0 %v189
      %v303 = vpop.f32.mrb[0].mxu0
      %v304 = vadd.f32 0.0, %v303
      %v305 = vpop.f32.mrb[0].mxu0
      %306 = vmatprep.mubr.f32.mxu0 0.0
      %307 = vmatmul.mubr.f32.gmra.mrb[0].mxu0 %v190
      %v308 = vpop.f32.mrb[0].mxu0
      %v309 = vadd.f32 0.0, %v308
      %v310 = vpop.f32.mrb[0].mxu0
      %311 = vmatprep.mubr.f32.mxu0 0.0
      %312 = vmatmul.mubr.f32.gmra.mrb[0].mxu0 %v191
      %v313 = vpop.f32.mrb[0].mxu0
      %v314 = vadd.f32 0.0, %v313
      %v315 = vpop.f32.mrb[0].mxu0
      %316 = vmatprep.mubr.f32.mxu0 0.0
      %317 = vmatmul.mubr.f32.gmra.mrb[0].mxu0 %v192
      %v318 = vpop.f32.mrb[0].mxu0
      %v319 = vadd.f32 0.0, %v318
      %v320 = vpop.f32.mrb[0].mxu0
      %321 = vmatprep.mubr.f32.mxu0 0.0
      %322 = vmatmul.mubr.f32.gmra.mrb[0].mxu0 %v193
      %v323 = vpop.f32.mrb[0].mxu0
      %v324 = vadd.f32 0.0, %v323
      %v325 = vpop.f32.mrb[0].mxu0
      %326 = vmatprep.mubr.f32.mxu0 0.0
      %327 = vmatmul.mubr.f32.gmra.mrb[0].mxu0 %v194
      %v328 = vpop.f32.mrb[0].mxu0
      %v329 = vadd.f32 0.0, %v328
      %v330 = vpop.f32.mrb[0].mxu0
      %331 = vmatprep.mubr.f32.mxu0 0.0
      %332 = vmatmul.mubr.f32.gmra.mrb[0].mxu0 %v195
      %v333 = vpop.f32.mrb[0].mxu0
      %v334 = vadd.f32 0.0, %v333
      %v335 = vpop.f32.mrb[0].mxu0
      %336 = vmatprep.mubr.f32.mxu0 0.0
      %337 = vmatmul.mubr.f32.gmra.mrb[0].mxu0 %v196
      %v338 = vpop.f32.mrb[0].mxu0
      %v339 = vadd.f32 0.0, %v338
      %v340 = vpop.f32.mrb[0].mxu0
      %341 = vmatprep.mubr.f32.mxu0 0.0
      %342 = vmatmul.mubr.f32.gmra.mrb[0].mxu0 %v197
      %v343 = vpop.f32.mrb[0].mxu0
      %v344 = vadd.f32 0.0, %v343
      %v345 = vpop.f32.mrb[0].mxu0
      %346 = vmatprep.mubr.f32.mxu0 0.0
      %347 = vmatmul.mubr.f32.gmra.mrb[0].mxu0 %v198
      %v348 = vpop.f32.mrb[0].mxu0
      %v349 = vadd.f32 0.0, %v348
      %v350 = vpop.f32.mrb[0].mxu0
      %351 = vmatprep.mubr.f32.mxu0 0.0
      %352 = vmatmul.mubr.f32.gmra.mrb[0].mxu0 %v199
      %v353 = vpop.f32.mrb[0].mxu0
      %v354 = vadd.f32 0.0, %v353
      %v355 = vpop.f32.mrb[0].mxu0
      %356 = vmatprep.mubr.f32.mxu0 0.0
      %357 = vmatmul.mubr.f32.gmra.mrb[0].mxu0 %v200
      %v358 = vpop.f32.mrb[0].mxu0
      %v359 = vadd.f32 0.0, %v358
      %v360 = vpop.f32.mrb[0].mxu0
      %361 = vdwg.mxu0
      %362 = vst [vmem:[%s179] sm:$0xff] %v284
      %363 = vst [vmem:[%s179 + $0x8] sm:$0xff] %v289
      %364 = vst [vmem:[%s179 + $0x10] sm:$0xff] %v294
      %365 = vst [vmem:[%s179 + $0x18] sm:$0xff] %v299
      %366 = vst [vmem:[%s179 + $0x20] sm:$0xff] %v304
      %367 = vst [vmem:[%s179 + $0x28] sm:$0xff] %v309
      %368 = vst [vmem:[%s179 + $0x30] sm:$0xff] %v314
      %369 = vst [vmem:[%s179 + $0x38] sm:$0xff] %v319
      %370 = vst [vmem:[%s179 + $0x40] sm:$0xff] %v324
      %371 = vst [vmem:[%s179 + $0x48] sm:$0xff] %v329
      %372 = vst [vmem:[%s179 + $0x50] sm:$0xff] %v334
      %373 = vst [vmem:[%s179 + $0x58] sm:$0xff] %v339
      %374 = vst [vmem:[%s179 + $0x60] sm:$0xff] %v344
      %375 = vst [vmem:[%s179 + $0x68] sm:$0xff] %v349
      %376 = vst [vmem:[%s179 + $0x70] sm:$0xff] %v354
      %377 = vst [vmem:[%s179 + $0x78] sm:$0xff] %v359
      %v378 = vadd.f32 %v284, %v289
      %v379 = vadd.f32 %v378, %v294
      %v380 = vadd.f32 %v379, %v299
      %v381 = vadd.f32 %v380, %v304
      %v382 = vadd.f32 %v381, %v309
      %v383 = vadd.f32 %v382, %v314
      %v384 = vadd.f32 %v383, %v319
      %v385 = vadd.f32 %v384, %v324
      %v386 = vadd.f32 %v385, %v329
      %v387 = vadd.f32 %v386, %v334
      %v388 = vadd.f32 %v387, %v339
      %v389 = vadd.f32 %v388, %v344
      %v390 = vadd.f32 %v389, %v349
      %v391 = vadd.f32 %v390, %v354
      %v392 = vadd.f32 %v391, %v359
      %v393 = vrot.slane %v392, 4
      %v394 = vadd.f32 %v392, %v393
      %v395 = vrot.slane %v394, 2
      %v396 = vadd.f32 %v394, %v395
      %v397 = vrot.slane %v396, 1
      %v398 = vadd.f32 %v396, %v397
      %399 = vst [vmem:[%s184] sm:$0x1] %v398
      %v400 = vmul.f32 %v284, %v284
      %v401 = vmul.f32 %v289, %v289
      %v402 = vmul.f32 %v294, %v294
      %v403 = vmul.f32 %v299, %v299
      %v404 = vmul.f32 %v304, %v304
      %v405 = vmul.f32 %v309, %v309
      %v406 = vmul.f32 %v314, %v314
      %v407 = vmul.f32 %v319, %v319
      %v408 = vmul.f32 %v324, %v324
      %v409 = vmul.f32 %v329, %v329
      %v410 = vmul.f32 %v334, %v334
      %v411 = vmul.f32 %v339, %v339
      %v412 = vmul.f32 %v344, %v344
      %v413 = vmul.f32 %v349, %v349
      %v414 = vmul.f32 %v354, %v354
      %v415 = vmul.f32 %v359, %v359
      %v416 = vadd.f32 %v400, %v401
      %v417 = vadd.f32 %v416, %v402
      %v418 = vadd.f32 %v417, %v403
      %v419 = vadd.f32 %v418, %v404
      %v420 = vadd.f32 %v419, %v405
      %v421 = vadd.f32 %v420, %v406
      %v422 = vadd.f32 %v421, %v407
      %v423 = vadd.f32 %v422, %v408
      %v424 = vadd.f32 %v423, %v409
      %v425 = vadd.f32 %v424, %v410
      %v426 = vadd.f32 %v425, %v411
      %v427 = vadd.f32 %v426, %v412
      %v428 = vadd.f32 %v427, %v413
      %v429 = vadd.f32 %v428, %v414
      %v430 = vadd.f32 %v429, %v415
      %v431 = vrot.slane %v430, 4
      %v432 = vadd.f32 %v430, %v431
      %v433 = vrot.slane %v432, 2
      %v434 = vadd.f32 %v432, %v433
      %v435 = vrot.slane %v434, 1
      %v436 = vadd.f32 %v434, %v435
      %437 = vst [vmem:[%s184 + $0x1] sm:$0x1] %v436
      %s438 = smul.u32 16, %s15
      %p439 = scmp.lt.s32.totalorder %s438, 63
      %s440 = scalar_select %p439, %s438, 63
      %s441 = smul.addr %s440, 8
      %s442 = scalar_lea.vmem %s2, %s441
      %p443 = scmp.lt.s32.totalorder %s15, 3
      %s444 = scalar_select %p443, %s15, 3
      %s445 = smul.addr %s444, 2
      %s446 = scalar_lea.vmem %s3, %s445
      // Predicated region
      $region29: #{bottleneck_forward.4} parent=27 // pred_check
        %p447 = pneg %p80
      $region30: #{bottleneck_forward.4} parent=27 // pred_check_branch
        %449 = sbr.rel (%p447) target = $region32
      $region31: #{bottleneck_forward.4} parent=27 // pred_region
        %s450 = smul.u32 16, %s15
      $region32: #{bottleneck_forward.4} parent=27 // pred_fallthru
        _
      // Predicated region
      $region33: #{bottleneck_forward.4} parent=27 // pred_check
        %p451 = pneg %p106
      $region34: #{bottleneck_forward.4} parent=27 // pred_check_branch
        %453 = sbr.rel (%p451) target = $region36
      $region35: #{bottleneck_forward.4} parent=27 // pred_region
        _
      $region36: #{bottleneck_forward.4} parent=27 // pred_fallthru
        _
    $region28: #{bottleneck_forward.4} parent=5 // pred_fallthru
      _
    %p454 = scmp.le.s32.totalorder 2, %s10
    // Predicated region
    $region37: #{bottleneck_forward.4} parent=5 // pred_check
      %p455 = pneg %p454
    $region38: #{bottleneck_forward.4} parent=5 // pred_check_branch
      %457 = sbr.rel (%p455) target = $region40
    $region39: #{bottleneck_forward.4} parent=5 // pred_region
      %s458 = ssub.s32 %s10, 2
      // Predicated region
      $region41: #{bottleneck_forward.4} parent=39 // pred_check
        %p459 = pneg %p86
      $region42: #{bottleneck_forward.4} parent=39 // pred_check_branch
        %461 = sbr.rel (%p459) target = $region44
      $region43: #{bottleneck_forward.4} parent=39 // pred_region
        %s462 = smul.u32 16, %s16
        %p463 = scmp.lt.s32.totalorder %s462, 63
        %s464 = scalar_select %p463, %s462, 63
        %s465 = smul.addr %s464, 8
        %s466 = scalar_lea.vmem %s2, %s465
      $region44: #{bottleneck_forward.4} parent=39 // pred_fallthru
        _
      // Predicated region
      $region45: #{bottleneck_forward.4} parent=39 // pred_check
        %p467 = pneg %p112
      $region46: #{bottleneck_forward.4} parent=39 // pred_check_branch
        %469 = sbr.rel (%p467) target = $region48
      $region47: #{bottleneck_forward.4} parent=39 // pred_region
        %p470 = scmp.lt.s32.totalorder %s16, 3
        %s471 = scalar_select %p470, %s16, 3
        %s472 = smul.addr %s471, 2
        %s473 = scalar_lea.vmem %s3, %s472
      $region48: #{bottleneck_forward.4} parent=39 // pred_fallthru
        _
    $region40: #{bottleneck_forward.4} parent=5 // pred_fallthru
      _
  $region6: #{bottleneck_forward.4} parent=0 // loop_footer
    %s14 = sadd.s32 1, %s10
  $region7: #{bottleneck_forward.4} parent=0 // loop_footer_branch
    %9 = sbr.rel target = $region3
  $region8: #{bottleneck_forward.4} parent=0 // loop_exit
    _

// kernel: bottleneck_forward.6
$region0: #{bottleneck_forward.6}
  #allocation0 [shape = 'u32[]', space=smem, size = 0x4, offset = 0x4, fixed_abs, tag = 'smem constant byte address 0x4 - core index']
  #allocation1 [shape = 'u32[144,128]{1,0:T(1,128)}', space=vmem, size = 0x12000, scoped, tag = 'internal scratch']
  %s0 = inlined_call_operand.vmem [shape: f32[512,128], index: 0, kind: input, shape index: {}]
  %s1 = inlined_call_operand.vmem [shape: f32[2,128], index: 1, kind: input, shape index: {}]
  %s2 = inlined_call_operand.vmem [shape: f32[128,128], index: 2, kind: input, shape index: {}]
  %s3 = inlined_call_operand.vmem [shape: f32[512,128], index: 3, kind: output, shape index: {0}]
  %s4 = inlined_call_operand.vmem [shape: f32[4,2,128], index: 4, kind: output, shape index: {1}]
  %5 = xla_tuple %s3, %s4
  %s6 = sld [smem:[#allocation0]]
  $region53: #{bottleneck_forward.6} parent=0
    _
  %s8 = ssub.s32 1, %s6
  %s9 = scalar_select 0, %s8, %s6
  loop: start=0, step=1, limit=6
  $region2: #{bottleneck_forward.6} parent=0 // loop_pre_header
    _
  $region3: #{bottleneck_forward.6} parent=0 // loop_header
    %s11 = sphi 0, %s15
    %p12 = scmp.ge.s32.totalorder %s11, 6
    %s21 = sphi 0, %s23
    %s24 = sphi 0, %s21
    %s25 = sphi 0, %s24
    %s41 = sphi 0, %s25
    %s45 = sphi 0, %s45
    %s47 = sphi 0, %s45
    %s48 = sphi 0, %s47
    %s62 = sphi 0, %s48
    %s66 = sphi 0, %s66
    %s68 = sphi 0, %s66
    %s69 = sphi 0, %s68
    %s83 = sphi 0, %s69
    %s89 = sphi 0, %s91
    %s92 = sphi 0, %s89
    %s93 = sphi 0, %s92
    %s109 = sphi 0, %s93
    %s115 = sphi 0, %s117
    %s118 = sphi 0, %s115
    %s119 = sphi 0, %s118
    %s135 = sphi 0, %s119
  $region4: #{bottleneck_forward.6} parent=0 // loop_header_branch
    %14 = sbr.rel (%p12) target = $region8
  $region5: #{bottleneck_forward.6} parent=0 // loop_body
    %s16 = ssub.s32 %s11, 1
    %s17 = ssub.s32 %s11, 2
    %s18 = sadd.s32 %s11, 1
    %s19 = ssub.s32 %s11, %s18
    %p20 = scmp.eq.s32.totalorder %s19, 0
    %s22 = sadd.s32 %s21, 1
    %s23 = scalar_select %p20, %s21, %s22
    %p26 = pneg %p20
    %p27 = scmp.eq.s32.totalorder %s11, 3
    %p28 = por %p26, %p27
    %p29 = scmp.ne.s32.totalorder %s21, %s24
    %p30 = scmp.eq.s32.totalorder %s11, 0
    %p31 = por %p29, %p30
    %p32 = scmp.ne.s32.totalorder %s21, %s24
    %p33 = scmp.eq.s32.totalorder %s16, 3
    %p34 = por %p32, %p33
    %p35 = scmp.ne.s32.totalorder %s24, %s25
    %p36 = scmp.eq.s32.totalorder %s16, 0
    %p37 = por %p35, %p36
    %p38 = scmp.ne.s32.totalorder %s24, %s25
    %p39 = scmp.eq.s32.totalorder %s17, 3
    %p40 = por %p38, %p39
    %p42 = scmp.ne.s32.totalorder %s25, %s41
    %p43 = scmp.eq.s32.totalorder %s17, 0
    %p44 = por %p42, %p43
    %s46 = sadd.s32 %s45, 1
    %p49 = scmp.eq.s32.totalorder %s11, 3
    %p50 = scmp.ne.s32.totalorder %s45, %s47
    %p51 = scmp.eq.s32.totalorder %s11, 0
    %p52 = por %p50, %p51
    %p53 = scmp.ne.s32.totalorder %s45, %s47
    %p54 = scmp.eq.s32.totalorder %s16, 3
    %p55 = por %p53, %p54
    %p56 = scmp.ne.s32.totalorder %s47, %s48
    %p57 = scmp.eq.s32.totalorder %s16, 0
    %p58 = por %p56, %p57
    %p59 = scmp.ne.s32.totalorder %s47, %s48
    %p60 = scmp.eq.s32.totalorder %s17, 3
    %p61 = por %p59, %p60
    %p63 = scmp.ne.s32.totalorder %s48, %s62
    %p64 = scmp.eq.s32.totalorder %s17, 0
    %p65 = por %p63, %p64
    %s67 = sadd.s32 %s66, 1
    %p70 = scmp.eq.s32.totalorder %s11, 3
    %p71 = scmp.ne.s32.totalorder %s66, %s68
    %p72 = scmp.eq.s32.totalorder %s11, 0
    %p73 = por %p71, %p72
    %p74 = scmp.ne.s32.totalorder %s66, %s68
    %p75 = scmp.eq.s32.totalorder %s16, 3
    %p76 = por %p74, %p75
    %p77 = scmp.ne.s32.totalorder %s68, %s69
    %p78 = scmp.eq.s32.totalorder %s16, 0
    %p79 = por %p77, %p78
    %p80 = scmp.ne.s32.totalorder %s68, %s69
    %p81 = scmp.eq.s32.totalorder %s17, 3
    %p82 = por %p80, %p81
    %p84 = scmp.ne.s32.totalorder %s69, %s83
    %p85 = scmp.eq.s32.totalorder %s17, 0
    %p86 = por %p84, %p85
    %s87 = ssub.s32 %s11, %s18
    %p88 = scmp.eq.s32.totalorder %s87, 0
    %s90 = sadd.s32 %s89, 1
    %s91 = scalar_select %p88, %s89, %s90
    %p94 = pneg %p88
    %p95 = scmp.eq.s32.totalorder %s11, 3
    %p96 = por %p94, %p95
    %p97 = scmp.ne.s32.totalorder %s89, %s92
    %p98 = scmp.eq.s32.totalorder %s11, 0
    %p99 = por %p97, %p98
    %p100 = scmp.ne.s32.totalorder %s89, %s92
    %p101 = scmp.eq.s32.totalorder %s16, 3
    %p102 = por %p100, %p101
    %p103 = scmp.ne.s32.totalorder %s92, %s93
    %p104 = scmp.eq.s32.totalorder %s16, 0
    %p105 = por %p103, %p104
    %p106 = scmp.ne.s32.totalorder %s92, %s93
    %p107 = scmp.eq.s32.totalorder %s17, 3
    %p108 = por %p106, %p107
    %p110 = scmp.ne.s32.totalorder %s93, %s109
    %p111 = scmp.eq.s32.totalorder %s17, 0
    %p112 = por %p110, %p111
    %s113 = ssub.s32 %s11, %s18
    %p114 = scmp.eq.s32.totalorder %s113, 0
    %s116 = sadd.s32 %s115, 1
    %s117 = scalar_select %p114, %s115, %s116
    %p120 = pneg %p114
    %p121 = scmp.eq.s32.totalorder %s11, 3
    %p122 = por %p120, %p121
    %p123 = scmp.ne.s32.totalorder %s115, %s118
    %p124 = scmp.eq.s32.totalorder %s11, 0
    %p125 = por %p123, %p124
    %p126 = scmp.ne.s32.totalorder %s115, %s118
    %p127 = scmp.eq.s32.totalorder %s16, 3
    %p128 = por %p126, %p127
    %p129 = scmp.ne.s32.totalorder %s118, %s119
    %p130 = scmp.eq.s32.totalorder %s16, 0
    %p131 = por %p129, %p130
    %p132 = scmp.ne.s32.totalorder %s118, %s119
    %p133 = scmp.eq.s32.totalorder %s17, 3
    %p134 = por %p132, %p133
    %p136 = scmp.ne.s32.totalorder %s119, %s135
    %p137 = scmp.eq.s32.totalorder %s17, 0
    %p138 = por %p136, %p137
    %p139 = scmp.le.s32.totalorder 1, %s11
    %p140 = scmp.lt.s32.totalorder %s11, 5
    %p141 = pnand %p139, %p140
    %p142 = pneg %p141
    // Predicated region
    $region9: #{bottleneck_forward.6} parent=5 // pred_check
      _
    $region10: #{bottleneck_forward.6} parent=5 // pred_check_branch
      %144 = sbr.rel (%p141) target = $region12
    $region11: #{bottleneck_forward.6} parent=5 // pred_region
      %s145 = ssub.s32 %s11, 1
      // Predicated region
      $region13: #{bottleneck_forward.6} parent=11 // pred_check
        %p146 = pneg %p58
      $region14: #{bottleneck_forward.6} parent=11 // pred_check_branch
        %148 = sbr.rel (%p146) target = $region16
      $region15: #{bottleneck_forward.6} parent=11 // pred_region
        _
      $region16: #{bottleneck_forward.6} parent=11 // pred_fallthru
        _
      // Predicated region
      $region17: #{bottleneck_forward.6} parent=11 // pred_check
        %p149 = pneg %p79
      $region18: #{bottleneck_forward.6} parent=11 // pred_check_branch
        %151 = sbr.rel (%p149) target = $region20
      $region19: #{bottleneck_forward.6} parent=11 // pred_region
        _
      $region20: #{bottleneck_forward.6} parent=11 // pred_fallthru
        _
    $region12: #{bottleneck_forward.6} parent=5 // pred_fallthru
      _
    %p152 = scmp.lt.s32.totalorder %s11, 4
    // Predicated region
    $region21: #{bottleneck_forward.6} parent=5 // pred_check
      %p153 = pneg %p152
    $region22: #{bottleneck_forward.6} parent=5 // pred_check_branch
      %155 = sbr.rel (%p153) target = $region24
    $region23: #{bottleneck_forward.6} parent=5 // pred_region
      // Predicated region
      $region25: #{bottleneck_forward.6} parent=23 // pred_check
        %p156 = pneg %p31
      $region26: #{bottleneck_forward.6} parent=23 // pred_check_branch
        %158 = sbr.rel (%p156) target = $region28
      $region27: #{bottleneck_forward.6} parent=23 // pred_region
        %s159 = smul.u32 16, %s11
        %p160 = scmp.lt.s32.totalorder %s159, 63
        %s161 = scalar_select %p160, %s159, 63
        %s162 = smul.addr %s161, 8
        %s163 = scalar_lea.vmem %s0, %s162
        %s164 = smul.u32 16, %s11
      $region28: #{bottleneck_forward.6} parent=23 // pred_fallthru
        _
    $region24: #{bottleneck_forward.6} parent=5 // pred_fallthru
      _
    %p165 = scmp.le.s32.totalorder 1, %s11
    %p166 = scmp.lt.s32.totalorder %s11, 5
    %p167 = pnand %p165, %p166
    %p168 = pneg %p167
    // Predicated region
    $region29: #{bottleneck_forward.6} parent=5 // pred_check
      _
    $region30: #{bottleneck_forward.6} parent=5 // pred_check_branch
      %170 = sbr.rel (%p167) target = $region32
    $region31: #{bottleneck_forward.6} parent=5 // pred_region
      %s171 = ssub.s32 %s11, 1
      %s172 = smul.u32 16, %s16
      %p173 = scmp.lt.s32.totalorder %s172, 63
      %s174 = scalar_select %p173, %s172, 63
      %s175 = smul.addr %s174, 8
      %s176 = scalar_lea.vmem %s0, %s175
      %p177 = pneg %p37
      %p178 = pneg %p34
      %p179 = pneg %p58
      %p180 = pneg %p55
      %p181 = pneg %p79
      %p182 = pneg %p76
      %p183 = pneg %p105
      %p184 = pneg %p102
      %s185 = smul.u32 16, %s16
      %p186 = scmp.lt.s32.totalorder %s185, 63
      %s187 = scalar_select %p186, %s185, 63
      %s188 = smul.addr %s187, 8
      %s189 = scalar_lea.vmem %s3, %s188
      %p190 = pneg %p131
      %p191 = pneg %p128
      %p192 = scmp.lt.s32.totalorder %s16, 3
      %s193 = scalar_select %p192, %s16, 3
      %s194 = smul.addr %s193, 2
      %s195 = scalar_lea.vmem %s4, %s194
      %s196 = smul.u32 16, %s16
      %p197 = scmp.lt.s32.totalorder %s196, 63
      %s198 = scalar_select %p197, %s196, 63
      %s199 = smul.addr %s198, 8
      %s200 = scalar_lea.vmem %s0, %s199
      %s201 = smul.u32 16, %s16
      %s202 = smul.u32 16, %s16
      %p203 = scmp.lt.s32.totalorder %s202, 63
      %s204 = scalar_select %p203, %s202, 63
      %s205 = smul.addr %s204, 8
      %s206 = scalar_lea.vmem %s3, %s205
      %s207 = smul.u32 16, %s16
      %p208 = scmp.lt.s32.totalorder %s16, 3
      %s209 = scalar_select %p208, %s16, 3
      %s210 = smul.addr %s209, 2
      %s211 = scalar_lea.vmem %s4, %s210
      %v212 = vld [vmem:[%s200] sm:$0xff]
      %v213 = vld [vmem:[%s200 + $0x8] sm:$0xff]
      %v214 = vld [vmem:[%s200 + $0x10] sm:$0xff]
      %v215 = vld [vmem:[%s200 + $0x18] sm:$0xff]
      %v216 = vld [vmem:[%s200 + $0x20] sm:$0xff]
      %v217 = vld [vmem:[%s200 + $0x28] sm:$0xff]
      %v218 = vld [vmem:[%s200 + $0x30] sm:$0xff]
      %v219 = vld [vmem:[%s200 + $0x38] sm:$0xff]
      %v220 = vld [vmem:[%s200 + $0x40] sm:$0xff]
      %v221 = vld [vmem:[%s200 + $0x48] sm:$0xff]
      %v222 = vld [vmem:[%s200 + $0x50] sm:$0xff]
      %v223 = vld [vmem:[%s200 + $0x58] sm:$0xff]
      %v224 = vld [vmem:[%s200 + $0x60] sm:$0xff]
      %v225 = vld [vmem:[%s200 + $0x68] sm:$0xff]
      %v226 = vld [vmem:[%s200 + $0x70] sm:$0xff]
      %v227 = vld [vmem:[%s200 + $0x78] sm:$0xff]
      %v228 = vld [vmem:[%s1] sm:$0x1]
      %v229 = vlaneseq
      %v230 = vshrl.u32 %v229, 7
      %v231 = vsub.s32 0, %v230
      %v232 = vrot.slane %v228, %v231
      %v233 = vmul.f32 %v212, %v232
      %v234 = vmul.f32 %v213, %v232
      %v235 = vmul.f32 %v214, %v232
      %v236 = vmul.f32 %v215, %v232
      %v237 = vmul.f32 %v216, %v232
      %v238 = vmul.f32 %v217, %v232
      %v239 = vmul.f32 %v218, %v232
      %v240 = vmul.f32 %v219, %v232
      %v241 = vmul.f32 %v220, %v232
      %v242 = vmul.f32 %v221, %v232
      %v243 = vmul.f32 %v222, %v232
      %v244 = vmul.f32 %v223, %v232
      %v245 = vmul.f32 %v224, %v232
      %v246 = vmul.f32 %v225, %v232
      %v247 = vmul.f32 %v226, %v232
      %v248 = vmul.f32 %v227, %v232
      %v249 = vld [vmem:[%s1 + $0x1] sm:$0x1]
      %v250 = vlaneseq
      %v251 = vshrl.u32 %v250, 7
      %v252 = vsub.s32 0, %v251
      %v253 = vrot.slane %v249, %v252
      %v254 = vadd.f32 %v233, %v253
      %v255 = vadd.f32 %v234, %v253
      %v256 = vadd.f32 %v235, %v253
      %v257 = vadd.f32 %v236, %v253
      %v258 = vadd.f32 %v237, %v253
      %v259 = vadd.f32 %v238, %v253
      %v260 = vadd.f32 %v239, %v253
      %v261 = vadd.f32 %v240, %v253
      %v262 = vadd.f32 %v241, %v253
      %v263 = vadd.f32 %v242, %v253
      %v264 = vadd.f32 %v243, %v253
      %v265 = vadd.f32 %v244, %v253
      %v266 = vadd.f32 %v245, %v253
      %v267 = vadd.f32 %v246, %v253
      %v268 = vadd.f32 %v247, %v253
      %v269 = vadd.f32 %v248, %v253
      %v270 = vmax.f32 %v254, 0.0
      %v271 = vmax.f32 %v255, 0.0
      %v272 = vmax.f32 %v256, 0.0
      %v273 = vmax.f32 %v257, 0.0
      %v274 = vmax.f32 %v258, 0.0
      %v275 = vmax.f32 %v259, 0.0
      %v276 = vmax.f32 %v260, 0.0
      %v277 = vmax.f32 %v261, 0.0
      %v278 = vmax.f32 %v262, 0.0
      %v279 = vmax.f32 %v263, 0.0
      %v280 = vmax.f32 %v264, 0.0
      %v281 = vmax.f32 %v265, 0.0
      %v282 = vmax.f32 %v266, 0.0
      %v283 = vmax.f32 %v267, 0.0
      %v284 = vmax.f32 %v268, 0.0
      %v285 = vmax.f32 %v269, 0.0
      %v286 = vld [vmem:[%s2] sm:$0xff]
      %v287 = vld [vmem:[%s2 + $0x8] sm:$0xff]
      %v288 = vld [vmem:[%s2 + $0x10] sm:$0xff]
      %v289 = vld [vmem:[%s2 + $0x18] sm:$0xff]
      %v290 = vld [vmem:[%s2 + $0x20] sm:$0xff]
      %v291 = vld [vmem:[%s2 + $0x28] sm:$0xff]
      %v292 = vld [vmem:[%s2 + $0x30] sm:$0xff]
      %v293 = vld [vmem:[%s2 + $0x38] sm:$0xff]
      %v294 = vld [vmem:[%s2 + $0x40] sm:$0xff]
      %v295 = vld [vmem:[%s2 + $0x48] sm:$0xff]
      %v296 = vld [vmem:[%s2 + $0x50] sm:$0xff]
      %v297 = vld [vmem:[%s2 + $0x58] sm:$0xff]
      %v298 = vld [vmem:[%s2 + $0x60] sm:$0xff]
      %v299 = vld [vmem:[%s2 + $0x68] sm:$0xff]
      %v300 = vld [vmem:[%s2 + $0x70] sm:$0xff]
      %v301 = vld [vmem:[%s2 + $0x78] sm:$0xff]
      %302 = vmatprep.subr.mxu0 0.0
      %303 = vmatpush1.msra.mxu0 %v286
      %304 = vmatprep.subr.mxu0 0.0
      %305 = vmatpush1.msra.mxu0 %v287
      %306 = vmatprep.subr.mxu0 0.0
      %307 = vmatpush1.msra.mxu0 %v288
      %308 = vmatprep.subr.mxu0 0.0
      %309 = vmatpush1.msra.mxu0 %v289
      %310 = vmatprep.subr.mxu0 0.0
      %311 = vmatpush1.msra.mxu0 %v290
      %312 = vmatprep.subr.mxu0 0.0
      %313 = vmatpush1.msra.mxu0 %v291
      %314 = vmatprep.subr.mxu0 0.0
      %315 = vmatpush1.msra.mxu0 %v292
      %316 = vmatprep.subr.mxu0 0.0
      %317 = vmatpush1.msra.mxu0 %v293
      %318 = vmatprep.subr.mxu0 0.0
      %319 = vmatpush1.msra.mxu0 %v294
      %320 = vmatprep.subr.mxu0 0.0
      %321 = vmatpush1.msra.mxu0 %v295
      %322 = vmatprep.subr.mxu0 0.0
      %323 = vmatpush1.msra.mxu0 %v296
      %324 = vmatprep.subr.mxu0 0.0
      %325 = vmatpush1.msra.mxu0 %v297
      %326 = vmatprep.subr.mxu0 0.0
      %327 = vmatpush1.msra.mxu0 %v298
      %328 = vmatprep.subr.mxu0 0.0
      %329 = vmatpush1.msra.mxu0 %v299
      %330 = vmatprep.subr.mxu0 0.0
      %331 = vmatpush1.msra.mxu0 %v300
      %332 = vmatprep.subr.mxu0 0.0
      %333 = vmatpush1.msra.mxu0 %v301
      %334 = vmatprep.subr.mxu0 0.0
      %335 = vmatpush1.msra.mxu0 0.0
      %336 = vmatprep.subr.mxu0 0.0
      %337 = vmatpush1.msra.mxu0 0.0
      %338 = vmatprep.subr.mxu0 0.0
      %339 = vmatpush1.msra.mxu0 0.0
      %340 = vmatprep.subr.mxu0 0.0
      %341 = vmatpush1.msra.mxu0 0.0
      %342 = vmatprep.subr.mxu0 0.0
      %343 = vmatpush1.msra.mxu0 0.0
      %344 = vmatprep.subr.mxu0 0.0
      %345 = vmatpush1.msra.mxu0 0.0
      %346 = vmatprep.subr.mxu0 0.0
      %347 = vmatpush1.msra.mxu0 0.0
      %348 = vmatprep.subr.mxu0 0.0
      %349 = vmatpush1.msra.mxu0 0.0
      %350 = vmatprep.subr.mxu0 0.0
      %351 = vmatpush1.msra.mxu0 0.0
      %352 = vmatprep.subr.mxu0 0.0
      %353 = vmatpush1.msra.mxu0 0.0
      %354 = vmatprep.subr.mxu0 0.0
      %355 = vmatpush1.msra.mxu0 0.0
      %356 = vmatprep.subr.mxu0 0.0
      %357 = vmatpush1.msra.mxu0 0.0
      %358 = vmatprep.subr.mxu0 0.0
      %359 = vmatpush1.msra.mxu0 0.0
      %360 = vmatprep.subr.mxu0 0.0
      %361 = vmatpush1.msra.mxu0 0.0
      %362 = vmatprep.subr.mxu0 0.0
      %363 = vmatpush1.msra.mxu0 0.0
      %364 = vmatprep.subr.mxu0 0.0
      %365 = vmatpush1.msra.mxu0 0.0
      %366 = vmatprep.mubr.f32.mxu0 0.0
      %367 = vmatmul.mubr.f32.gmra.mrb[0].mxu0 %v270
      %v368 = vpop.f32.mrb[0].mxu0
      %v369 = vadd.f32 0.0, %v368
      %v370 = vpop.f32.mrb[0].mxu0
      %371 = vmatprep.mubr.f32.mxu0 0.0
      %372 = vmatmul.mubr.f32.gmra.mrb[0].mxu0 %v271
      %v373 = vpop.f32.mrb[0].mxu0
      %v374 = vadd.f32 0.0, %v373
      %v375 = vpop.f32.mrb[0].mxu0
      %376 = vmatprep.mubr.f32.mxu0 0.0
      %377 = vmatmul.mubr.f32.gmra.mrb[0].mxu0 %v272
      %v378 = vpop.f32.mrb[0].mxu0
      %v379 = vadd.f32 0.0, %v378
      %v380 = vpop.f32.mrb[0].mxu0
      %381 = vmatprep.mubr.f32.mxu0 0.0
      %382 = vmatmul.mubr.f32.gmra.mrb[0].mxu0 %v273
      %v383 = vpop.f32.mrb[0].mxu0
      %v384 = vadd.f32 0.0, %v383
      %v385 = vpop.f32.mrb[0].mxu0
      %386 = vmatprep.mubr.f32.mxu0 0.0
      %387 = vmatmul.mubr.f32.gmra.mrb[0].mxu0 %v274
      %v388 = vpop.f32.mrb[0].mxu0
      %v389 = vadd.f32 0.0, %v388
      %v390 = vpop.f32.mrb[0].mxu0
      %391 = vmatprep.mubr.f32.mxu0 0.0
      %392 = vmatmul.mubr.f32.gmra.mrb[0].mxu0 %v275
      %v393 = vpop.f32.mrb[0].mxu0
      %v394 = vadd.f32 0.0, %v393
      %v395 = vpop.f32.mrb[0].mxu0
      %396 = vmatprep.mubr.f32.mxu0 0.0
      %397 = vmatmul.mubr.f32.gmra.mrb[0].mxu0 %v276
      %v398 = vpop.f32.mrb[0].mxu0
      %v399 = vadd.f32 0.0, %v398
      %v400 = vpop.f32.mrb[0].mxu0
      %401 = vmatprep.mubr.f32.mxu0 0.0
      %402 = vmatmul.mubr.f32.gmra.mrb[0].mxu0 %v277
      %v403 = vpop.f32.mrb[0].mxu0
      %v404 = vadd.f32 0.0, %v403
      %v405 = vpop.f32.mrb[0].mxu0
      %406 = vmatprep.mubr.f32.mxu0 0.0
      %407 = vmatmul.mubr.f32.gmra.mrb[0].mxu0 %v278
      %v408 = vpop.f32.mrb[0].mxu0
      %v409 = vadd.f32 0.0, %v408
      %v410 = vpop.f32.mrb[0].mxu0
      %411 = vmatprep.mubr.f32.mxu0 0.0
      %412 = vmatmul.mubr.f32.gmra.mrb[0].mxu0 %v279
      %v413 = vpop.f32.mrb[0].mxu0
      %v414 = vadd.f32 0.0, %v413
      %v415 = vpop.f32.mrb[0].mxu0
      %416 = vmatprep.mubr.f32.mxu0 0.0
      %417 = vmatmul.mubr.f32.gmra.mrb[0].mxu0 %v280
      %v418 = vpop.f32.mrb[0].mxu0
      %v419 = vadd.f32 0.0, %v418
      %v420 = vpop.f32.mrb[0].mxu0
      %421 = vmatprep.mubr.f32.mxu0 0.0
      %422 = vmatmul.mubr.f32.gmra.mrb[0].mxu0 %v281
      %v423 = vpop.f32.mrb[0].mxu0
      %v424 = vadd.f32 0.0, %v423
      %v425 = vpop.f32.mrb[0].mxu0
      %426 = vmatprep.mubr.f32.mxu0 0.0
      %427 = vmatmul.mubr.f32.gmra.mrb[0].mxu0 %v282
      %v428 = vpop.f32.mrb[0].mxu0
      %v429 = vadd.f32 0.0, %v428
      %v430 = vpop.f32.mrb[0].mxu0
      %431 = vmatprep.mubr.f32.mxu0 0.0
      %432 = vmatmul.mubr.f32.gmra.mrb[0].mxu0 %v283
      %v433 = vpop.f32.mrb[0].mxu0
      %v434 = vadd.f32 0.0, %v433
      %v435 = vpop.f32.mrb[0].mxu0
      %436 = vmatprep.mubr.f32.mxu0 0.0
      %437 = vmatmul.mubr.f32.gmra.mrb[0].mxu0 %v284
      %v438 = vpop.f32.mrb[0].mxu0
      %v439 = vadd.f32 0.0, %v438
      %v440 = vpop.f32.mrb[0].mxu0
      %441 = vmatprep.mubr.f32.mxu0 0.0
      %442 = vmatmul.mubr.f32.gmra.mrb[0].mxu0 %v285
      %v443 = vpop.f32.mrb[0].mxu0
      %v444 = vadd.f32 0.0, %v443
      %v445 = vpop.f32.mrb[0].mxu0
      %446 = vdwg.mxu0
      %447 = vst [vmem:[%s206] sm:$0xff] %v369
      %448 = vst [vmem:[%s206 + $0x8] sm:$0xff] %v374
      %449 = vst [vmem:[%s206 + $0x10] sm:$0xff] %v379
      %450 = vst [vmem:[%s206 + $0x18] sm:$0xff] %v384
      %451 = vst [vmem:[%s206 + $0x20] sm:$0xff] %v389
      %452 = vst [vmem:[%s206 + $0x28] sm:$0xff] %v394
      %453 = vst [vmem:[%s206 + $0x30] sm:$0xff] %v399
      %454 = vst [vmem:[%s206 + $0x38] sm:$0xff] %v404
      %455 = vst [vmem:[%s206 + $0x40] sm:$0xff] %v409
      %456 = vst [vmem:[%s206 + $0x48] sm:$0xff] %v414
      %457 = vst [vmem:[%s206 + $0x50] sm:$0xff] %v419
      %458 = vst [vmem:[%s206 + $0x58] sm:$0xff] %v424
      %459 = vst [vmem:[%s206 + $0x60] sm:$0xff] %v429
      %460 = vst [vmem:[%s206 + $0x68] sm:$0xff] %v434
      %461 = vst [vmem:[%s206 + $0x70] sm:$0xff] %v439
      %462 = vst [vmem:[%s206 + $0x78] sm:$0xff] %v444
      %v463 = vadd.f32 %v369, %v374
      %v464 = vadd.f32 %v463, %v379
      %v465 = vadd.f32 %v464, %v384
      %v466 = vadd.f32 %v465, %v389
      %v467 = vadd.f32 %v466, %v394
      %v468 = vadd.f32 %v467, %v399
      %v469 = vadd.f32 %v468, %v404
      %v470 = vadd.f32 %v469, %v409
      %v471 = vadd.f32 %v470, %v414
      %v472 = vadd.f32 %v471, %v419
      %v473 = vadd.f32 %v472, %v424
      %v474 = vadd.f32 %v473, %v429
      %v475 = vadd.f32 %v474, %v434
      %v476 = vadd.f32 %v475, %v439
      %v477 = vadd.f32 %v476, %v444
      %v478 = vrot.slane %v477, 4
      %v479 = vadd.f32 %v477, %v478
      %v480 = vrot.slane %v479, 2
      %v481 = vadd.f32 %v479, %v480
      %v482 = vrot.slane %v481, 1
      %v483 = vadd.f32 %v481, %v482
      %484 = vst [vmem:[%s211] sm:$0x1] %v483
      %v485 = vmul.f32 %v369, %v369
      %v486 = vmul.f32 %v374, %v374
      %v487 = vmul.f32 %v379, %v379
      %v488 = vmul.f32 %v384, %v384
      %v489 = vmul.f32 %v389, %v389
      %v490 = vmul.f32 %v394, %v394
      %v491 = vmul.f32 %v399, %v399
      %v492 = vmul.f32 %v404, %v404
      %v493 = vmul.f32 %v409, %v409
      %v494 = vmul.f32 %v414, %v414
      %v495 = vmul.f32 %v419, %v419
      %v496 = vmul.f32 %v424, %v424
      %v497 = vmul.f32 %v429, %v429
      %v498 = vmul.f32 %v434, %v434
      %v499 = vmul.f32 %v439, %v439
      %v500 = vmul.f32 %v444, %v444
      %v501 = vadd.f32 %v485, %v486
      %v502 = vadd.f32 %v501, %v487
      %v503 = vadd.f32 %v502, %v488
      %v504 = vadd.f32 %v503, %v489
      %v505 = vadd.f32 %v504, %v490
      %v506 = vadd.f32 %v505, %v491
      %v507 = vadd.f32 %v506, %v492
      %v508 = vadd.f32 %v507, %v493
      %v509 = vadd.f32 %v508, %v494
      %v510 = vadd.f32 %v509, %v495
      %v511 = vadd.f32 %v510, %v496
      %v512 = vadd.f32 %v511, %v497
      %v513 = vadd.f32 %v512, %v498
      %v514 = vadd.f32 %v513, %v499
      %v515 = vadd.f32 %v514, %v500
      %v516 = vrot.slane %v515, 4
      %v517 = vadd.f32 %v515, %v516
      %v518 = vrot.slane %v517, 2
      %v519 = vadd.f32 %v517, %v518
      %v520 = vrot.slane %v519, 1
      %v521 = vadd.f32 %v519, %v520
      %522 = vst [vmem:[%s211 + $0x1] sm:$0x1] %v521
      %s523 = smul.u32 16, %s16
      %p524 = scmp.lt.s32.totalorder %s523, 63
      %s525 = scalar_select %p524, %s523, 63
      %s526 = smul.addr %s525, 8
      %s527 = scalar_lea.vmem %s3, %s526
      %p528 = scmp.lt.s32.totalorder %s16, 3
      %s529 = scalar_select %p528, %s16, 3
      %s530 = smul.addr %s529, 2
      %s531 = scalar_lea.vmem %s4, %s530
      // Predicated region
      $region33: #{bottleneck_forward.6} parent=31 // pred_check
        %p532 = pneg %p102
      $region34: #{bottleneck_forward.6} parent=31 // pred_check_branch
        %534 = sbr.rel (%p532) target = $region36
      $region35: #{bottleneck_forward.6} parent=31 // pred_region
        %s535 = smul.u32 16, %s16
      $region36: #{bottleneck_forward.6} parent=31 // pred_fallthru
        _
      // Predicated region
      $region37: #{bottleneck_forward.6} parent=31 // pred_check
        %p536 = pneg %p128
      $region38: #{bottleneck_forward.6} parent=31 // pred_check_branch
        %538 = sbr.rel (%p536) target = $region40
      $region39: #{bottleneck_forward.6} parent=31 // pred_region
        _
      $region40: #{bottleneck_forward.6} parent=31 // pred_fallthru
        _
    $region32: #{bottleneck_forward.6} parent=5 // pred_fallthru
      _
    %p539 = scmp.le.s32.totalorder 2, %s11
    // Predicated region
    $region41: #{bottleneck_forward.6} parent=5 // pred_check
      %p540 = pneg %p539
    $region42: #{bottleneck_forward.6} parent=5 // pred_check_branch
      %542 = sbr.rel (%p540) target = $region44
    $region43: #{bottleneck_forward.6} parent=5 // pred_region
      %s543 = ssub.s32 %s11, 2
      // Predicated region
      $region45: #{bottleneck_forward.6} parent=43 // pred_check
        %p544 = pneg %p108
      $region46: #{bottleneck_forward.6} parent=43 // pred_check_branch
        %546 = sbr.rel (%p544) target = $region48
      $region47: #{bottleneck_forward.6} parent=43 // pred_region
        %s547 = smul.u32 16, %s17
        %p548 = scmp.lt.s32.totalorder %s547, 63
        %s549 = scalar_select %p548, %s547, 63
        %s550 = smul.addr %s549, 8
        %s551 = scalar_lea.vmem %s3, %s550
      $region48: #{bottleneck_forward.6} parent=43 // pred_fallthru
        _
      // Predicated region
      $region49: #{bottleneck_forward.6} parent=43 // pred_check
        %p552 = pneg %p134
      $region50: #{bottleneck_forward.6} parent=43 // pred_check_branch
        %554 = sbr.rel (%p552) target = $region52
      $region51: #{bottleneck_forward.6} parent=43 // pred_region
        %p555 = scmp.lt.s32.totalorder %s17, 3
        %s556 = scalar_select %p555, %s17, 3
        %s557 = smul.addr %s556, 2
        %s558 = scalar_lea.vmem %s4, %s557
      $region52: #{bottleneck_forward.6} parent=43 // pred_fallthru
        _
    $region44: #{bottleneck_forward.6} parent=5 // pred_fallthru
      _
  $region6: #{bottleneck_forward.6} parent=0 // loop_footer
    %s15 = sadd.s32 1, %s11
  $region7: #{bottleneck_forward.6} parent=0 // loop_footer_branch
    %10 = sbr.rel target = $region3
  $region8: #{bottleneck_forward.6} parent=0 // loop_exit
    _

// kernel: bottleneck_forward.7
$region0: #{bottleneck_forward.7}
  #allocation0 [shape = 'u32[]', space=smem, size = 0x4, offset = 0x4, fixed_abs, tag = 'smem constant byte address 0x4 - core index']
  #allocation1 [shape = 'u32[144,128]{1,0:T(1,128)}', space=vmem, size = 0x12000, scoped, tag = 'internal scratch']
  %s0 = inlined_call_operand.vmem [shape: f32[512,128], index: 0, kind: input, shape index: {}, may-alias: {0,3}]
  %s1 = inlined_call_operand.vmem [shape: f32[2,128], index: 1, kind: input, shape index: {}]
  %s2 = inlined_call_operand.vmem [shape: f32[512,128], index: 2, kind: input, shape index: {}]
  %s3 = inlined_call_operand.vmem [shape: f32[512,128], index: 3, kind: output, shape index: {}, may-alias: {0,3}]
  %s4 = sld [smem:[#allocation0]]
  $region45: #{bottleneck_forward.7} parent=0
    _
  %s6 = ssub.s32 1, %s4
  %s7 = scalar_select 0, %s6, %s4
  loop: start=0, step=1, limit=6
  $region2: #{bottleneck_forward.7} parent=0 // loop_pre_header
    _
  $region3: #{bottleneck_forward.7} parent=0 // loop_header
    %s9 = sphi 0, %s13
    %p10 = scmp.ge.s32.totalorder %s9, 6
    %s19 = sphi 0, %s21
    %s22 = sphi 0, %s19
    %s23 = sphi 0, %s22
    %s39 = sphi 0, %s23
    %s43 = sphi 0, %s43
    %s45 = sphi 0, %s43
    %s46 = sphi 0, %s45
    %s60 = sphi 0, %s46
    %s66 = sphi 0, %s68
    %s69 = sphi 0, %s66
    %s70 = sphi 0, %s69
    %s86 = sphi 0, %s70
    %s92 = sphi 0, %s94
    %s95 = sphi 0, %s92
    %s96 = sphi 0, %s95
    %s112 = sphi 0, %s96
  $region4: #{bottleneck_forward.7} parent=0 // loop_header_branch
    %12 = sbr.rel (%p10) target = $region8
  $region5: #{bottleneck_forward.7} parent=0 // loop_body
    %s14 = ssub.s32 %s9, 1
    %s15 = ssub.s32 %s9, 2
    %s16 = sadd.s32 %s9, 1
    %s17 = ssub.s32 %s9, %s16
    %p18 = scmp.eq.s32.totalorder %s17, 0
    %s20 = sadd.s32 %s19, 1
    %s21 = scalar_select %p18, %s19, %s20
    %p24 = pneg %p18
    %p25 = scmp.eq.s32.totalorder %s9, 3
    %p26 = por %p24, %p25
    %p27 = scmp.ne.s32.totalorder %s19, %s22
    %p28 = scmp.eq.s32.totalorder %s9, 0
    %p29 = por %p27, %p28
    %p30 = scmp.ne.s32.totalorder %s19, %s22
    %p31 = scmp.eq.s32.totalorder %s14, 3
    %p32 = por %p30, %p31
    %p33 = scmp.ne.s32.totalorder %s22, %s23
    %p34 = scmp.eq.s32.totalorder %s14, 0
    %p35 = por %p33, %p34
    %p36 = scmp.ne.s32.totalorder %s22, %s23
    %p37 = scmp.eq.s32.totalorder %s15, 3
    %p38 = por %p36, %p37
    %p40 = scmp.ne.s32.totalorder %s23, %s39
    %p41 = scmp.eq.s32.totalorder %s15, 0
    %p42 = por %p40, %p41
    %s44 = sadd.s32 %s43, 1
    %p47 = scmp.eq.s32.totalorder %s9, 3
    %p48 = scmp.ne.s32.totalorder %s43, %s45
    %p49 = scmp.eq.s32.totalorder %s9, 0
    %p50 = por %p48, %p49
    %p51 = scmp.ne.s32.totalorder %s43, %s45
    %p52 = scmp.eq.s32.totalorder %s14, 3
    %p53 = por %p51, %p52
    %p54 = scmp.ne.s32.totalorder %s45, %s46
    %p55 = scmp.eq.s32.totalorder %s14, 0
    %p56 = por %p54, %p55
    %p57 = scmp.ne.s32.totalorder %s45, %s46
    %p58 = scmp.eq.s32.totalorder %s15, 3
    %p59 = por %p57, %p58
    %p61 = scmp.ne.s32.totalorder %s46, %s60
    %p62 = scmp.eq.s32.totalorder %s15, 0
    %p63 = por %p61, %p62
    %s64 = ssub.s32 %s9, %s16
    %p65 = scmp.eq.s32.totalorder %s64, 0
    %s67 = sadd.s32 %s66, 1
    %s68 = scalar_select %p65, %s66, %s67
    %p71 = pneg %p65
    %p72 = scmp.eq.s32.totalorder %s9, 3
    %p73 = por %p71, %p72
    %p74 = scmp.ne.s32.totalorder %s66, %s69
    %p75 = scmp.eq.s32.totalorder %s9, 0
    %p76 = por %p74, %p75
    %p77 = scmp.ne.s32.totalorder %s66, %s69
    %p78 = scmp.eq.s32.totalorder %s14, 3
    %p79 = por %p77, %p78
    %p80 = scmp.ne.s32.totalorder %s69, %s70
    %p81 = scmp.eq.s32.totalorder %s14, 0
    %p82 = por %p80, %p81
    %p83 = scmp.ne.s32.totalorder %s69, %s70
    %p84 = scmp.eq.s32.totalorder %s15, 3
    %p85 = por %p83, %p84
    %p87 = scmp.ne.s32.totalorder %s70, %s86
    %p88 = scmp.eq.s32.totalorder %s15, 0
    %p89 = por %p87, %p88
    %s90 = ssub.s32 %s9, %s16
    %p91 = scmp.eq.s32.totalorder %s90, 0
    %s93 = sadd.s32 %s92, 1
    %s94 = scalar_select %p91, %s92, %s93
    %p97 = pneg %p91
    %p98 = scmp.eq.s32.totalorder %s9, 3
    %p99 = por %p97, %p98
    %p100 = scmp.ne.s32.totalorder %s92, %s95
    %p101 = scmp.eq.s32.totalorder %s9, 0
    %p102 = por %p100, %p101
    %p103 = scmp.ne.s32.totalorder %s92, %s95
    %p104 = scmp.eq.s32.totalorder %s14, 3
    %p105 = por %p103, %p104
    %p106 = scmp.ne.s32.totalorder %s95, %s96
    %p107 = scmp.eq.s32.totalorder %s14, 0
    %p108 = por %p106, %p107
    %p109 = scmp.ne.s32.totalorder %s95, %s96
    %p110 = scmp.eq.s32.totalorder %s15, 3
    %p111 = por %p109, %p110
    %p113 = scmp.ne.s32.totalorder %s96, %s112
    %p114 = scmp.eq.s32.totalorder %s15, 0
    %p115 = por %p113, %p114
    %p116 = scmp.le.s32.totalorder 1, %s9
    %p117 = scmp.lt.s32.totalorder %s9, 5
    %p118 = pnand %p116, %p117
    %p119 = pneg %p118
    // Predicated region
    $region9: #{bottleneck_forward.7} parent=5 // pred_check
      _
    $region10: #{bottleneck_forward.7} parent=5 // pred_check_branch
      %121 = sbr.rel (%p118) target = $region12
    $region11: #{bottleneck_forward.7} parent=5 // pred_region
      %s122 = ssub.s32 %s9, 1
      // Predicated region
      $region13: #{bottleneck_forward.7} parent=11 // pred_check
        %p123 = pneg %p56
      $region14: #{bottleneck_forward.7} parent=11 // pred_check_branch
        %125 = sbr.rel (%p123) target = $region16
      $region15: #{bottleneck_forward.7} parent=11 // pred_region
        _
      $region16: #{bottleneck_forward.7} parent=11 // pred_fallthru
        _
    $region12: #{bottleneck_forward.7} parent=5 // pred_fallthru
      _
    %p126 = scmp.lt.s32.totalorder %s9, 4
    // Predicated region
    $region17: #{bottleneck_forward.7} parent=5 // pred_check
      %p127 = pneg %p126
    $region18: #{bottleneck_forward.7} parent=5 // pred_check_branch
      %129 = sbr.rel (%p127) target = $region20
    $region19: #{bottleneck_forward.7} parent=5 // pred_region
      // Predicated region
      $region21: #{bottleneck_forward.7} parent=19 // pred_check
        %p130 = pneg %p29
      $region22: #{bottleneck_forward.7} parent=19 // pred_check_branch
        %132 = sbr.rel (%p130) target = $region24
      $region23: #{bottleneck_forward.7} parent=19 // pred_region
        %s133 = smul.u32 16, %s9
        %p134 = scmp.lt.s32.totalorder %s133, 63
        %s135 = scalar_select %p134, %s133, 63
        %s136 = smul.addr %s135, 8
        %s137 = scalar_lea.vmem %s0, %s136
        %s138 = smul.u32 16, %s9
      $region24: #{bottleneck_forward.7} parent=19 // pred_fallthru
        _
      // Predicated region
      $region25: #{bottleneck_forward.7} parent=19 // pred_check
        %p139 = pneg %p76
      $region26: #{bottleneck_forward.7} parent=19 // pred_check_branch
        %141 = sbr.rel (%p139) target = $region28
      $region27: #{bottleneck_forward.7} parent=19 // pred_region
        %s142 = smul.u32 16, %s9
        %p143 = scmp.lt.s32.totalorder %s142, 63
        %s144 = scalar_select %p143, %s142, 63
        %s145 = smul.addr %s144, 8
        %s146 = scalar_lea.vmem %s2, %s145
        %s147 = smul.u32 16, %s9
      $region28: #{bottleneck_forward.7} parent=19 // pred_fallthru
        _
    $region20: #{bottleneck_forward.7} parent=5 // pred_fallthru
      _
    %p148 = scmp.le.s32.totalorder 1, %s9
    %p149 = scmp.lt.s32.totalorder %s9, 5
    %p150 = pnand %p148, %p149
    %p151 = pneg %p150
    // Predicated region
    $region29: #{bottleneck_forward.7} parent=5 // pred_check
      _
    $region30: #{bottleneck_forward.7} parent=5 // pred_check_branch
      %153 = sbr.rel (%p150) target = $region32
    $region31: #{bottleneck_forward.7} parent=5 // pred_region
      %s154 = ssub.s32 %s9, 1
      %s155 = smul.u32 16, %s14
      %p156 = scmp.lt.s32.totalorder %s155, 63
      %s157 = scalar_select %p156, %s155, 63
      %s158 = smul.addr %s157, 8
      %s159 = scalar_lea.vmem %s0, %s158
      %p160 = pneg %p35
      %p161 = pneg %p32
      %p162 = pneg %p56
      %p163 = pneg %p53
      %s164 = smul.u32 16, %s14
      %p165 = scmp.lt.s32.totalorder %s164, 63
      %s166 = scalar_select %p165, %s164, 63
      %s167 = smul.addr %s166, 8
      %s168 = scalar_lea.vmem %s2, %s167
      %p169 = pneg %p82
      %p170 = pneg %p79
      %p171 = pneg %p108
      %p172 = pneg %p105
      %s173 = smul.u32 16, %s14
      %p174 = scmp.lt.s32.totalorder %s173, 63
      %s175 = scalar_select %p174, %s173, 63
      %s176 = smul.addr %s175, 8
      %s177 = scalar_lea.vmem %s3, %s176
      %s178 = smul.u32 16, %s14
      %p179 = scmp.lt.s32.totalorder %s178, 63
      %s180 = scalar_select %p179, %s178, 63
      %s181 = smul.addr %s180, 8
      %s182 = scalar_lea.vmem %s0, %s181
      %s183 = smul.u32 16, %s14
      %s184 = smul.u32 16, %s14
      %p185 = scmp.lt.s32.totalorder %s184, 63
      %s186 = scalar_select %p185, %s184, 63
      %s187 = smul.addr %s186, 8
      %s188 = scalar_lea.vmem %s2, %s187
      %s189 = smul.u32 16, %s14
      %s190 = smul.u32 16, %s14
      %p191 = scmp.lt.s32.totalorder %s190, 63
      %s192 = scalar_select %p191, %s190, 63
      %s193 = smul.addr %s192, 8
      %s194 = scalar_lea.vmem %s3, %s193
      %s195 = smul.u32 16, %s14
      %v196 = vld [vmem:[%s182] sm:$0xff]
      %v197 = vld [vmem:[%s182 + $0x8] sm:$0xff]
      %v198 = vld [vmem:[%s182 + $0x10] sm:$0xff]
      %v199 = vld [vmem:[%s182 + $0x18] sm:$0xff]
      %v200 = vld [vmem:[%s182 + $0x20] sm:$0xff]
      %v201 = vld [vmem:[%s182 + $0x28] sm:$0xff]
      %v202 = vld [vmem:[%s182 + $0x30] sm:$0xff]
      %v203 = vld [vmem:[%s182 + $0x38] sm:$0xff]
      %v204 = vld [vmem:[%s182 + $0x40] sm:$0xff]
      %v205 = vld [vmem:[%s182 + $0x48] sm:$0xff]
      %v206 = vld [vmem:[%s182 + $0x50] sm:$0xff]
      %v207 = vld [vmem:[%s182 + $0x58] sm:$0xff]
      %v208 = vld [vmem:[%s182 + $0x60] sm:$0xff]
      %v209 = vld [vmem:[%s182 + $0x68] sm:$0xff]
      %v210 = vld [vmem:[%s182 + $0x70] sm:$0xff]
      %v211 = vld [vmem:[%s182 + $0x78] sm:$0xff]
      %v212 = vld [vmem:[%s1] sm:$0x1]
      %v213 = vlaneseq
      %v214 = vshrl.u32 %v213, 7
      %v215 = vsub.s32 0, %v214
      %v216 = vrot.slane %v212, %v215
      %v217 = vmul.f32 %v196, %v216
      %v218 = vmul.f32 %v197, %v216
      %v219 = vmul.f32 %v198, %v216
      %v220 = vmul.f32 %v199, %v216
      %v221 = vmul.f32 %v200, %v216
      %v222 = vmul.f32 %v201, %v216
      %v223 = vmul.f32 %v202, %v216
      %v224 = vmul.f32 %v203, %v216
      %v225 = vmul.f32 %v204, %v216
      %v226 = vmul.f32 %v205, %v216
      %v227 = vmul.f32 %v206, %v216
      %v228 = vmul.f32 %v207, %v216
      %v229 = vmul.f32 %v208, %v216
      %v230 = vmul.f32 %v209, %v216
      %v231 = vmul.f32 %v210, %v216
      %v232 = vmul.f32 %v211, %v216
      %v233 = vld [vmem:[%s1 + $0x1] sm:$0x1]
      %v234 = vlaneseq
      %v235 = vshrl.u32 %v234, 7
      %v236 = vsub.s32 0, %v235
      %v237 = vrot.slane %v233, %v236
      %v238 = vadd.f32 %v217, %v237
      %v239 = vadd.f32 %v218, %v237
      %v240 = vadd.f32 %v219, %v237
      %v241 = vadd.f32 %v220, %v237
      %v242 = vadd.f32 %v221, %v237
      %v243 = vadd.f32 %v222, %v237
      %v244 = vadd.f32 %v223, %v237
      %v245 = vadd.f32 %v224, %v237
      %v246 = vadd.f32 %v225, %v237
      %v247 = vadd.f32 %v226, %v237
      %v248 = vadd.f32 %v227, %v237
      %v249 = vadd.f32 %v228, %v237
      %v250 = vadd.f32 %v229, %v237
      %v251 = vadd.f32 %v230, %v237
      %v252 = vadd.f32 %v231, %v237
      %v253 = vadd.f32 %v232, %v237
      %v254 = vld [vmem:[%s188] sm:$0xff]
      %v255 = vld [vmem:[%s188 + $0x8] sm:$0xff]
      %v256 = vld [vmem:[%s188 + $0x10] sm:$0xff]
      %v257 = vld [vmem:[%s188 + $0x18] sm:$0xff]
      %v258 = vld [vmem:[%s188 + $0x20] sm:$0xff]
      %v259 = vld [vmem:[%s188 + $0x28] sm:$0xff]
      %v260 = vld [vmem:[%s188 + $0x30] sm:$0xff]
      %v261 = vld [vmem:[%s188 + $0x38] sm:$0xff]
      %v262 = vld [vmem:[%s188 + $0x40] sm:$0xff]
      %v263 = vld [vmem:[%s188 + $0x48] sm:$0xff]
      %v264 = vld [vmem:[%s188 + $0x50] sm:$0xff]
      %v265 = vld [vmem:[%s188 + $0x58] sm:$0xff]
      %v266 = vld [vmem:[%s188 + $0x60] sm:$0xff]
      %v267 = vld [vmem:[%s188 + $0x68] sm:$0xff]
      %v268 = vld [vmem:[%s188 + $0x70] sm:$0xff]
      %v269 = vld [vmem:[%s188 + $0x78] sm:$0xff]
      %v270 = vadd.f32 %v238, %v254
      %v271 = vadd.f32 %v239, %v255
      %v272 = vadd.f32 %v240, %v256
      %v273 = vadd.f32 %v241, %v257
      %v274 = vadd.f32 %v242, %v258
      %v275 = vadd.f32 %v243, %v259
      %v276 = vadd.f32 %v244, %v260
      %v277 = vadd.f32 %v245, %v261
      %v278 = vadd.f32 %v246, %v262
      %v279 = vadd.f32 %v247, %v263
      %v280 = vadd.f32 %v248, %v264
      %v281 = vadd.f32 %v249, %v265
      %v282 = vadd.f32 %v250, %v266
      %v283 = vadd.f32 %v251, %v267
      %v284 = vadd.f32 %v252, %v268
      %v285 = vadd.f32 %v253, %v269
      %v286 = vmax.f32 %v270, 0.0
      %v287 = vmax.f32 %v271, 0.0
      %v288 = vmax.f32 %v272, 0.0
      %v289 = vmax.f32 %v273, 0.0
      %v290 = vmax.f32 %v274, 0.0
      %v291 = vmax.f32 %v275, 0.0
      %v292 = vmax.f32 %v276, 0.0
      %v293 = vmax.f32 %v277, 0.0
      %v294 = vmax.f32 %v278, 0.0
      %v295 = vmax.f32 %v279, 0.0
      %v296 = vmax.f32 %v280, 0.0
      %v297 = vmax.f32 %v281, 0.0
      %v298 = vmax.f32 %v282, 0.0
      %v299 = vmax.f32 %v283, 0.0
      %v300 = vmax.f32 %v284, 0.0
      %v301 = vmax.f32 %v285, 0.0
      %302 = vst [vmem:[%s194] sm:$0xff] %v286
      %303 = vst [vmem:[%s194 + $0x8] sm:$0xff] %v287
      %304 = vst [vmem:[%s194 + $0x10] sm:$0xff] %v288
      %305 = vst [vmem:[%s194 + $0x18] sm:$0xff] %v289
      %306 = vst [vmem:[%s194 + $0x20] sm:$0xff] %v290
      %307 = vst [vmem:[%s194 + $0x28] sm:$0xff] %v291
      %308 = vst [vmem:[%s194 + $0x30] sm:$0xff] %v292
      %309 = vst [vmem:[%s194 + $0x38] sm:$0xff] %v293
      %310 = vst [vmem:[%s194 + $0x40] sm:$0xff] %v294
      %311 = vst [vmem:[%s194 + $0x48] sm:$0xff] %v295
      %312 = vst [vmem:[%s194 + $0x50] sm:$0xff] %v296
      %313 = vst [vmem:[%s194 + $0x58] sm:$0xff] %v297
      %314 = vst [vmem:[%s194 + $0x60] sm:$0xff] %v298
      %315 = vst [vmem:[%s194 + $0x68] sm:$0xff] %v299
      %316 = vst [vmem:[%s194 + $0x70] sm:$0xff] %v300
      %317 = vst [vmem:[%s194 + $0x78] sm:$0xff] %v301
      %s318 = smul.u32 16, %s14
      %p319 = scmp.lt.s32.totalorder %s318, 63
      %s320 = scalar_select %p319, %s318, 63
      %s321 = smul.addr %s320, 8
      %s322 = scalar_lea.vmem %s3, %s321
      // Predicated region
      $region33: #{bottleneck_forward.7} parent=31 // pred_check
        %p323 = pneg %p105
      $region34: #{bottleneck_forward.7} parent=31 // pred_check_branch
        %325 = sbr.rel (%p323) target = $region36
      $region35: #{bottleneck_forward.7} parent=31 // pred_region
        %s326 = smul.u32 16, %s14
      $region36: #{bottleneck_forward.7} parent=31 // pred_fallthru
        _
    $region32: #{bottleneck_forward.7} parent=5 // pred_fallthru
      _
    %p327 = scmp.le.s32.totalorder 2, %s9
    // Predicated region
    $region37: #{bottleneck_forward.7} parent=5 // pred_check
      %p328 = pneg %p327
    $region38: #{bottleneck_forward.7} parent=5 // pred_check_branch
      %330 = sbr.rel (%p328) target = $region40
    $region39: #{bottleneck_forward.7} parent=5 // pred_region
      %s331 = ssub.s32 %s9, 2
      // Predicated region
      $region41: #{bottleneck_forward.7} parent=39 // pred_check
        %p332 = pneg %p111
      $region42: #{bottleneck_forward.7} parent=39 // pred_check_branch
        %334 = sbr.rel (%p332) target = $region44
      $region43: #{bottleneck_forward.7} parent=39 // pred_region
        %s335 = smul.u32 16, %s15
        %p336 = scmp.lt.s32.totalorder %s335, 63
        %s337 = scalar_select %p336, %s335, 63
        %s338 = smul.addr %s337, 8
        %s339 = scalar_lea.vmem %s3, %s338
      $region44: #{bottleneck_forward.7} parent=39 // pred_fallthru
        _
    $region40: #{bottleneck_forward.7} parent=5 // pred_fallthru
      _
  $region6: #{bottleneck_forward.7} parent=0 // loop_footer
    %s13 = sadd.s32 1, %s9
  $region7: #{bottleneck_forward.7} parent=0 // loop_footer_branch
    %8 = sbr.rel target = $region3
  $region8: #{bottleneck_forward.7} parent=0 // loop_exit
    _

// kernel: bottleneck_forward.5
$region0: #{bottleneck_forward.5}
  #allocation0 [shape = 'u32[]', space=smem, size = 0x4, offset = 0x4, fixed_abs, tag = 'smem constant byte address 0x4 - core index']
  #allocation1 [shape = 'u32[144,128]{1,0:T(1,128)}', space=vmem, size = 0x12000, scoped, tag = 'internal scratch']
  %s0 = inlined_call_operand.vmem [shape: f32[2,256,128], index: 0, kind: input, shape index: {}]
  %s1 = inlined_call_operand.vmem [shape: f32[2,128], index: 1, kind: input, shape index: {}]
  %s2 = inlined_call_operand.vmem [shape: f32[1152,128], index: 2, kind: input, shape index: {}]
  %s3 = inlined_call_operand.vmem [shape: f32[2,256,128], index: 3, kind: output, shape index: {0}]
  %s4 = inlined_call_operand.vmem [shape: f32[2,2,128], index: 4, kind: output, shape index: {1}]
  %5 = xla_tuple %s3, %s4
  %s6 = sld [smem:[#allocation0]]
  $region53: #{bottleneck_forward.5} parent=0
    _
  %s8 = ssub.s32 1, %s6
  %s9 = scalar_select 0, %s8, %s6
  loop: start=0, step=1, limit=4
  $region2: #{bottleneck_forward.5} parent=0 // loop_pre_header
    _
  $region3: #{bottleneck_forward.5} parent=0 // loop_header
    %s11 = sphi 0, %s15
    %p12 = scmp.ge.s32.totalorder %s11, 4
    %s21 = sphi 0, %s23
    %s24 = sphi 0, %s21
    %s25 = sphi 0, %s24
    %s41 = sphi 0, %s25
    %s45 = sphi 0, %s45
    %s47 = sphi 0, %s45
    %s48 = sphi 0, %s47
    %s62 = sphi 0, %s48
    %s66 = sphi 0, %s66
    %s68 = sphi 0, %s66
    %s69 = sphi 0, %s68
    %s83 = sphi 0, %s69
    %s89 = sphi 0, %s91
    %s92 = sphi 0, %s89
    %s93 = sphi 0, %s92
    %s109 = sphi 0, %s93
    %s115 = sphi 0, %s117
    %s118 = sphi 0, %s115
    %s119 = sphi 0, %s118
    %s135 = sphi 0, %s119
  $region4: #{bottleneck_forward.5} parent=0 // loop_header_branch
    %14 = sbr.rel (%p12) target = $region8
  $region5: #{bottleneck_forward.5} parent=0 // loop_body
    %s16 = ssub.s32 %s11, 1
    %s17 = ssub.s32 %s11, 2
    %s18 = sadd.s32 %s11, 1
    %s19 = ssub.s32 %s11, %s18
    %p20 = scmp.eq.s32.totalorder %s19, 0
    %s22 = sadd.s32 %s21, 1
    %s23 = scalar_select %p20, %s21, %s22
    %p26 = pneg %p20
    %p27 = scmp.eq.s32.totalorder %s11, 1
    %p28 = por %p26, %p27
    %p29 = scmp.ne.s32.totalorder %s21, %s24
    %p30 = scmp.eq.s32.totalorder %s11, 0
    %p31 = por %p29, %p30
    %p32 = scmp.ne.s32.totalorder %s21, %s24
    %p33 = scmp.eq.s32.totalorder %s16, 1
    %p34 = por %p32, %p33
    %p35 = scmp.ne.s32.totalorder %s24, %s25
    %p36 = scmp.eq.s32.totalorder %s16, 0
    %p37 = por %p35, %p36
    %p38 = scmp.ne.s32.totalorder %s24, %s25
    %p39 = scmp.eq.s32.totalorder %s17, 1
    %p40 = por %p38, %p39
    %p42 = scmp.ne.s32.totalorder %s25, %s41
    %p43 = scmp.eq.s32.totalorder %s17, 0
    %p44 = por %p42, %p43
    %s46 = sadd.s32 %s45, 1
    %p49 = scmp.eq.s32.totalorder %s11, 1
    %p50 = scmp.ne.s32.totalorder %s45, %s47
    %p51 = scmp.eq.s32.totalorder %s11, 0
    %p52 = por %p50, %p51
    %p53 = scmp.ne.s32.totalorder %s45, %s47
    %p54 = scmp.eq.s32.totalorder %s16, 1
    %p55 = por %p53, %p54
    %p56 = scmp.ne.s32.totalorder %s47, %s48
    %p57 = scmp.eq.s32.totalorder %s16, 0
    %p58 = por %p56, %p57
    %p59 = scmp.ne.s32.totalorder %s47, %s48
    %p60 = scmp.eq.s32.totalorder %s17, 1
    %p61 = por %p59, %p60
    %p63 = scmp.ne.s32.totalorder %s48, %s62
    %p64 = scmp.eq.s32.totalorder %s17, 0
    %p65 = por %p63, %p64
    %s67 = sadd.s32 %s66, 1
    %p70 = scmp.eq.s32.totalorder %s11, 1
    %p71 = scmp.ne.s32.totalorder %s66, %s68
    %p72 = scmp.eq.s32.totalorder %s11, 0
    %p73 = por %p71, %p72
    %p74 = scmp.ne.s32.totalorder %s66, %s68
    %p75 = scmp.eq.s32.totalorder %s16, 1
    %p76 = por %p74, %p75
    %p77 = scmp.ne.s32.totalorder %s68, %s69
    %p78 = scmp.eq.s32.totalorder %s16, 0
    %p79 = por %p77, %p78
    %p80 = scmp.ne.s32.totalorder %s68, %s69
    %p81 = scmp.eq.s32.totalorder %s17, 1
    %p82 = por %p80, %p81
    %p84 = scmp.ne.s32.totalorder %s69, %s83
    %p85 = scmp.eq.s32.totalorder %s17, 0
    %p86 = por %p84, %p85
    %s87 = ssub.s32 %s11, %s18
    %p88 = scmp.eq.s32.totalorder %s87, 0
    %s90 = sadd.s32 %s89, 1
    %s91 = scalar_select %p88, %s89, %s90
    %p94 = pneg %p88
    %p95 = scmp.eq.s32.totalorder %s11, 1
    %p96 = por %p94, %p95
    %p97 = scmp.ne.s32.totalorder %s89, %s92
    %p98 = scmp.eq.s32.totalorder %s11, 0
    %p99 = por %p97, %p98
    %p100 = scmp.ne.s32.totalorder %s89, %s92
    %p101 = scmp.eq.s32.totalorder %s16, 1
    %p102 = por %p100, %p101
    %p103 = scmp.ne.s32.totalorder %s92, %s93
    %p104 = scmp.eq.s32.totalorder %s16, 0
    %p105 = por %p103, %p104
    %p106 = scmp.ne.s32.totalorder %s92, %s93
    %p107 = scmp.eq.s32.totalorder %s17, 1
    %p108 = por %p106, %p107
    %p110 = scmp.ne.s32.totalorder %s93, %s109
    %p111 = scmp.eq.s32.totalorder %s17, 0
    %p112 = por %p110, %p111
    %s113 = ssub.s32 %s11, %s18
    %p114 = scmp.eq.s32.totalorder %s113, 0
    %s116 = sadd.s32 %s115, 1
    %s117 = scalar_select %p114, %s115, %s116
    %p120 = pneg %p114
    %p121 = scmp.eq.s32.totalorder %s11, 1
    %p122 = por %p120, %p121
    %p123 = scmp.ne.s32.totalorder %s115, %s118
    %p124 = scmp.eq.s32.totalorder %s11, 0
    %p125 = por %p123, %p124
    %p126 = scmp.ne.s32.totalorder %s115, %s118
    %p127 = scmp.eq.s32.totalorder %s16, 1
    %p128 = por %p126, %p127
    %p129 = scmp.ne.s32.totalorder %s118, %s119
    %p130 = scmp.eq.s32.totalorder %s16, 0
    %p131 = por %p129, %p130
    %p132 = scmp.ne.s32.totalorder %s118, %s119
    %p133 = scmp.eq.s32.totalorder %s17, 1
    %p134 = por %p132, %p133
    %p136 = scmp.ne.s32.totalorder %s119, %s135
    %p137 = scmp.eq.s32.totalorder %s17, 0
    %p138 = por %p136, %p137
    %p139 = scmp.le.s32.totalorder 1, %s11
    %p140 = scmp.lt.s32.totalorder %s11, 3
    %p141 = pnand %p139, %p140
    %p142 = pneg %p141
    // Predicated region
    $region9: #{bottleneck_forward.5} parent=5 // pred_check
      _
    $region10: #{bottleneck_forward.5} parent=5 // pred_check_branch
      %144 = sbr.rel (%p141) target = $region12
    $region11: #{bottleneck_forward.5} parent=5 // pred_region
      %s145 = ssub.s32 %s11, 1
      // Predicated region
      $region13: #{bottleneck_forward.5} parent=11 // pred_check
        %p146 = pneg %p58
      $region14: #{bottleneck_forward.5} parent=11 // pred_check_branch
        %148 = sbr.rel (%p146) target = $region16
      $region15: #{bottleneck_forward.5} parent=11 // pred_region
        _
      $region16: #{bottleneck_forward.5} parent=11 // pred_fallthru
        _
      // Predicated region
      $region17: #{bottleneck_forward.5} parent=11 // pred_check
        %p149 = pneg %p79
      $region18: #{bottleneck_forward.5} parent=11 // pred_check_branch
        %151 = sbr.rel (%p149) target = $region20
      $region19: #{bottleneck_forward.5} parent=11 // pred_region
        _
      $region20: #{bottleneck_forward.5} parent=11 // pred_fallthru
        _
    $region12: #{bottleneck_forward.5} parent=5 // pred_fallthru
      _
    %p152 = scmp.lt.s32.totalorder %s11, 2
    // Predicated region
    $region21: #{bottleneck_forward.5} parent=5 // pred_check
      %p153 = pneg %p152
    $region22: #{bottleneck_forward.5} parent=5 // pred_check_branch
      %155 = sbr.rel (%p153) target = $region24
    $region23: #{bottleneck_forward.5} parent=5 // pred_region
      // Predicated region
      $region25: #{bottleneck_forward.5} parent=23 // pred_check
        %p156 = pneg %p31
      $region26: #{bottleneck_forward.5} parent=23 // pred_check_branch
        %158 = sbr.rel (%p156) target = $region28
      $region27: #{bottleneck_forward.5} parent=23 // pred_region
        %p159 = scmp.lt.s32.totalorder %s11, 1
        %s160 = scalar_select %p159, %s11, 1
        %s161 = smul.addr %s160, 32
        %s162 = smul.addr %s161, 8
        %s163 = scalar_lea.vmem %s0, %s162
      $region28: #{bottleneck_forward.5} parent=23 // pred_fallthru
        _
    $region24: #{bottleneck_forward.5} parent=5 // pred_fallthru
      _
    %p164 = scmp.le.s32.totalorder 1, %s11
    %p165 = scmp.lt.s32.totalorder %s11, 3
    %p166 = pnand %p164, %p165
    %p167 = pneg %p166
    // Predicated region
    $region29: #{bottleneck_forward.5} parent=5 // pred_check
      _
    $region30: #{bottleneck_forward.5} parent=5 // pred_check_branch
      %169 = sbr.rel (%p166) target = $region32
    $region31: #{bottleneck_forward.5} parent=5 // pred_region
      %s170 = ssub.s32 %s11, 1
      %p171 = scmp.lt.s32.totalorder %s16, 1
      %s172 = scalar_select %p171, %s16, 1
      %s173 = smul.addr %s172, 32
      %s174 = smul.addr %s173, 8
      %s175 = scalar_lea.vmem %s0, %s174
      %p176 = pneg %p37
      %p177 = pneg %p34
      %p178 = pneg %p58
      %p179 = pneg %p55
      %p180 = pneg %p79
      %p181 = pneg %p76
      %p182 = pneg %p105
      %p183 = pneg %p102
      %p184 = scmp.lt.s32.totalorder %s16, 1
      %s185 = scalar_select %p184, %s16, 1
      %s186 = smul.addr %s185, 32
      %s187 = smul.addr %s186, 8
      %s188 = scalar_lea.vmem %s3, %s187
      %p189 = pneg %p131
      %p190 = pneg %p128
      %p191 = scmp.lt.s32.totalorder %s16, 1
      %s192 = scalar_select %p191, %s16, 1
      %s193 = smul.addr %s192, 2
      %s194 = scalar_lea.vmem %s4, %s193
      %p195 = scmp.lt.s32.totalorder %s16, 1
      %s196 = scalar_select %p195, %s16, 1
      %s197 = smul.addr %s196, 32
      %s198 = smul.addr %s197, 8
      %s199 = scalar_lea.vmem %s0, %s198
      %p200 = scmp.lt.s32.totalorder %s16, 1
      %s201 = scalar_select %p200, %s16, 1
      %s202 = smul.addr %s201, 32
      %s203 = smul.addr %s202, 8
      %s204 = scalar_lea.vmem %s3, %s203
      %p205 = scmp.lt.s32.totalorder %s16, 1
      %s206 = scalar_select %p205, %s16, 1
      %s207 = smul.addr %s206, 2
      %s208 = scalar_lea.vmem %s4, %s207
      %v209 = vld [vmem:[%s199] sm:$0xff]
      %v210 = vld [vmem:[%s199 + $0x8] sm:$0xff]
      %v211 = vld [vmem:[%s199 + $0x10] sm:$0xff]
      %v212 = vld [vmem:[%s199 + $0x18] sm:$0xff]
      %v213 = vld [vmem:[%s199 + $0x20] sm:$0xff]
      %v214 = vld [vmem:[%s199 + $0x28] sm:$0xff]
      %v215 = vld [vmem:[%s199 + $0x30] sm:$0xff]
      %v216 = vld [vmem:[%s199 + $0x38] sm:$0xff]
      %v217 = vld [vmem:[%s199 + $0x40] sm:$0xff]
      %v218 = vld [vmem:[%s199 + $0x48] sm:$0xff]
      %v219 = vld [vmem:[%s199 + $0x50] sm:$0xff]
      %v220 = vld [vmem:[%s199 + $0x58] sm:$0xff]
      %v221 = vld [vmem:[%s199 + $0x60] sm:$0xff]
      %v222 = vld [vmem:[%s199 + $0x68] sm:$0xff]
      %v223 = vld [vmem:[%s199 + $0x70] sm:$0xff]
      %v224 = vld [vmem:[%s199 + $0x78] sm:$0xff]
      %v225 = vld [vmem:[%s199 + $0x80] sm:$0xff]
      %v226 = vld [vmem:[%s199 + $0x88] sm:$0xff]
      %v227 = vld [vmem:[%s199 + $0x90] sm:$0xff]
      %v228 = vld [vmem:[%s199 + $0x98] sm:$0xff]
      %v229 = vld [vmem:[%s199 + $0xa0] sm:$0xff]
      %v230 = vld [vmem:[%s199 + $0xa8] sm:$0xff]
      %v231 = vld [vmem:[%s199 + $0xb0] sm:$0xff]
      %v232 = vld [vmem:[%s199 + $0xb8] sm:$0xff]
      %v233 = vld [vmem:[%s199 + $0xc0] sm:$0xff]
      %v234 = vld [vmem:[%s199 + $0xc8] sm:$0xff]
      %v235 = vld [vmem:[%s199 + $0xd0] sm:$0xff]
      %v236 = vld [vmem:[%s199 + $0xd8] sm:$0xff]
      %v237 = vld [vmem:[%s199 + $0xe0] sm:$0xff]
      %v238 = vld [vmem:[%s199 + $0xe8] sm:$0xff]
      %v239 = vld [vmem:[%s199 + $0xf0] sm:$0xff]
      %v240 = vld [vmem:[%s199 + $0xf8] sm:$0xff]
      %v241 = vld [vmem:[%s1] sm:$0x1]
      %v242 = vlaneseq
      %v243 = vshrl.u32 %v242, 7
      %v244 = vsub.s32 0, %v243
      %v245 = vrot.slane %v241, %v244
      %v246 = vmul.f32 %v209, %v245
      %v247 = vmul.f32 %v210, %v245
      %v248 = vmul.f32 %v211, %v245
      %v249 = vmul.f32 %v212, %v245
      %v250 = vmul.f32 %v213, %v245
      %v251 = vmul.f32 %v214, %v245
      %v252 = vmul.f32 %v215, %v245
      %v253 = vmul.f32 %v216, %v245
      %v254 = vmul.f32 %v217, %v245
      %v255 = vmul.f32 %v218, %v245
      %v256 = vmul.f32 %v219, %v245
      %v257 = vmul.f32 %v220, %v245
      %v258 = vmul.f32 %v221, %v245
      %v259 = vmul.f32 %v222, %v245
      %v260 = vmul.f32 %v223, %v245
      %v261 = vmul.f32 %v224, %v245
      %v262 = vmul.f32 %v225, %v245
      %v263 = vmul.f32 %v226, %v245
      %v264 = vmul.f32 %v227, %v245
      %v265 = vmul.f32 %v228, %v245
      %v266 = vmul.f32 %v229, %v245
      %v267 = vmul.f32 %v230, %v245
      %v268 = vmul.f32 %v231, %v245
      %v269 = vmul.f32 %v232, %v245
      %v270 = vmul.f32 %v233, %v245
      %v271 = vmul.f32 %v234, %v245
      %v272 = vmul.f32 %v235, %v245
      %v273 = vmul.f32 %v236, %v245
      %v274 = vmul.f32 %v237, %v245
      %v275 = vmul.f32 %v238, %v245
      %v276 = vmul.f32 %v239, %v245
      %v277 = vmul.f32 %v240, %v245
      %v278 = vld [vmem:[%s1 + $0x1] sm:$0x1]
      %v279 = vlaneseq
      %v280 = vshrl.u32 %v279, 7
      %v281 = vsub.s32 0, %v280
      %v282 = vrot.slane %v278, %v281
      %v283 = vadd.f32 %v246, %v282
      %v284 = vadd.f32 %v247, %v282
      %v285 = vadd.f32 %v248, %v282
      %v286 = vadd.f32 %v249, %v282
      %v287 = vadd.f32 %v250, %v282
      %v288 = vadd.f32 %v251, %v282
      %v289 = vadd.f32 %v252, %v282
      %v290 = vadd.f32 %v253, %v282
      %v291 = vadd.f32 %v254, %v282
      %v292 = vadd.f32 %v255, %v282
      %v293 = vadd.f32 %v256, %v282
      %v294 = vadd.f32 %v257, %v282
      %v295 = vadd.f32 %v258, %v282
      %v296 = vadd.f32 %v259, %v282
      %v297 = vadd.f32 %v260, %v282
      %v298 = vadd.f32 %v261, %v282
      %v299 = vadd.f32 %v262, %v282
      %v300 = vadd.f32 %v263, %v282
      %v301 = vadd.f32 %v264, %v282
      %v302 = vadd.f32 %v265, %v282
      %v303 = vadd.f32 %v266, %v282
      %v304 = vadd.f32 %v267, %v282
      %v305 = vadd.f32 %v268, %v282
      %v306 = vadd.f32 %v269, %v282
      %v307 = vadd.f32 %v270, %v282
      %v308 = vadd.f32 %v271, %v282
      %v309 = vadd.f32 %v272, %v282
      %v310 = vadd.f32 %v273, %v282
      %v311 = vadd.f32 %v274, %v282
      %v312 = vadd.f32 %v275, %v282
      %v313 = vadd.f32 %v276, %v282
      %v314 = vadd.f32 %v277, %v282
      %v315 = vmax.f32 %v283, 0.0
      %v316 = vmax.f32 %v284, 0.0
      %v317 = vmax.f32 %v285, 0.0
      %v318 = vmax.f32 %v286, 0.0
      %v319 = vmax.f32 %v287, 0.0
      %v320 = vmax.f32 %v288, 0.0
      %v321 = vmax.f32 %v289, 0.0
      %v322 = vmax.f32 %v290, 0.0
      %v323 = vmax.f32 %v291, 0.0
      %v324 = vmax.f32 %v292, 0.0
      %v325 = vmax.f32 %v293, 0.0
      %v326 = vmax.f32 %v294, 0.0
      %v327 = vmax.f32 %v295, 0.0
      %v328 = vmax.f32 %v296, 0.0
      %v329 = vmax.f32 %v297, 0.0
      %v330 = vmax.f32 %v298, 0.0
      %v331 = vmax.f32 %v299, 0.0
      %v332 = vmax.f32 %v300, 0.0
      %v333 = vmax.f32 %v301, 0.0
      %v334 = vmax.f32 %v302, 0.0
      %v335 = vmax.f32 %v303, 0.0
      %v336 = vmax.f32 %v304, 0.0
      %v337 = vmax.f32 %v305, 0.0
      %v338 = vmax.f32 %v306, 0.0
      %v339 = vmax.f32 %v307, 0.0
      %v340 = vmax.f32 %v308, 0.0
      %v341 = vmax.f32 %v309, 0.0
      %v342 = vmax.f32 %v310, 0.0
      %v343 = vmax.f32 %v311, 0.0
      %v344 = vmax.f32 %v312, 0.0
      %v345 = vmax.f32 %v313, 0.0
      %v346 = vmax.f32 %v314, 0.0
      %v347 = vlaneseq
      %v348 = vshrl.u32 %v347, 7
      %v349 = vadd.s32 %v348, 8
      %v350 = vadd.s32 %v348, 16
      %v351 = vadd.s32 %v348, 24
      %v352 = vadd.s32 %v348, 32
      %v353 = vadd.s32 %v348, 40
      %v354 = vadd.s32 %v348, 48
      %v355 = vadd.s32 %v348, 56
      %v356 = vadd.s32 %v348, 64
      %v357 = vadd.s32 %v348, 72
      %v358 = vadd.s32 %v348, 80
      %v359 = vadd.s32 %v348, 88
      %v360 = vadd.s32 %v348, 96
      %v361 = vadd.s32 %v348, 104
      %v362 = vadd.s32 %v348, 112
      %v363 = vadd.s32 %v348, 120
      %v364 = vadd.s32 %v348, 128
      %v365 = vadd.s32 %v348, 136
      %v366 = vadd.s32 %v348, 144
      %v367 = vadd.s32 %v348, 152
      %v368 = vadd.s32 %v348, 160
      %v369 = vadd.s32 %v348, 168
      %v370 = vadd.s32 %v348, 176
      %v371 = vadd.s32 %v348, 184
      %v372 = vadd.s32 %v348, 192
      %v373 = vadd.s32 %v348, 200
      %v374 = vadd.s32 %v348, 208
      %v375 = vadd.s32 %v348, 216
      %v376 = vadd.s32 %v348, 224
      %v377 = vadd.s32 %v348, 232
      %v378 = vadd.s32 %v348, 240
      %v379 = vadd.s32 %v348, 248
      %vm380 = vcmp.lt.s32.totalorder %v348, 0
      %v381 = vsub.s32 0, %v348
      %v382 = vsel %vm380, %v381, %v348
      %v383 = vshrl.u32 %v382, 4
      %v384 = vand.u32 %v382, 15
      %v385 = vsub.s32 0, %v384
      %v386 = vsel %vm380, %v385, %v384
      %vm387 = vcmp.lt.s32.totalorder %v349, 0
      %v388 = vsub.s32 0, %v349
      %v389 = vsel %vm387, %v388, %v349
      %v390 = vshrl.u32 %v389, 4
      %v391 = vand.u32 %v389, 15
      %v392 = vsub.s32 0, %v391
      %v393 = vsel %vm387, %v392, %v391
      %vm394 = vcmp.lt.s32.totalorder %v350, 0
      %v395 = vsub.s32 0, %v350
      %v396 = vsel %vm394, %v395, %v350
      %v397 = vshrl.u32 %v396, 4
      %v398 = vand.u32 %v396, 15
      %v399 = vsub.s32 0, %v398
      %v400 = vsel %vm394, %v399, %v398
      %vm401 = vcmp.lt.s32.totalorder %v351, 0
      %v402 = vsub.s32 0, %v351
      %v403 = vsel %vm401, %v402, %v351
      %v404 = vshrl.u32 %v403, 4
      %v405 = vand.u32 %v403, 15
      %v406 = vsub.s32 0, %v405
      %v407 = vsel %vm401, %v406, %v405
      %vm408 = vcmp.lt.s32.totalorder %v352, 0
      %v409 = vsub.s32 0, %v352
      %v410 = vsel %vm408, %v409, %v352
      %v411 = vshrl.u32 %v410, 4
      %v412 = vand.u32 %v410, 15
      %v413 = vsub.s32 0, %v412
      %v414 = vsel %vm408, %v413, %v412
      %vm415 = vcmp.lt.s32.totalorder %v353, 0
      %v416 = vsub.s32 0, %v353
      %v417 = vsel %vm415, %v416, %v353
      %v418 = vshrl.u32 %v417, 4
      %v419 = vand.u32 %v417, 15
      %v420 = vsub.s32 0, %v419
      %v421 = vsel %vm415, %v420, %v419
      %vm422 = vcmp.lt.s32.totalorder %v354, 0
      %v423 = vsub.s32 0, %v354
      %v424 = vsel %vm422, %v423, %v354
      %v425 = vshrl.u32 %v424, 4
      %v426 = vand.u32 %v424, 15
      %v427 = vsub.s32 0, %v426
      %v428 = vsel %vm422, %v427, %v426
      %vm429 = vcmp.lt.s32.totalorder %v355, 0
      %v430 = vsub.s32 0, %v355
      %v431 = vsel %vm429, %v430, %v355
      %v432 = vshrl.u32 %v431, 4
      %v433 = vand.u32 %v431, 15
      %v434 = vsub.s32 0, %v433
      %v435 = vsel %vm429, %v434, %v433
      %vm436 = vcmp.lt.s32.totalorder %v356, 0
      %v437 = vsub.s32 0, %v356
      %v438 = vsel %vm436, %v437, %v356
      %v439 = vshrl.u32 %v438, 4
      %v440 = vand.u32 %v438, 15
      %v441 = vsub.s32 0, %v440
      %v442 = vsel %vm436, %v441, %v440
      %vm443 = vcmp.lt.s32.totalorder %v357, 0
      %v444 = vsub.s32 0, %v357
      %v445 = vsel %vm443, %v444, %v357
      %v446 = vshrl.u32 %v445, 4
      %v447 = vand.u32 %v445, 15
      %v448 = vsub.s32 0, %v447
      %v449 = vsel %vm443, %v448, %v447
      %vm450 = vcmp.lt.s32.totalorder %v358, 0
      %v451 = vsub.s32 0, %v358
      %v452 = vsel %vm450, %v451, %v358
      %v453 = vshrl.u32 %v452, 4
      %v454 = vand.u32 %v452, 15
      %v455 = vsub.s32 0, %v454
      %v456 = vsel %vm450, %v455, %v454
      %vm457 = vcmp.lt.s32.totalorder %v359, 0
      %v458 = vsub.s32 0, %v359
      %v459 = vsel %vm457, %v458, %v359
      %v460 = vshrl.u32 %v459, 4
      %v461 = vand.u32 %v459, 15
      %v462 = vsub.s32 0, %v461
      %v463 = vsel %vm457, %v462, %v461
      %vm464 = vcmp.lt.s32.totalorder %v360, 0
      %v465 = vsub.s32 0, %v360
      %v466 = vsel %vm464, %v465, %v360
      %v467 = vshrl.u32 %v466, 4
      %v468 = vand.u32 %v466, 15
      %v469 = vsub.s32 0, %v468
      %v470 = vsel %vm464, %v469, %v468
      %vm471 = vcmp.lt.s32.totalorder %v361, 0
      %v472 = vsub.s32 0, %v361
      %v473 = vsel %vm471, %v472, %v361
      %v474 = vshrl.u32 %v473, 4
      %v475 = vand.u32 %v473, 15
      %v476 = vsub.s32 0, %v475
      %v477 = vsel %vm471, %v476, %v475
      %vm478 = vcmp.lt.s32.totalorder %v362, 0
      %v479 = vsub.s32 0, %v362
      %v480 = vsel %vm478, %v479, %v362
      %v481 = vshrl.u32 %v480, 4
      %v482 = vand.u32 %v480, 15
      %v483 = vsub.s32 0, %v482
      %v484 = vsel %vm478, %v483, %v482
      %vm485 = vcmp.lt.s32.totalorder %v363, 0
      %v486 = vsub.s32 0, %v363
      %v487 = vsel %vm485, %v486, %v363
      %v488 = vshrl.u32 %v487, 4
      %v489 = vand.u32 %v487, 15
      %v490 = vsub.s32 0, %v489
      %v491 = vsel %vm485, %v490, %v489
      %vm492 = vcmp.lt.s32.totalorder %v364, 0
      %v493 = vsub.s32 0, %v364
      %v494 = vsel %vm492, %v493, %v364
      %v495 = vshrl.u32 %v494, 4
      %v496 = vand.u32 %v494, 15
      %v497 = vsub.s32 0, %v496
      %v498 = vsel %vm492, %v497, %v496
      %vm499 = vcmp.lt.s32.totalorder %v365, 0
      %v500 = vsub.s32 0, %v365
      %v501 = vsel %vm499, %v500, %v365
      %v502 = vshrl.u32 %v501, 4
      %v503 = vand.u32 %v501, 15
      %v504 = vsub.s32 0, %v503
      %v505 = vsel %vm499, %v504, %v503
      %vm506 = vcmp.lt.s32.totalorder %v366, 0
      %v507 = vsub.s32 0, %v366
      %v508 = vsel %vm506, %v507, %v366
      %v509 = vshrl.u32 %v508, 4
      %v510 = vand.u32 %v508, 15
      %v511 = vsub.s32 0, %v510
      %v512 = vsel %vm506, %v511, %v510
      %vm513 = vcmp.lt.s32.totalorder %v367, 0
      %v514 = vsub.s32 0, %v367
      %v515 = vsel %vm513, %v514, %v367
      %v516 = vshrl.u32 %v515, 4
      %v517 = vand.u32 %v515, 15
      %v518 = vsub.s32 0, %v517
      %v519 = vsel %vm513, %v518, %v517
      %vm520 = vcmp.lt.s32.totalorder %v368, 0
      %v521 = vsub.s32 0, %v368
      %v522 = vsel %vm520, %v521, %v368
      %v523 = vshrl.u32 %v522, 4
      %v524 = vand.u32 %v522, 15
      %v525 = vsub.s32 0, %v524
      %v526 = vsel %vm520, %v525, %v524
      %vm527 = vcmp.lt.s32.totalorder %v369, 0
      %v528 = vsub.s32 0, %v369
      %v529 = vsel %vm527, %v528, %v369
      %v530 = vshrl.u32 %v529, 4
      %v531 = vand.u32 %v529, 15
      %v532 = vsub.s32 0, %v531
      %v533 = vsel %vm527, %v532, %v531
      %vm534 = vcmp.lt.s32.totalorder %v370, 0
      %v535 = vsub.s32 0, %v370
      %v536 = vsel %vm534, %v535, %v370
      %v537 = vshrl.u32 %v536, 4
      %v538 = vand.u32 %v536, 15
      %v539 = vsub.s32 0, %v538
      %v540 = vsel %vm534, %v539, %v538
      %vm541 = vcmp.lt.s32.totalorder %v371, 0
      %v542 = vsub.s32 0, %v371
      %v543 = vsel %vm541, %v542, %v371
      %v544 = vshrl.u32 %v543, 4
      %v545 = vand.u32 %v543, 15
      %v546 = vsub.s32 0, %v545
      %v547 = vsel %vm541, %v546, %v545
      %vm548 = vcmp.lt.s32.totalorder %v372, 0
      %v549 = vsub.s32 0, %v372
      %v550 = vsel %vm548, %v549, %v372
      %v551 = vshrl.u32 %v550, 4
      %v552 = vand.u32 %v550, 15
      %v553 = vsub.s32 0, %v552
      %v554 = vsel %vm548, %v553, %v552
      %vm555 = vcmp.lt.s32.totalorder %v373, 0
      %v556 = vsub.s32 0, %v373
      %v557 = vsel %vm555, %v556, %v373
      %v558 = vshrl.u32 %v557, 4
      %v559 = vand.u32 %v557, 15
      %v560 = vsub.s32 0, %v559
      %v561 = vsel %vm555, %v560, %v559
      %vm562 = vcmp.lt.s32.totalorder %v374, 0
      %v563 = vsub.s32 0, %v374
      %v564 = vsel %vm562, %v563, %v374
      %v565 = vshrl.u32 %v564, 4
      %v566 = vand.u32 %v564, 15
      %v567 = vsub.s32 0, %v566
      %v568 = vsel %vm562, %v567, %v566
      %vm569 = vcmp.lt.s32.totalorder %v375, 0
      %v570 = vsub.s32 0, %v375
      %v571 = vsel %vm569, %v570, %v375
      %v572 = vshrl.u32 %v571, 4
      %v573 = vand.u32 %v571, 15
      %v574 = vsub.s32 0, %v573
      %v575 = vsel %vm569, %v574, %v573
      %vm576 = vcmp.lt.s32.totalorder %v376, 0
      %v577 = vsub.s32 0, %v376
      %v578 = vsel %vm576, %v577, %v376
      %v579 = vshrl.u32 %v578, 4
      %v580 = vand.u32 %v578, 15
      %v581 = vsub.s32 0, %v580
      %v582 = vsel %vm576, %v581, %v580
      %vm583 = vcmp.lt.s32.totalorder %v377, 0
      %v584 = vsub.s32 0, %v377
      %v585 = vsel %vm583, %v584, %v377
      %v586 = vshrl.u32 %v585, 4
      %v587 = vand.u32 %v585, 15
      %v588 = vsub.s32 0, %v587
      %v589 = vsel %vm583, %v588, %v587
      %vm590 = vcmp.lt.s32.totalorder %v378, 0
      %v591 = vsub.s32 0, %v378
      %v592 = vsel %vm590, %v591, %v378
      %v593 = vshrl.u32 %v592, 4
      %v594 = vand.u32 %v592, 15
      %v595 = vsub.s32 0, %v594
      %v596 = vsel %vm590, %v595, %v594
      %vm597 = vcmp.lt.s32.totalorder %v379, 0
      %v598 = vsub.s32 0, %v379
      %v599 = vsel %vm597, %v598, %v379
      %v600 = vshrl.u32 %v599, 4
      %v601 = vand.u32 %v599, 15
      %v602 = vsub.s32 0, %v601
      %v603 = vsel %vm597, %v602, %v601
      %vm604 = vcmp.ne.s32.totalorder %v386, 0
      %vm605 = vcmp.ne.s32.totalorder %v393, 0
      %vm606 = vcmp.ne.s32.totalorder %v400, 0
      %vm607 = vcmp.ne.s32.totalorder %v407, 0
      %vm608 = vcmp.ne.s32.totalorder %v414, 0
      %vm609 = vcmp.ne.s32.totalorder %v421, 0
      %vm610 = vcmp.ne.s32.totalorder %v428, 0
      %vm611 = vcmp.ne.s32.totalorder %v435, 0
      %vm612 = vcmp.ne.s32.totalorder %v442, 0
      %vm613 = vcmp.ne.s32.totalorder %v449, 0
      %vm614 = vcmp.ne.s32.totalorder %v456, 0
      %vm615 = vcmp.ne.s32.totalorder %v463, 0
      %vm616 = vcmp.ne.s32.totalorder %v470, 0
      %vm617 = vcmp.ne.s32.totalorder %v477, 0
      %vm618 = vcmp.ne.s32.totalorder %v484, 0
      %vm619 = vcmp.ne.s32.totalorder %v491, 0
      %vm620 = vcmp.ne.s32.totalorder %v498, 0
      %vm621 = vcmp.ne.s32.totalorder %v505, 0
      %vm622 = vcmp.ne.s32.totalorder %v512, 0
      %vm623 = vcmp.ne.s32.totalorder %v519, 0
      %vm624 = vcmp.ne.s32.totalorder %v526, 0
      %vm625 = vcmp.ne.s32.totalorder %v533, 0
      %vm626 = vcmp.ne.s32.totalorder %v540, 0
      %vm627 = vcmp.ne.s32.totalorder %v547, 0
      %vm628 = vcmp.ne.s32.totalorder %v554, 0
      %vm629 = vcmp.ne.s32.totalorder %v561, 0
      %vm630 = vcmp.ne.s32.totalorder %v568, 0
      %vm631 = vcmp.ne.s32.totalorder %v575, 0
      %vm632 = vcmp.ne.s32.totalorder %v582, 0
      %vm633 = vcmp.ne.s32.totalorder %v589, 0
      %vm634 = vcmp.ne.s32.totalorder %v596, 0
      %vm635 = vcmp.ne.s32.totalorder %v603, 0
      %vm636 = vcmp.lt.s32.totalorder %v386, 0
      %vm637 = vcmp.lt.s32.totalorder %v393, 0
      %vm638 = vcmp.lt.s32.totalorder %v400, 0
      %vm639 = vcmp.lt.s32.totalorder %v407, 0
      %vm640 = vcmp.lt.s32.totalorder %v414, 0
      %vm641 = vcmp.lt.s32.totalorder %v421, 0
      %vm642 = vcmp.lt.s32.totalorder %v428, 0
      %vm643 = vcmp.lt.s32.totalorder %v435, 0
      %vm644 = vcmp.lt.s32.totalorder %v442, 0
      %vm645 = vcmp.lt.s32.totalorder %v449, 0
      %vm646 = vcmp.lt.s32.totalorder %v456, 0
      %vm647 = vcmp.lt.s32.totalorder %v463, 0
      %vm648 = vcmp.lt.s32.totalorder %v470, 0
      %vm649 = vcmp.lt.s32.totalorder %v477, 0
      %vm650 = vcmp.lt.s32.totalorder %v484, 0
      %vm651 = vcmp.lt.s32.totalorder %v491, 0
      %vm652 = vcmp.lt.s32.totalorder %v498, 0
      %vm653 = vcmp.lt.s32.totalorder %v505, 0
      %vm654 = vcmp.lt.s32.totalorder %v512, 0
      %vm655 = vcmp.lt.s32.totalorder %v519, 0
      %vm656 = vcmp.lt.s32.totalorder %v526, 0
      %vm657 = vcmp.lt.s32.totalorder %v533, 0
      %vm658 = vcmp.lt.s32.totalorder %v540, 0
      %vm659 = vcmp.lt.s32.totalorder %v547, 0
      %vm660 = vcmp.lt.s32.totalorder %v554, 0
      %vm661 = vcmp.lt.s32.totalorder %v561, 0
      %vm662 = vcmp.lt.s32.totalorder %v568, 0
      %vm663 = vcmp.lt.s32.totalorder %v575, 0
      %vm664 = vcmp.lt.s32.totalorder %v582, 0
      %vm665 = vcmp.lt.s32.totalorder %v589, 0
      %vm666 = vcmp.lt.s32.totalorder %v596, 0
      %vm667 = vcmp.lt.s32.totalorder %v603, 0
      %vm668 = vmand %vm636, %vm604
      %vm669 = vmand %vm637, %vm605
      %vm670 = vmand %vm638, %vm606
      %vm671 = vmand %vm639, %vm607
      %vm672 = vmand %vm640, %vm608
      %vm673 = vmand %vm641, %vm609
      %vm674 = vmand %vm642, %vm610
      %vm675 = vmand %vm643, %vm611
      %vm676 = vmand %vm644, %vm612
      %vm677 = vmand %vm645, %vm613
      %vm678 = vmand %vm646, %vm614
      %vm679 = vmand %vm647, %vm615
      %vm680 = vmand %vm648, %vm616
      %vm681 = vmand %vm649, %vm617
      %vm682 = vmand %vm650, %vm618
      %vm683 = vmand %vm651, %vm619
      %vm684 = vmand %vm652, %vm620
      %vm685 = vmand %vm653, %vm621
      %vm686 = vmand %vm654, %vm622
      %vm687 = vmand %vm655, %vm623
      %vm688 = vmand %vm656, %vm624
      %vm689 = vmand %vm657, %vm625
      %vm690 = vmand %vm658, %vm626
      %vm691 = vmand %vm659, %vm627
      %vm692 = vmand %vm660, %vm628
      %vm693 = vmand %vm661, %vm629
      %vm694 = vmand %vm662, %vm630
      %vm695 = vmand %vm663, %vm631
      %vm696 = vmand %vm664, %vm632
      %vm697 = vmand %vm665, %vm633
      %vm698 = vmand %vm666, %vm634
      %vm699 = vmand %vm667, %vm635
      %v700 = vadd.s32 %v386, 16
      %v701 = vadd.s32 %v393, 16
      %v702 = vadd.s32 %v400, 16
      %v703 = vadd.s32 %v407, 16
      %v704 = vadd.s32 %v414, 16
      %v705 = vadd.s32 %v421, 16
      %v706 = vadd.s32 %v428, 16
      %v707 = vadd.s32 %v435, 16
      %v708 = vadd.s32 %v442, 16
      %v709 = vadd.s32 %v449, 16
      %v710 = vadd.s32 %v456, 16
      %v711 = vadd.s32 %v463, 16
      %v712 = vadd.s32 %v470, 16
      %v713 = vadd.s32 %v477, 16
      %v714 = vadd.s32 %v484, 16
      %v715 = vadd.s32 %v491, 16
      %v716 = vadd.s32 %v498, 16
      %v717 = vadd.s32 %v505, 16
      %v718 = vadd.s32 %v512, 16
      %v719 = vadd.s32 %v519, 16
      %v720 = vadd.s32 %v526, 16
      %v721 = vadd.s32 %v533, 16
      %v722 = vadd.s32 %v540, 16
      %v723 = vadd.s32 %v547, 16
      %v724 = vadd.s32 %v554, 16
      %v725 = vadd.s32 %v561, 16
      %v726 = vadd.s32 %v568, 16
      %v727 = vadd.s32 %v575, 16
      %v728 = vadd.s32 %v582, 16
      %v729 = vadd.s32 %v589, 16
      %v730 = vadd.s32 %v596, 16
      %v731 = vadd.s32 %v603, 16
      %v732 = vsel %vm668, %v700, %v386
      %v733 = vsel %vm669, %v701, %v393
      %v734 = vsel %vm670, %v702, %v400
      %v735 = vsel %vm671, %v703, %v407
      %v736 = vsel %vm672, %v704, %v414
      %v737 = vsel %vm673, %v705, %v421
      %v738 = vsel %vm674, %v706, %v428
      %v739 = vsel %vm675, %v707, %v435
      %v740 = vsel %vm676, %v708, %v442
      %v741 = vsel %vm677, %v709, %v449
      %v742 = vsel %vm678, %v710, %v456
      %v743 = vsel %vm679, %v711, %v463
      %v744 = vsel %vm680, %v712, %v470
      %v745 = vsel %vm681, %v713, %v477
      %v746 = vsel %vm682, %v714, %v484
      %v747 = vsel %vm683, %v715, %v491
      %v748 = vsel %vm684, %v716, %v498
      %v749 = vsel %vm685, %v717, %v505
      %v750 = vsel %vm686, %v718, %v512
      %v751 = vsel %vm687, %v719, %v519
      %v752 = vsel %vm688, %v720, %v526
      %v753 = vsel %vm689, %v721, %v533
      %v754 = vsel %vm690, %v722, %v540
      %v755 = vsel %vm691, %v723, %v547
      %v756 = vsel %vm692, %v724, %v554
      %v757 = vsel %vm693, %v725, %v561
      %v758 = vsel %vm694, %v726, %v568
      %v759 = vsel %vm695, %v727, %v575
      %v760 = vsel %vm696, %v728, %v582
      %v761 = vsel %vm697, %v729, %v589
      %v762 = vsel %vm698, %v730, %v596
      %v763 = vsel %vm699, %v731, %v603
      %vm764 = vcmp.eq.s32.totalorder %v732, 15
      %vm765 = vcmp.eq.s32.totalorder %v733, 15
      %vm766 = vcmp.eq.s32.totalorder %v734, 15
      %vm767 = vcmp.eq.s32.totalorder %v735, 15
      %vm768 = vcmp.eq.s32.totalorder %v736, 15
      %vm769 = vcmp.eq.s32.totalorder %v737, 15
      %vm770 = vcmp.eq.s32.totalorder %v738, 15
      %vm771 = vcmp.eq.s32.totalorder %v739, 15
      %vm772 = vcmp.eq.s32.totalorder %v740, 15
      %vm773 = vcmp.eq.s32.totalorder %v741, 15
      %vm774 = vcmp.eq.s32.totalorder %v742, 15
      %vm775 = vcmp.eq.s32.totalorder %v743, 15
      %vm776 = vcmp.eq.s32.totalorder %v744, 15
      %vm777 = vcmp.eq.s32.totalorder %v745, 15
      %vm778 = vcmp.eq.s32.totalorder %v746, 15
      %vm779 = vcmp.eq.s32.totalorder %v747, 15
      %vm780 = vcmp.eq.s32.totalorder %v748, 15
      %vm781 = vcmp.eq.s32.totalorder %v749, 15
      %vm782 = vcmp.eq.s32.totalorder %v750, 15
      %vm783 = vcmp.eq.s32.totalorder %v751, 15
      %vm784 = vcmp.eq.s32.totalorder %v752, 15
      %vm785 = vcmp.eq.s32.totalorder %v753, 15
      %vm786 = vcmp.eq.s32.totalorder %v754, 15
      %vm787 = vcmp.eq.s32.totalorder %v755, 15
      %vm788 = vcmp.eq.s32.totalorder %v756, 15
      %vm789 = vcmp.eq.s32.totalorder %v757, 15
      %vm790 = vcmp.eq.s32.totalorder %v758, 15
      %vm791 = vcmp.eq.s32.totalorder %v759, 15
      %vm792 = vcmp.eq.s32.totalorder %v760, 15
      %vm793 = vcmp.eq.s32.totalorder %v761, 15
      %vm794 = vcmp.eq.s32.totalorder %v762, 15
      %vm795 = vcmp.eq.s32.totalorder %v763, 15
      %v796 = vsel %vm764, 1, 0
      %v797 = vsel %vm765, 1, 0
      %v798 = vsel %vm766, 1, 0
      %v799 = vsel %vm767, 1, 0
      %v800 = vsel %vm768, 1, 0
      %v801 = vsel %vm769, 1, 0
      %v802 = vsel %vm770, 1, 0
      %v803 = vsel %vm771, 1, 0
      %v804 = vsel %vm772, 1, 0
      %v805 = vsel %vm773, 1, 0
      %v806 = vsel %vm774, 1, 0
      %v807 = vsel %vm775, 1, 0
      %v808 = vsel %vm776, 1, 0
      %v809 = vsel %vm777, 1, 0
      %v810 = vsel %vm778, 1, 0
      %v811 = vsel %vm779, 1, 0
      %v812 = vsel %vm780, 1, 0
      %v813 = vsel %vm781, 1, 0
      %v814 = vsel %vm782, 1, 0
      %v815 = vsel %vm783, 1, 0
      %v816 = vsel %vm784, 1, 0
      %v817 = vsel %vm785, 1, 0
      %v818 = vsel %vm786, 1, 0
      %v819 = vsel %vm787, 1, 0
      %v820 = vsel %vm788, 1, 0
      %v821 = vsel %vm789, 1, 0
      %v822 = vsel %vm790, 1, 0
      %v823 = vsel %vm791, 1, 0
      %v824 = vsel %vm792, 1, 0
      %v825 = vsel %vm793, 1, 0
      %v826 = vsel %vm794, 1, 0
      %v827 = vsel %vm795, 1, 0
      %vm828 = vcmp.eq.s32.totalorder %v796, 1
      %vm829 = vcmp.eq.s32.totalorder %v797, 1
      %vm830 = vcmp.eq.s32.totalorder %v798, 1
      %vm831 = vcmp.eq.s32.totalorder %v799, 1
      %vm832 = vcmp.eq.s32.totalorder %v800, 1
      %vm833 = vcmp.eq.s32.totalorder %v801, 1
      %vm834 = vcmp.eq.s32.totalorder %v802, 1
      %vm835 = vcmp.eq.s32.totalorder %v803, 1
      %vm836 = vcmp.eq.s32.totalorder %v804, 1
      %vm837 = vcmp.eq.s32.totalorder %v805, 1
      %vm838 = vcmp.eq.s32.totalorder %v806, 1
      %vm839 = vcmp.eq.s32.totalorder %v807, 1
      %vm840 = vcmp.eq.s32.totalorder %v808, 1
      %vm841 = vcmp.eq.s32.totalorder %v809, 1
      %vm842 = vcmp.eq.s32.totalorder %v810, 1
      %vm843 = vcmp.eq.s32.totalorder %v811, 1
      %vm844 = vcmp.eq.s32.totalorder %v812, 1
      %vm845 = vcmp.eq.s32.totalorder %v813, 1
      %vm846 = vcmp.eq.s32.totalorder %v814, 1
      %vm847 = vcmp.eq.s32.totalorder %v815, 1
      %vm848 = vcmp.eq.s32.totalorder %v816, 1
      %vm849 = vcmp.eq.s32.totalorder %v817, 1
      %vm850 = vcmp.eq.s32.totalorder %v818, 1
      %vm851 = vcmp.eq.s32.totalorder %v819, 1
      %vm852 = vcmp.eq.s32.totalorder %v820, 1
      %vm853 = vcmp.eq.s32.totalorder %v821, 1
      %vm854 = vcmp.eq.s32.totalorder %v822, 1
      %vm855 = vcmp.eq.s32.totalorder %v823, 1
      %vm856 = vcmp.eq.s32.totalorder %v824, 1
      %vm857 = vcmp.eq.s32.totalorder %v825, 1
      %vm858 = vcmp.eq.s32.totalorder %v826, 1
      %vm859 = vcmp.eq.s32.totalorder %v827, 1
      %v860 = vsel %vm828, 0.0, %v315
      %v861 = vsel %vm829, 0.0, %v316
      %v862 = vsel %vm830, 0.0, %v317
      %v863 = vsel %vm831, 0.0, %v318
      %v864 = vsel %vm832, 0.0, %v319
      %v865 = vsel %vm833, 0.0, %v320
      %v866 = vsel %vm834, 0.0, %v321
      %v867 = vsel %vm835, 0.0, %v322
      %v868 = vsel %vm836, 0.0, %v323
      %v869 = vsel %vm837, 0.0, %v324
      %v870 = vsel %vm838, 0.0, %v325
      %v871 = vsel %vm839, 0.0, %v326
      %v872 = vsel %vm840, 0.0, %v327
      %v873 = vsel %vm841, 0.0, %v328
      %v874 = vsel %vm842, 0.0, %v329
      %v875 = vsel %vm843, 0.0, %v330
      %v876 = vsel %vm844, 0.0, %v331
      %v877 = vsel %vm845, 0.0, %v332
      %v878 = vsel %vm846, 0.0, %v333
      %v879 = vsel %vm847, 0.0, %v334
      %v880 = vsel %vm848, 0.0, %v335
      %v881 = vsel %vm849, 0.0, %v336
      %v882 = vsel %vm850, 0.0, %v337
      %v883 = vsel %vm851, 0.0, %v338
      %v884 = vsel %vm852, 0.0, %v339
      %v885 = vsel %vm853, 0.0, %v340
      %v886 = vsel %vm854, 0.0, %v341
      %v887 = vsel %vm855, 0.0, %v342
      %v888 = vsel %vm856, 0.0, %v343
      %v889 = vsel %vm857, 0.0, %v344
      %v890 = vsel %vm858, 0.0, %v345
      %v891 = vsel %vm859, 0.0, %v346
      %vm892 = vcmp.eq.s32.totalorder %v732, 0
      %vm893 = vcmp.eq.s32.totalorder %v733, 0
      %vm894 = vcmp.eq.s32.totalorder %v734, 0
      %vm895 = vcmp.eq.s32.totalorder %v735, 0
      %vm896 = vcmp.eq.s32.totalorder %v736, 0
      %vm897 = vcmp.eq.s32.totalorder %v737, 0
      %vm898 = vcmp.eq.s32.totalorder %v738, 0
      %vm899 = vcmp.eq.s32.totalorder %v739, 0
      %vm900 = vcmp.eq.s32.totalorder %v740, 0
      %vm901 = vcmp.eq.s32.totalorder %v741, 0
      %vm902 = vcmp.eq.s32.totalorder %v742, 0
      %vm903 = vcmp.eq.s32.totalorder %v743, 0
      %vm904 = vcmp.eq.s32.totalorder %v744, 0
      %vm905 = vcmp.eq.s32.totalorder %v745, 0
      %vm906 = vcmp.eq.s32.totalorder %v746, 0
      %vm907 = vcmp.eq.s32.totalorder %v747, 0
      %vm908 = vcmp.eq.s32.totalorder %v748, 0
      %vm909 = vcmp.eq.s32.totalorder %v749, 0
      %vm910 = vcmp.eq.s32.totalorder %v750, 0
      %vm911 = vcmp.eq.s32.totalorder %v751, 0
      %vm912 = vcmp.eq.s32.totalorder %v752, 0
      %vm913 = vcmp.eq.s32.totalorder %v753, 0
      %vm914 = vcmp.eq.s32.totalorder %v754, 0
      %vm915 = vcmp.eq.s32.totalorder %v755, 0
      %vm916 = vcmp.eq.s32.totalorder %v756, 0
      %vm917 = vcmp.eq.s32.totalorder %v757, 0
      %vm918 = vcmp.eq.s32.totalorder %v758, 0
      %vm919 = vcmp.eq.s32.totalorder %v759, 0
      %vm920 = vcmp.eq.s32.totalorder %v760, 0
      %vm921 = vcmp.eq.s32.totalorder %v761, 0
      %vm922 = vcmp.eq.s32.totalorder %v762, 0
      %vm923 = vcmp.eq.s32.totalorder %v763, 0
      %v924 = vsel %vm892, 1, 0
      %v925 = vsel %vm893, 1, 0
      %v926 = vsel %vm894, 1, 0
      %v927 = vsel %vm895, 1, 0
      %v928 = vsel %vm896, 1, 0
      %v929 = vsel %vm897, 1, 0
      %v930 = vsel %vm898, 1, 0
      %v931 = vsel %vm899, 1, 0
      %v932 = vsel %vm900, 1, 0
      %v933 = vsel %vm901, 1, 0
      %v934 = vsel %vm902, 1, 0
      %v935 = vsel %vm903, 1, 0
      %v936 = vsel %vm904, 1, 0
      %v937 = vsel %vm905, 1, 0
      %v938 = vsel %vm906, 1, 0
      %v939 = vsel %vm907, 1, 0
      %v940 = vsel %vm908, 1, 0
      %v941 = vsel %vm909, 1, 0
      %v942 = vsel %vm910, 1, 0
      %v943 = vsel %vm911, 1, 0
      %v944 = vsel %vm912, 1, 0
      %v945 = vsel %vm913, 1, 0
      %v946 = vsel %vm914, 1, 0
      %v947 = vsel %vm915, 1, 0
      %v948 = vsel %vm916, 1, 0
      %v949 = vsel %vm917, 1, 0
      %v950 = vsel %vm918, 1, 0
      %v951 = vsel %vm919, 1, 0
      %v952 = vsel %vm920, 1, 0
      %v953 = vsel %vm921, 1, 0
      %v954 = vsel %vm922, 1, 0
      %v955 = vsel %vm923, 1, 0
      %vm956 = vcmp.eq.s32.totalorder %v924, 1
      %vm957 = vcmp.eq.s32.totalorder %v925, 1
      %vm958 = vcmp.eq.s32.totalorder %v926, 1
      %vm959 = vcmp.eq.s32.totalorder %v927, 1
      %vm960 = vcmp.eq.s32.totalorder %v928, 1
      %vm961 = vcmp.eq.s32.totalorder %v929, 1
      %vm962 = vcmp.eq.s32.totalorder %v930, 1
      %vm963 = vcmp.eq.s32.totalorder %v931, 1
      %vm964 = vcmp.eq.s32.totalorder %v932, 1
      %vm965 = vcmp.eq.s32.totalorder %v933, 1
      %vm966 = vcmp.eq.s32.totalorder %v934, 1
      %vm967 = vcmp.eq.s32.totalorder %v935, 1
      %vm968 = vcmp.eq.s32.totalorder %v936, 1
      %vm969 = vcmp.eq.s32.totalorder %v937, 1
      %vm970 = vcmp.eq.s32.totalorder %v938, 1
      %vm971 = vcmp.eq.s32.totalorder %v939, 1
      %vm972 = vcmp.eq.s32.totalorder %v940, 1
      %vm973 = vcmp.eq.s32.totalorder %v941, 1
      %vm974 = vcmp.eq.s32.totalorder %v942, 1
      %vm975 = vcmp.eq.s32.totalorder %v943, 1
      %vm976 = vcmp.eq.s32.totalorder %v944, 1
      %vm977 = vcmp.eq.s32.totalorder %v945, 1
      %vm978 = vcmp.eq.s32.totalorder %v946, 1
      %vm979 = vcmp.eq.s32.totalorder %v947, 1
      %vm980 = vcmp.eq.s32.totalorder %v948, 1
      %vm981 = vcmp.eq.s32.totalorder %v949, 1
      %vm982 = vcmp.eq.s32.totalorder %v950, 1
      %vm983 = vcmp.eq.s32.totalorder %v951, 1
      %vm984 = vcmp.eq.s32.totalorder %v952, 1
      %vm985 = vcmp.eq.s32.totalorder %v953, 1
      %vm986 = vcmp.eq.s32.totalorder %v954, 1
      %vm987 = vcmp.eq.s32.totalorder %v955, 1
      %v988 = vsel %vm956, 0.0, %v315
      %v989 = vsel %vm957, 0.0, %v316
      %v990 = vsel %vm958, 0.0, %v317
      %v991 = vsel %vm959, 0.0, %v318
      %v992 = vsel %vm960, 0.0, %v319
      %v993 = vsel %vm961, 0.0, %v320
      %v994 = vsel %vm962, 0.0, %v321
      %v995 = vsel %vm963, 0.0, %v322
      %v996 = vsel %vm964, 0.0, %v323
      %v997 = vsel %vm965, 0.0, %v324
      %v998 = vsel %vm966, 0.0, %v325
      %v999 = vsel %vm967, 0.0, %v326
      %v1000 = vsel %vm968, 0.0, %v327
      %v1001 = vsel %vm969, 0.0, %v328
      %v1002 = vsel %vm970, 0.0, %v329
      %v1003 = vsel %vm971, 0.0, %v330
      %v1004 = vsel %vm972, 0.0, %v331
      %v1005 = vsel %vm973, 0.0, %v332
      %v1006 = vsel %vm974, 0.0, %v333
      %v1007 = vsel %vm975, 0.0, %v334
      %v1008 = vsel %vm976, 0.0, %v335
      %v1009 = vsel %vm977, 0.0, %v336
      %v1010 = vsel %vm978, 0.0, %v337
      %v1011 = vsel %vm979, 0.0, %v338
      %v1012 = vsel %vm980, 0.0, %v339
      %v1013 = vsel %vm981, 0.0, %v340
      %v1014 = vsel %vm982, 0.0, %v341
      %v1015 = vsel %vm983, 0.0, %v342
      %v1016 = vsel %vm984, 0.0, %v343
      %v1017 = vsel %vm985, 0.0, %v344
      %v1018 = vsel %vm986, 0.0, %v345
      %v1019 = vsel %vm987, 0.0, %v346
      %vm1052 = vcmask 1040384
      %v1053 = vrot.slane %v860, 7
      %v1054 = vrot.slane %v861, 7
      %v1055 = vsel %vm1052, %v1053, %v1054
      %v1056 = vrot.slane %v862, 7
      %v1057 = vsel %vm1052, %v1054, %v1056
      %v1058 = vrot.slane %v863, 7
      %v1059 = vsel %vm1052, %v1056, %v1058
      %v1060 = vrot.slane %v864, 7
      %v1061 = vsel %vm1052, %v1058, %v1060
      %v1062 = vrot.slane %v865, 7
      %v1063 = vsel %vm1052, %v1060, %v1062
      %v1064 = vrot.slane %v866, 7
      %v1065 = vsel %vm1052, %v1062, %v1064
      %v1066 = vrot.slane %v867, 7
      %v1067 = vsel %vm1052, %v1064, %v1066
      %v1068 = vrot.slane %v868, 7
      %v1069 = vsel %vm1052, %v1066, %v1068
      %v1070 = vrot.slane %v869, 7
      %v1071 = vsel %vm1052, %v1068, %v1070
      %v1072 = vrot.slane %v870, 7
      %v1073 = vsel %vm1052, %v1070, %v1072
      %v1074 = vrot.slane %v871, 7
      %v1075 = vsel %vm1052, %v1072, %v1074
      %v1076 = vrot.slane %v872, 7
      %v1077 = vsel %vm1052, %v1074, %v1076
      %v1078 = vrot.slane %v873, 7
      %v1079 = vsel %vm1052, %v1076, %v1078
      %v1080 = vrot.slane %v874, 7
      %v1081 = vsel %vm1052, %v1078, %v1080
      %v1082 = vrot.slane %v875, 7
      %v1083 = vsel %vm1052, %v1080, %v1082
      %v1084 = vrot.slane %v876, 7
      %v1085 = vsel %vm1052, %v1082, %v1084
      %v1086 = vrot.slane %v877, 7
      %v1087 = vsel %vm1052, %v1084, %v1086
      %v1088 = vrot.slane %v878, 7
      %v1089 = vsel %vm1052, %v1086, %v1088
      %v1090 = vrot.slane %v879, 7
      %v1091 = vsel %vm1052, %v1088, %v1090
      %v1092 = vrot.slane %v880, 7
      %v1093 = vsel %vm1052, %v1090, %v1092
      %v1094 = vrot.slane %v881, 7
      %v1095 = vsel %vm1052, %v1092, %v1094
      %v1096 = vrot.slane %v882, 7
      %v1097 = vsel %vm1052, %v1094, %v1096
      %v1098 = vrot.slane %v883, 7
      %v1099 = vsel %vm1052, %v1096, %v1098
      %v1100 = vrot.slane %v884, 7
      %v1101 = vsel %vm1052, %v1098, %v1100
      %v1102 = vrot.slane %v885, 7
      %v1103 = vsel %vm1052, %v1100, %v1102
      %v1104 = vrot.slane %v886, 7
      %v1105 = vsel %vm1052, %v1102, %v1104
      %v1106 = vrot.slane %v887, 7
      %v1107 = vsel %vm1052, %v1104, %v1106
      %v1108 = vrot.slane %v888, 7
      %v1109 = vsel %vm1052, %v1106, %v1108
      %v1110 = vrot.slane %v889, 7
      %v1111 = vsel %vm1052, %v1108, %v1110
      %v1112 = vrot.slane %v890, 7
      %v1113 = vsel %vm1052, %v1110, %v1112
      %v1114 = vrot.slane %v891, 7
      %v1115 = vsel %vm1052, %v1112, %v1114
      %v1149 = vsel %vm1052, 0.0, %v1053
      %v1150 = vsel %vm1052, %v1114, 0.0
      %v1183 = vrot.slane %v315, 7
      %v1184 = vrot.slane %v316, 7
      %v1185 = vsel %vm1052, %v1183, %v1184
      %v1186 = vrot.slane %v317, 7
      %v1187 = vsel %vm1052, %v1184, %v1186
      %v1188 = vrot.slane %v318, 7
      %v1189 = vsel %vm1052, %v1186, %v1188
      %v1190 = vrot.slane %v319, 7
      %v1191 = vsel %vm1052, %v1188, %v1190
      %v1192 = vrot.slane %v320, 7
      %v1193 = vsel %vm1052, %v1190, %v1192
      %v1194 = vrot.slane %v321, 7
      %v1195 = vsel %vm1052, %v1192, %v1194
      %v1196 = vrot.slane %v322, 7
      %v1197 = vsel %vm1052, %v1194, %v1196
      %v1198 = vrot.slane %v323, 7
      %v1199 = vsel %vm1052, %v1196, %v1198
      %v1200 = vrot.slane %v324, 7
      %v1201 = vsel %vm1052, %v1198, %v1200
      %v1202 = vrot.slane %v325, 7
      %v1203 = vsel %vm1052, %v1200, %v1202
      %v1204 = vrot.slane %v326, 7
      %v1205 = vsel %vm1052, %v1202, %v1204
      %v1206 = vrot.slane %v327, 7
      %v1207 = vsel %vm1052, %v1204, %v1206
      %v1208 = vrot.slane %v328, 7
      %v1209 = vsel %vm1052, %v1206, %v1208
      %v1210 = vrot.slane %v329, 7
      %v1211 = vsel %vm1052, %v1208, %v1210
      %v1212 = vrot.slane %v330, 7
      %v1213 = vsel %vm1052, %v1210, %v1212
      %v1214 = vrot.slane %v331, 7
      %v1215 = vsel %vm1052, %v1212, %v1214
      %v1216 = vrot.slane %v332, 7
      %v1217 = vsel %vm1052, %v1214, %v1216
      %v1218 = vrot.slane %v333, 7
      %v1219 = vsel %vm1052, %v1216, %v1218
      %v1220 = vrot.slane %v334, 7
      %v1221 = vsel %vm1052, %v1218, %v1220
      %v1222 = vrot.slane %v335, 7
      %v1223 = vsel %vm1052, %v1220, %v1222
      %v1224 = vrot.slane %v336, 7
      %v1225 = vsel %vm1052, %v1222, %v1224
      %v1226 = vrot.slane %v337, 7
      %v1227 = vsel %vm1052, %v1224, %v1226
      %v1228 = vrot.slane %v338, 7
      %v1229 = vsel %vm1052, %v1226, %v1228
      %v1230 = vrot.slane %v339, 7
      %v1231 = vsel %vm1052, %v1228, %v1230
      %v1232 = vrot.slane %v340, 7
      %v1233 = vsel %vm1052, %v1230, %v1232
      %v1234 = vrot.slane %v341, 7
      %v1235 = vsel %vm1052, %v1232, %v1234
      %v1236 = vrot.slane %v342, 7
      %v1237 = vsel %vm1052, %v1234, %v1236
      %v1238 = vrot.slane %v343, 7
      %v1239 = vsel %vm1052, %v1236, %v1238
      %v1240 = vrot.slane %v344, 7
      %v1241 = vsel %vm1052, %v1238, %v1240
      %v1242 = vrot.slane %v345, 7
      %v1243 = vsel %vm1052, %v1240, %v1242
      %v1244 = vrot.slane %v346, 7
      %v1245 = vsel %vm1052, %v1242, %v1244
      %v1248 = vsel %vm1052, 0.0, %v1183
      %v1249 = vsel %vm1052, %v1244, 0.0
      %v1282 = vrot.slane %v988, 7
      %v1283 = vrot.slane %v989, 7
      %v1284 = vsel %vm1052, %v1282, %v1283
      %v1285 = vrot.slane %v990, 7
      %v1286 = vsel %vm1052, %v1283, %v1285
      %v1287 = vrot.slane %v991, 7
      %v1288 = vsel %vm1052, %v1285, %v1287
      %v1289 = vrot.slane %v992, 7
      %v1290 = vsel %vm1052, %v1287, %v1289
      %v1291 = vrot.slane %v993, 7
      %v1292 = vsel %vm1052, %v1289, %v1291
      %v1293 = vrot.slane %v994, 7
      %v1294 = vsel %vm1052, %v1291, %v1293
      %v1295 = vrot.slane %v995, 7
      %v1296 = vsel %vm1052, %v1293, %v1295
      %v1297 = vrot.slane %v996, 7
      %v1298 = vsel %vm1052, %v1295, %v1297
      %v1299 = vrot.slane %v997, 7
      %v1300 = vsel %vm1052, %v1297, %v1299
      %v1301 = vrot.slane %v998, 7
      %v1302 = vsel %vm1052, %v1299, %v1301
      %v1303 = vrot.slane %v999, 7
      %v1304 = vsel %vm1052, %v1301, %v1303
      %v1305 = vrot.slane %v1000, 7
      %v1306 = vsel %vm1052, %v1303, %v1305
      %v1307 = vrot.slane %v1001, 7
      %v1308 = vsel %vm1052, %v1305, %v1307
      %v1309 = vrot.slane %v1002, 7
      %v1310 = vsel %vm1052, %v1307, %v1309
      %v1311 = vrot.slane %v1003, 7
      %v1312 = vsel %vm1052, %v1309, %v1311
      %v1313 = vrot.slane %v1004, 7
      %v1314 = vsel %vm1052, %v1311, %v1313
      %v1315 = vrot.slane %v1005, 7
      %v1316 = vsel %vm1052, %v1313, %v1315
      %v1317 = vrot.slane %v1006, 7
      %v1318 = vsel %vm1052, %v1315, %v1317
      %v1319 = vrot.slane %v1007, 7
      %v1320 = vsel %vm1052, %v1317, %v1319
      %v1321 = vrot.slane %v1008, 7
      %v1322 = vsel %vm1052, %v1319, %v1321
      %v1323 = vrot.slane %v1009, 7
      %v1324 = vsel %vm1052, %v1321, %v1323
      %v1325 = vrot.slane %v1010, 7
      %v1326 = vsel %vm1052, %v1323, %v1325
      %v1327 = vrot.slane %v1011, 7
      %v1328 = vsel %vm1052, %v1325, %v1327
      %v1329 = vrot.slane %v1012, 7
      %v1330 = vsel %vm1052, %v1327, %v1329
      %v1331 = vrot.slane %v1013, 7
      %v1332 = vsel %vm1052, %v1329, %v1331
      %v1333 = vrot.slane %v1014, 7
      %v1334 = vsel %vm1052, %v1331, %v1333
      %v1335 = vrot.slane %v1015, 7
      %v1336 = vsel %vm1052, %v1333, %v1335
      %v1337 = vrot.slane %v1016, 7
      %v1338 = vsel %vm1052, %v1335, %v1337
      %v1339 = vrot.slane %v1017, 7
      %v1340 = vsel %vm1052, %v1337, %v1339
      %v1341 = vrot.slane %v1018, 7
      %v1342 = vsel %vm1052, %v1339, %v1341
      %v1343 = vrot.slane %v1019, 7
      %v1344 = vsel %vm1052, %v1341, %v1343
      %v1347 = vsel %vm1052, 0.0, %v1282
      %v1348 = vsel %vm1052, %v1343, 0.0
      %vm1351 = vcmask 1046528
      %v1352 = vrot.slane 0.0, 1
      %v1353 = vsel %vm1351, %v1352, %v1352
      %v1354 = vrot.slane %v1248, 1
      %v1355 = vsel %vm1351, %v1352, %v1354
      %v1356 = vrot.slane %v1185, 1
      %v1357 = vsel %vm1351, %v1354, %v1356
      %v1358 = vrot.slane %v1187, 1
      %v1359 = vsel %vm1351, %v1356, %v1358
      %v1360 = vrot.slane %v1189, 1
      %v1361 = vsel %vm1351, %v1358, %v1360
      %v1362 = vrot.slane %v1191, 1
      %v1363 = vsel %vm1351, %v1360, %v1362
      %v1364 = vrot.slane %v1193, 1
      %v1365 = vsel %vm1351, %v1362, %v1364
      %v1366 = vrot.slane %v1195, 1
      %v1367 = vsel %vm1351, %v1364, %v1366
      %v1368 = vrot.slane %v1197, 1
      %v1369 = vsel %vm1351, %v1366, %v1368
      %v1370 = vrot.slane %v1199, 1
      %v1371 = vsel %vm1351, %v1368, %v1370
      %v1372 = vrot.slane %v1201, 1
      %v1373 = vsel %vm1351, %v1370, %v1372
      %v1374 = vrot.slane %v1203, 1
      %v1375 = vsel %vm1351, %v1372, %v1374
      %v1376 = vrot.slane %v1205, 1
      %v1377 = vsel %vm1351, %v1374, %v1376
      %v1378 = vrot.slane %v1207, 1
      %v1379 = vsel %vm1351, %v1376, %v1378
      %v1380 = vrot.slane %v1209, 1
      %v1381 = vsel %vm1351, %v1378, %v1380
      %v1382 = vrot.slane %v1211, 1
      %v1383 = vsel %vm1351, %v1380, %v1382
      %v1384 = vrot.slane %v1213, 1
      %v1385 = vsel %vm1351, %v1382, %v1384
      %v1386 = vrot.slane %v1215, 1
      %v1387 = vsel %vm1351, %v1384, %v1386
      %v1388 = vrot.slane %v1217, 1
      %v1389 = vsel %vm1351, %v1386, %v1388
      %v1390 = vrot.slane %v1219, 1
      %v1391 = vsel %vm1351, %v1388, %v1390
      %v1392 = vrot.slane %v1221, 1
      %v1393 = vsel %vm1351, %v1390, %v1392
      %v1394 = vrot.slane %v1223, 1
      %v1395 = vsel %vm1351, %v1392, %v1394
      %v1396 = vrot.slane %v1225, 1
      %v1397 = vsel %vm1351, %v1394, %v1396
      %v1398 = vrot.slane %v1227, 1
      %v1399 = vsel %vm1351, %v1396, %v1398
      %v1400 = vrot.slane %v1229, 1
      %v1401 = vsel %vm1351, %v1398, %v1400
      %v1402 = vrot.slane %v1231, 1
      %v1403 = vsel %vm1351, %v1400, %v1402
      %v1404 = vrot.slane %v1233, 1
      %v1405 = vsel %vm1351, %v1402, %v1404
      %v1406 = vrot.slane %v1235, 1
      %v1407 = vsel %vm1351, %v1404, %v1406
      %v1408 = vrot.slane %v1237, 1
      %v1409 = vsel %vm1351, %v1406, %v1408
      %v1410 = vrot.slane %v1239, 1
      %v1411 = vsel %vm1351, %v1408, %v1410
      %v1412 = vrot.slane %v1241, 1
      %v1413 = vsel %vm1351, %v1410, %v1412
      %v1414 = vrot.slane %v1243, 1
      %v1415 = vsel %vm1351, %v1412, %v1414
      %vm1449 = vcmask 1045504
      %v1450 = vrot.slane 0.0, 2
      %v1451 = vsel %vm1449, %v1450, %v1450
      %v1452 = vrot.slane %v1347, 2
      %v1453 = vsel %vm1449, %v1450, %v1452
      %v1454 = vrot.slane %v1284, 2
      %v1455 = vsel %vm1449, %v1452, %v1454
      %v1456 = vrot.slane %v1286, 2
      %v1457 = vsel %vm1449, %v1454, %v1456
      %v1458 = vrot.slane %v1288, 2
      %v1459 = vsel %vm1449, %v1456, %v1458
      %v1460 = vrot.slane %v1290, 2
      %v1461 = vsel %vm1449, %v1458, %v1460
      %v1462 = vrot.slane %v1292, 2
      %v1463 = vsel %vm1449, %v1460, %v1462
      %v1464 = vrot.slane %v1294, 2
      %v1465 = vsel %vm1449, %v1462, %v1464
      %v1466 = vrot.slane %v1296, 2
      %v1467 = vsel %vm1449, %v1464, %v1466
      %v1468 = vrot.slane %v1298, 2
      %v1469 = vsel %vm1449, %v1466, %v1468
      %v1470 = vrot.slane %v1300, 2
      %v1471 = vsel %vm1449, %v1468, %v1470
      %v1472 = vrot.slane %v1302, 2
      %v1473 = vsel %vm1449, %v1470, %v1472
      %v1474 = vrot.slane %v1304, 2
      %v1475 = vsel %vm1449, %v1472, %v1474
      %v1476 = vrot.slane %v1306, 2
      %v1477 = vsel %vm1449, %v1474, %v1476
      %v1478 = vrot.slane %v1308, 2
      %v1479 = vsel %vm1449, %v1476, %v1478
      %v1480 = vrot.slane %v1310, 2
      %v1481 = vsel %vm1449, %v1478, %v1480
      %v1482 = vrot.slane %v1312, 2
      %v1483 = vsel %vm1449, %v1480, %v1482
      %v1484 = vrot.slane %v1314, 2
      %v1485 = vsel %vm1449, %v1482, %v1484
      %v1486 = vrot.slane %v1316, 2
      %v1487 = vsel %vm1449, %v1484, %v1486
      %v1488 = vrot.slane %v1318, 2
      %v1489 = vsel %vm1449, %v1486, %v1488
      %v1490 = vrot.slane %v1320, 2
      %v1491 = vsel %vm1449, %v1488, %v1490
      %v1492 = vrot.slane %v1322, 2
      %v1493 = vsel %vm1449, %v1490, %v1492
      %v1494 = vrot.slane %v1324, 2
      %v1495 = vsel %vm1449, %v1492, %v1494
      %v1496 = vrot.slane %v1326, 2
      %v1497 = vsel %vm1449, %v1494, %v1496
      %v1498 = vrot.slane %v1328, 2
      %v1499 = vsel %vm1449, %v1496, %v1498
      %v1500 = vrot.slane %v1330, 2
      %v1501 = vsel %vm1449, %v1498, %v1500
      %v1502 = vrot.slane %v1332, 2
      %v1503 = vsel %vm1449, %v1500, %v1502
      %v1504 = vrot.slane %v1334, 2
      %v1505 = vsel %vm1449, %v1502, %v1504
      %v1506 = vrot.slane %v1336, 2
      %v1507 = vsel %vm1449, %v1504, %v1506
      %v1508 = vrot.slane %v1338, 2
      %v1509 = vsel %vm1449, %v1506, %v1508
      %v1510 = vrot.slane %v1340, 2
      %v1511 = vsel %vm1449, %v1508, %v1510
      %v1512 = vrot.slane %v1342, 2
      %v1513 = vsel %vm1449, %v1510, %v1512
      %v1547 = vrot.slane %v1245, 1
      %v1548 = vsel %vm1351, %v1414, %v1547
      %v1549 = vrot.slane %v1249, 1
      %v1550 = vsel %vm1351, %v1547, %v1549
      %v1554 = vrot.slane %v1344, 2
      %v1555 = vsel %vm1449, %v1512, %v1554
      %v1556 = vrot.slane %v1348, 2
      %v1557 = vsel %vm1449, %v1554, %v1556
      %v1560 = vsel %vm1351, %v1549, %v1352
      %v1562 = vsel %vm1449, %v1556, %v1450
      %v1564 = vld [vmem:[%s2] sm:$0xff]
      %v1565 = vld [vmem:[%s2 + $0x8] sm:$0xff]
      %v1566 = vld [vmem:[%s2 + $0x10] sm:$0xff]
      %v1567 = vld [vmem:[%s2 + $0x18] sm:$0xff]
      %v1568 = vld [vmem:[%s2 + $0x20] sm:$0xff]
      %v1569 = vld [vmem:[%s2 + $0x28] sm:$0xff]
      %v1570 = vld [vmem:[%s2 + $0x30] sm:$0xff]
      %v1571 = vld [vmem:[%s2 + $0x38] sm:$0xff]
      %v1572 = vld [vmem:[%s2 + $0x40] sm:$0xff]
      %v1573 = vld [vmem:[%s2 + $0x48] sm:$0xff]
      %v1574 = vld [vmem:[%s2 + $0x50] sm:$0xff]
      %v1575 = vld [vmem:[%s2 + $0x58] sm:$0xff]
      %v1576 = vld [vmem:[%s2 + $0x60] sm:$0xff]
      %v1577 = vld [vmem:[%s2 + $0x68] sm:$0xff]
      %v1578 = vld [vmem:[%s2 + $0x70] sm:$0xff]
      %v1579 = vld [vmem:[%s2 + $0x78] sm:$0xff]
      %v1580 = vld [vmem:[%s2 + $0x80] sm:$0xff]
      %v1581 = vld [vmem:[%s2 + $0x88] sm:$0xff]
      %v1582 = vld [vmem:[%s2 + $0x90] sm:$0xff]
      %v1583 = vld [vmem:[%s2 + $0x98] sm:$0xff]
      %v1584 = vld [vmem:[%s2 + $0xa0] sm:$0xff]
      %v1585 = vld [vmem:[%s2 + $0xa8] sm:$0xff]
      %v1586 = vld [vmem:[%s2 + $0xb0] sm:$0xff]
      %v1587 = vld [vmem:[%s2 + $0xb8] sm:$0xff]
      %v1588 = vld [vmem:[%s2 + $0xc0] sm:$0xff]
      %v1589 = vld [vmem:[%s2 + $0xc8] sm:$0xff]
      %v1590 = vld [vmem:[%s2 + $0xd0] sm:$0xff]
      %v1591 = vld [vmem:[%s2 + $0xd8] sm:$0xff]
      %v1592 = vld [vmem:[%s2 + $0xe0] sm:$0xff]
      %v1593 = vld [vmem:[%s2 + $0xe8] sm:$0xff]
      %v1594 = vld [vmem:[%s2 + $0xf0] sm:$0xff]
      %v1595 = vld [vmem:[%s2 + $0xf8] sm:$0xff]
      %v1596 = vld [vmem:[%s2 + $0x100] sm:$0xff]
      %v1597 = vld [vmem:[%s2 + $0x108] sm:$0xff]
      %v1598 = vld [vmem:[%s2 + $0x110] sm:$0xff]
      %v1599 = vld [vmem:[%s2 + $0x118] sm:$0xff]
      %v1600 = vld [vmem:[%s2 + $0x120] sm:$0xff]
      %v1601 = vld [vmem:[%s2 + $0x128] sm:$0xff]
      %v1602 = vld [vmem:[%s2 + $0x130] sm:$0xff]
      %v1603 = vld [vmem:[%s2 + $0x138] sm:$0xff]
      %v1604 = vld [vmem:[%s2 + $0x140] sm:$0xff]
      %v1605 = vld [vmem:[%s2 + $0x148] sm:$0xff]
      %v1606 = vld [vmem:[%s2 + $0x150] sm:$0xff]
      %v1607 = vld [vmem:[%s2 + $0x158] sm:$0xff]
      %v1608 = vld [vmem:[%s2 + $0x160] sm:$0xff]
      %v1609 = vld [vmem:[%s2 + $0x168] sm:$0xff]
      %v1610 = vld [vmem:[%s2 + $0x170] sm:$0xff]
      %v1611 = vld [vmem:[%s2 + $0x178] sm:$0xff]
      %v1612 = vld [vmem:[%s2 + $0x180] sm:$0xff]
      %v1613 = vld [vmem:[%s2 + $0x188] sm:$0xff]
      %v1614 = vld [vmem:[%s2 + $0x190] sm:$0xff]
      %v1615 = vld [vmem:[%s2 + $0x198] sm:$0xff]
      %v1616 = vld [vmem:[%s2 + $0x1a0] sm:$0xff]
      %v1617 = vld [vmem:[%s2 + $0x1a8] sm:$0xff]
      %v1618 = vld [vmem:[%s2 + $0x1b0] sm:$0xff]
      %v1619 = vld [vmem:[%s2 + $0x1b8] sm:$0xff]
      %v1620 = vld [vmem:[%s2 + $0x1c0] sm:$0xff]
      %v1621 = vld [vmem:[%s2 + $0x1c8] sm:$0xff]
      %v1622 = vld [vmem:[%s2 + $0x1d0] sm:$0xff]
      %v1623 = vld [vmem:[%s2 + $0x1d8] sm:$0xff]
      %v1624 = vld [vmem:[%s2 + $0x1e0] sm:$0xff]
      %v1625 = vld [vmem:[%s2 + $0x1e8] sm:$0xff]
      %v1626 = vld [vmem:[%s2 + $0x1f0] sm:$0xff]
      %v1627 = vld [vmem:[%s2 + $0x1f8] sm:$0xff]
      %v1628 = vld [vmem:[%s2 + $0x200] sm:$0xff]
      %v1629 = vld [vmem:[%s2 + $0x208] sm:$0xff]
      %v1630 = vld [vmem:[%s2 + $0x210] sm:$0xff]
      %v1631 = vld [vmem:[%s2 + $0x218] sm:$0xff]
      %v1632 = vld [vmem:[%s2 + $0x220] sm:$0xff]
      %v1633 = vld [vmem:[%s2 + $0x228] sm:$0xff]
      %v1634 = vld [vmem:[%s2 + $0x230] sm:$0xff]
      %v1635 = vld [vmem:[%s2 + $0x238] sm:$0xff]
      %v1636 = vld [vmem:[%s2 + $0x240] sm:$0xff]
      %v1637 = vld [vmem:[%s2 + $0x248] sm:$0xff]
      %v1638 = vld [vmem:[%s2 + $0x250] sm:$0xff]
      %v1639 = vld [vmem:[%s2 + $0x258] sm:$0xff]
      %v1640 = vld [vmem:[%s2 + $0x260] sm:$0xff]
      %v1641 = vld [vmem:[%s2 + $0x268] sm:$0xff]
      %v1642 = vld [vmem:[%s2 + $0x270] sm:$0xff]
      %v1643 = vld [vmem:[%s2 + $0x278] sm:$0xff]
      %v1644 = vld [vmem:[%s2 + $0x280] sm:$0xff]
      %v1645 = vld [vmem:[%s2 + $0x288] sm:$0xff]
      %v1646 = vld [vmem:[%s2 + $0x290] sm:$0xff]
      %v1647 = vld [vmem:[%s2 + $0x298] sm:$0xff]
      %v1648 = vld [vmem:[%s2 + $0x2a0] sm:$0xff]
      %v1649 = vld [vmem:[%s2 + $0x2a8] sm:$0xff]
      %v1650 = vld [vmem:[%s2 + $0x2b0] sm:$0xff]
      %v1651 = vld [vmem:[%s2 + $0x2b8] sm:$0xff]
      %v1652 = vld [vmem:[%s2 + $0x2c0] sm:$0xff]
      %v1653 = vld [vmem:[%s2 + $0x2c8] sm:$0xff]
      %v1654 = vld [vmem:[%s2 + $0x2d0] sm:$0xff]
      %v1655 = vld [vmem:[%s2 + $0x2d8] sm:$0xff]
      %v1656 = vld [vmem:[%s2 + $0x2e0] sm:$0xff]
      %v1657 = vld [vmem:[%s2 + $0x2e8] sm:$0xff]
      %v1658 = vld [vmem:[%s2 + $0x2f0] sm:$0xff]
      %v1659 = vld [vmem:[%s2 + $0x2f8] sm:$0xff]
      %v1660 = vld [vmem:[%s2 + $0x300] sm:$0xff]
      %v1661 = vld [vmem:[%s2 + $0x308] sm:$0xff]
      %v1662 = vld [vmem:[%s2 + $0x310] sm:$0xff]
      %v1663 = vld [vmem:[%s2 + $0x318] sm:$0xff]
      %v1664 = vld [vmem:[%s2 + $0x320] sm:$0xff]
      %v1665 = vld [vmem:[%s2 + $0x328] sm:$0xff]
      %v1666 = vld [vmem:[%s2 + $0x330] sm:$0xff]
      %v1667 = vld [vmem:[%s2 + $0x338] sm:$0xff]
      %v1668 = vld [vmem:[%s2 + $0x340] sm:$0xff]
      %v1669 = vld [vmem:[%s2 + $0x348] sm:$0xff]
      %v1670 = vld [vmem:[%s2 + $0x350] sm:$0xff]
      %v1671 = vld [vmem:[%s2 + $0x358] sm:$0xff]
      %v1672 = vld [vmem:[%s2 + $0x360] sm:$0xff]
      %v1673 = vld [vmem:[%s2 + $0x368] sm:$0xff]
      %v1674 = vld [vmem:[%s2 + $0x370] sm:$0xff]
      %v1675 = vld [vmem:[%s2 + $0x378] sm:$0xff]
      %v1676 = vld [vmem:[%s2 + $0x380] sm:$0xff]
      %v1677 = vld [vmem:[%s2 + $0x388] sm:$0xff]
      %v1678 = vld [vmem:[%s2 + $0x390] sm:$0xff]
      %v1679 = vld [vmem:[%s2 + $0x398] sm:$0xff]
      %v1680 = vld [vmem:[%s2 + $0x3a0] sm:$0xff]
      %v1681 = vld [vmem:[%s2 + $0x3a8] sm:$0xff]
      %v1682 = vld [vmem:[%s2 + $0x3b0] sm:$0xff]
      %v1683 = vld [vmem:[%s2 + $0x3b8] sm:$0xff]
      %v1684 = vld [vmem:[%s2 + $0x3c0] sm:$0xff]
      %v1685 = vld [vmem:[%s2 + $0x3c8] sm:$0xff]
      %v1686 = vld [vmem:[%s2 + $0x3d0] sm:$0xff]
      %v1687 = vld [vmem:[%s2 + $0x3d8] sm:$0xff]
      %v1688 = vld [vmem:[%s2 + $0x3e0] sm:$0xff]
      %v1689 = vld [vmem:[%s2 + $0x3e8] sm:$0xff]
      %v1690 = vld [vmem:[%s2 + $0x3f0] sm:$0xff]
      %v1691 = vld [vmem:[%s2 + $0x3f8] sm:$0xff]
      %v1692 = vld [vmem:[%s2 + $0x400] sm:$0xff]
      %v1693 = vld [vmem:[%s2 + $0x408] sm:$0xff]
      %v1694 = vld [vmem:[%s2 + $0x410] sm:$0xff]
      %v1695 = vld [vmem:[%s2 + $0x418] sm:$0xff]
      %v1696 = vld [vmem:[%s2 + $0x420] sm:$0xff]
      %v1697 = vld [vmem:[%s2 + $0x428] sm:$0xff]
      %v1698 = vld [vmem:[%s2 + $0x430] sm:$0xff]
      %v1699 = vld [vmem:[%s2 + $0x438] sm:$0xff]
      %v1700 = vld [vmem:[%s2 + $0x440] sm:$0xff]
      %v1701 = vld [vmem:[%s2 + $0x448] sm:$0xff]
      %v1702 = vld [vmem:[%s2 + $0x450] sm:$0xff]
      %v1703 = vld [vmem:[%s2 + $0x458] sm:$0xff]
      %v1704 = vld [vmem:[%s2 + $0x460] sm:$0xff]
      %v1705 = vld [vmem:[%s2 + $0x468] sm:$0xff]
      %v1706 = vld [vmem:[%s2 + $0x470] sm:$0xff]
      %v1707 = vld [vmem:[%s2 + $0x478] sm:$0xff]
      %1708 = vmatprep.subr.mxu0 0.0
      %1709 = vmatpush1.msra.mxu0 %v1564
      %1710 = vmatprep.subr.mxu0 0.0
      %1711 = vmatpush1.msra.mxu0 %v1565
      %1712 = vmatprep.subr.mxu0 0.0
      %1713 = vmatpush1.msra.mxu0 %v1566
      %1714 = vmatprep.subr.mxu0 0.0
      %1715 = vmatpush1.msra.mxu0 %v1567
      %1716 = vmatprep.subr.mxu0 0.0
      %1717 = vmatpush1.msra.mxu0 %v1568
      %1718 = vmatprep.subr.mxu0 0.0
      %1719 = vmatpush1.msra.mxu0 %v1569
      %1720 = vmatprep.subr.mxu0 0.0
      %1721 = vmatpush1.msra.mxu0 %v1570
      %1722 = vmatprep.subr.mxu0 0.0
      %1723 = vmatpush1.msra.mxu0 %v1571
      %1724 = vmatprep.subr.mxu0 0.0
      %1725 = vmatpush1.msra.mxu0 %v1572
      %1726 = vmatprep.subr.mxu0 0.0
      %1727 = vmatpush1.msra.mxu0 %v1573
      %1728 = vmatprep.subr.mxu0 0.0
      %1729 = vmatpush1.msra.mxu0 %v1574
      %1730 = vmatprep.subr.mxu0 0.0
      %1731 = vmatpush1.msra.mxu0 %v1575
      %1732 = vmatprep.subr.mxu0 0.0
      %1733 = vmatpush1.msra.mxu0 %v1576
      %1734 = vmatprep.subr.mxu0 0.0
      %1735 = vmatpush1.msra.mxu0 %v1577
      %1736 = vmatprep.subr.mxu0 0.0
      %1737 = vmatpush1.msra.mxu0 %v1578
      %1738 = vmatprep.subr.mxu0 0.0
      %1739 = vmatpush1.msra.mxu0 %v1579
      %1740 = vmatprep.subr.mxu0 0.0
      %1741 = vmatpush1.msra.mxu0 %v1580
      %1742 = vmatprep.subr.mxu0 0.0
      %1743 = vmatpush1.msra.mxu0 %v1581
      %1744 = vmatprep.subr.mxu0 0.0
      %1745 = vmatpush1.msra.mxu0 %v1582
      %1746 = vmatprep.subr.mxu0 0.0
      %1747 = vmatpush1.msra.mxu0 %v1583
      %1748 = vmatprep.subr.mxu0 0.0
      %1749 = vmatpush1.msra.mxu0 %v1584
      %1750 = vmatprep.subr.mxu0 0.0
      %1751 = vmatpush1.msra.mxu0 %v1585
      %1752 = vmatprep.subr.mxu0 0.0
      %1753 = vmatpush1.msra.mxu0 %v1586
      %1754 = vmatprep.subr.mxu0 0.0
      %1755 = vmatpush1.msra.mxu0 %v1587
      %1756 = vmatprep.subr.mxu0 0.0
      %1757 = vmatpush1.msra.mxu0 %v1588
      %1758 = vmatprep.subr.mxu0 0.0
      %1759 = vmatpush1.msra.mxu0 %v1589
      %1760 = vmatprep.subr.mxu0 0.0
      %1761 = vmatpush1.msra.mxu0 %v1590
      %1762 = vmatprep.subr.mxu0 0.0
      %1763 = vmatpush1.msra.mxu0 %v1591
      %1764 = vmatprep.subr.mxu0 0.0
      %1765 = vmatpush1.msra.mxu0 %v1592
      %1766 = vmatprep.subr.mxu0 0.0
      %1767 = vmatpush1.msra.mxu0 %v1593
      %1768 = vmatprep.subr.mxu0 0.0
      %1769 = vmatpush1.msra.mxu0 %v1594
      %1770 = vmatprep.subr.mxu0 0.0
      %1771 = vmatpush1.msra.mxu0 %v1595
      %1772 = vmatprep.mubr.f32.mxu0 %v1353
      %1773 = vmatmul.mubr.f32.gmra.mrb[0].mxu0 0.0
      %v1774 = vpop.f32.mrb[0].mxu0
      %v1775 = vadd.f32 0.0, %v1774
      %v1776 = vpop.f32.mrb[0].mxu0
      %1777 = vmatprep.mubr.f32.mxu0 %v1355
      %1778 = vmatmul.mubr.f32.gmra.mrb[0].mxu0 0.0
      %v1779 = vpop.f32.mrb[0].mxu0
      %v1780 = vadd.f32 0.0, %v1779
      %v1781 = vpop.f32.mrb[0].mxu0
      %1782 = vmatprep.mubr.f32.mxu0 %v1357
      %1783 = vmatmul.mubr.f32.gmra.mrb[0].mxu0 %v1149
      %v1784 = vpop.f32.mrb[0].mxu0
      %v1785 = vadd.f32 0.0, %v1784
      %v1786 = vpop.f32.mrb[0].mxu0
      %1787 = vmatprep.mubr.f32.mxu0 %v1359
      %1788 = vmatmul.mubr.f32.gmra.mrb[0].mxu0 %v1055
      %v1789 = vpop.f32.mrb[0].mxu0
      %v1790 = vadd.f32 0.0, %v1789
      %v1791 = vpop.f32.mrb[0].mxu0
      %1792 = vmatprep.mubr.f32.mxu0 %v1361
      %1793 = vmatmul.mubr.f32.gmra.mrb[0].mxu0 %v1057
      %v1794 = vpop.f32.mrb[0].mxu0
      %v1795 = vadd.f32 0.0, %v1794
      %v1796 = vpop.f32.mrb[0].mxu0
      %1797 = vmatprep.mubr.f32.mxu0 %v1363
      %1798 = vmatmul.mubr.f32.gmra.mrb[0].mxu0 %v1059
      %v1799 = vpop.f32.mrb[0].mxu0
      %v1800 = vadd.f32 0.0, %v1799
      %v1801 = vpop.f32.mrb[0].mxu0
      %1802 = vmatprep.mubr.f32.mxu0 %v1365
      %1803 = vmatmul.mubr.f32.gmra.mrb[0].mxu0 %v1061
      %v1804 = vpop.f32.mrb[0].mxu0
      %v1805 = vadd.f32 0.0, %v1804
      %v1806 = vpop.f32.mrb[0].mxu0
      %1807 = vmatprep.mubr.f32.mxu0 %v1367
      %1808 = vmatmul.mubr.f32.gmra.mrb[0].mxu0 %v1063
      %v1809 = vpop.f32.mrb[0].mxu0
      %v1810 = vadd.f32 0.0, %v1809
      %v1811 = vpop.f32.mrb[0].mxu0
      %1812 = vmatprep.mubr.f32.mxu0 %v1369
      %1813 = vmatmul.mubr.f32.gmra.mrb[0].mxu0 %v1065
      %v1814 = vpop.f32.mrb[0].mxu0
      %v1815 = vadd.f32 0.0, %v1814
      %v1816 = vpop.f32.mrb[0].mxu0
      %1817 = vmatprep.mubr.f32.mxu0 %v1371
      %1818 = vmatmul.mubr.f32.gmra.mrb[0].mxu0 %v1067
      %v1819 = vpop.f32.mrb[0].mxu0
      %v1820 = vadd.f32 0.0, %v1819
      %v1821 = vpop.f32.mrb[0].mxu0
      %1822 = vmatprep.mubr.f32.mxu0 %v1373
      %1823 = vmatmul.mubr.f32.gmra.mrb[0].mxu0 %v1069
      %v1824 = vpop.f32.mrb[0].mxu0
      %v1825 = vadd.f32 0.0, %v1824
      %v1826 = vpop.f32.mrb[0].mxu0
      %1827 = vmatprep.mubr.f32.mxu0 %v1375
      %1828 = vmatmul.mubr.f32.gmra.mrb[0].mxu0 %v1071
      %v1829 = vpop.f32.mrb[0].mxu0
      %v1830 = vadd.f32 0.0, %v1829
      %v1831 = vpop.f32.mrb[0].mxu0
      %1832 = vmatprep.mubr.f32.mxu0 %v1377
      %1833 = vmatmul.mubr.f32.gmra.mrb[0].mxu0 %v1073
      %v1834 = vpop.f32.mrb[0].mxu0
      %v1835 = vadd.f32 0.0, %v1834
      %v1836 = vpop.f32.mrb[0].mxu0
      %1837 = vmatprep.mubr.f32.mxu0 %v1379
      %1838 = vmatmul.mubr.f32.gmra.mrb[0].mxu0 %v1075
      %v1839 = vpop.f32.mrb[0].mxu0
      %v1840 = vadd.f32 0.0, %v1839
      %v1841 = vpop.f32.mrb[0].mxu0
      %1842 = vmatprep.mubr.f32.mxu0 %v1381
      %1843 = vmatmul.mubr.f32.gmra.mrb[0].mxu0 %v1077
      %v1844 = vpop.f32.mrb[0].mxu0
      %v1845 = vadd.f32 0.0, %v1844
      %v1846 = vpop.f32.mrb[0].mxu0
      %1847 = vmatprep.mubr.f32.mxu0 %v1383
      %1848 = vmatmul.mubr.f32.gmra.mrb[0].mxu0 %v1079
      %v1849 = vpop.f32.mrb[0].mxu0
      %v1850 = vadd.f32 0.0, %v1849
      %v1851 = vpop.f32.mrb[0].mxu0
      %1852 = vmatprep.mubr.f32.mxu0 %v1385
      %1853 = vmatmul.mubr.f32.gmra.mrb[0].mxu0 %v1081
      %v1854 = vpop.f32.mrb[0].mxu0
      %v1855 = vadd.f32 0.0, %v1854
      %v1856 = vpop.f32.mrb[0].mxu0
      %1857 = vmatprep.mubr.f32.mxu0 %v1387
      %1858 = vmatmul.mubr.f32.gmra.mrb[0].mxu0 %v1083
      %v1859 = vpop.f32.mrb[0].mxu0
      %v1860 = vadd.f32 0.0, %v1859
      %v1861 = vpop.f32.mrb[0].mxu0
      %1862 = vmatprep.mubr.f32.mxu0 %v1389
      %1863 = vmatmul.mubr.f32.gmra.mrb[0].mxu0 %v1085
      %v1864 = vpop.f32.mrb[0].mxu0
      %v1865 = vadd.f32 0.0, %v1864
      %v1866 = vpop.f32.mrb[0].mxu0
      %1867 = vmatprep.mubr.f32.mxu0 %v1391
      %1868 = vmatmul.mubr.f32.gmra.mrb[0].mxu0 %v1087
      %v1869 = vpop.f32.mrb[0].mxu0
      %v1870 = vadd.f32 0.0, %v1869
      %v1871 = vpop.f32.mrb[0].mxu0
      %1872 = vmatprep.mubr.f32.mxu0 %v1393
      %1873 = vmatmul.mubr.f32.gmra.mrb[0].mxu0 %v1089
      %v1874 = vpop.f32.mrb[0].mxu0
      %v1875 = vadd.f32 0.0, %v1874
      %v1876 = vpop.f32.mrb[0].mxu0
      %1877 = vmatprep.mubr.f32.mxu0 %v1395
      %1878 = vmatmul.mubr.f32.gmra.mrb[0].mxu0 %v1091
      %v1879 = vpop.f32.mrb[0].mxu0
      %v1880 = vadd.f32 0.0, %v1879
      %v1881 = vpop.f32.mrb[0].mxu0
      %1882 = vmatprep.mubr.f32.mxu0 %v1397
      %1883 = vmatmul.mubr.f32.gmra.mrb[0].mxu0 %v1093
      %v1884 = vpop.f32.mrb[0].mxu0
      %v1885 = vadd.f32 0.0, %v1884
      %v1886 = vpop.f32.mrb[0].mxu0
      %1887 = vmatprep.mubr.f32.mxu0 %v1399
      %1888 = vmatmul.mubr.f32.gmra.mrb[0].mxu0 %v1095
      %v1889 = vpop.f32.mrb[0].mxu0
      %v1890 = vadd.f32 0.0, %v1889
      %v1891 = vpop.f32.mrb[0].mxu0
      %1892 = vmatprep.mubr.f32.mxu0 %v1401
      %1893 = vmatmul.mubr.f32.gmra.mrb[0].mxu0 %v1097
      %v1894 = vpop.f32.mrb[0].mxu0
      %v1895 = vadd.f32 0.0, %v1894
      %v1896 = vpop.f32.mrb[0].mxu0
      %1897 = vmatprep.mubr.f32.mxu0 %v1403
      %1898 = vmatmul.mubr.f32.gmra.mrb[0].mxu0 %v1099
      %v1899 = vpop.f32.mrb[0].mxu0
      %v1900 = vadd.f32 0.0, %v1899
      %v1901 = vpop.f32.mrb[0].mxu0
      %1902 = vmatprep.mubr.f32.mxu0 %v1405
      %1903 = vmatmul.mubr.f32.gmra.mrb[0].mxu0 %v1101
      %v1904 = vpop.f32.mrb[0].mxu0
      %v1905 = vadd.f32 0.0, %v1904
      %v1906 = vpop.f32.mrb[0].mxu0
      %1907 = vmatprep.mubr.f32.mxu0 %v1407
      %1908 = vmatmul.mubr.f32.gmra.mrb[0].mxu0 %v1103
      %v1909 = vpop.f32.mrb[0].mxu0
      %v1910 = vadd.f32 0.0, %v1909
      %v1911 = vpop.f32.mrb[0].mxu0
      %1912 = vmatprep.mubr.f32.mxu0 %v1409
      %1913 = vmatmul.mubr.f32.gmra.mrb[0].mxu0 %v1105
      %v1914 = vpop.f32.mrb[0].mxu0
      %v1915 = vadd.f32 0.0, %v1914
      %v1916 = vpop.f32.mrb[0].mxu0
      %1917 = vmatprep.mubr.f32.mxu0 %v1411
      %1918 = vmatmul.mubr.f32.gmra.mrb[0].mxu0 %v1107
      %v1919 = vpop.f32.mrb[0].mxu0
      %v1920 = vadd.f32 0.0, %v1919
      %v1921 = vpop.f32.mrb[0].mxu0
      %1922 = vmatprep.mubr.f32.mxu0 %v1413
      %1923 = vmatmul.mubr.f32.gmra.mrb[0].mxu0 %v1109
      %v1924 = vpop.f32.mrb[0].mxu0
      %v1925 = vadd.f32 0.0, %v1924
      %v1926 = vpop.f32.mrb[0].mxu0
      %1927 = vmatprep.mubr.f32.mxu0 %v1415
      %1928 = vmatmul.mubr.f32.gmra.mrb[0].mxu0 %v1111
      %v1929 = vpop.f32.mrb[0].mxu0
      %v1930 = vadd.f32 0.0, %v1929
      %v1931 = vpop.f32.mrb[0].mxu0
      %1932 = vdwg.mxu0
      %1933 = vmatprep.subr.mxu0 0.0
      %1934 = vmatpush1.msra.mxu0 %v1596
      %1935 = vmatprep.subr.mxu0 0.0
      %1936 = vmatpush1.msra.mxu0 %v1597
      %1937 = vmatprep.subr.mxu0 0.0
      %1938 = vmatpush1.msra.mxu0 %v1598
      %1939 = vmatprep.subr.mxu0 0.0
      %1940 = vmatpush1.msra.mxu0 %v1599
      %1941 = vmatprep.subr.mxu0 0.0
      %1942 = vmatpush1.msra.mxu0 %v1600
      %1943 = vmatprep.subr.mxu0 0.0
      %1944 = vmatpush1.msra.mxu0 %v1601
      %1945 = vmatprep.subr.mxu0 0.0
      %1946 = vmatpush1.msra.mxu0 %v1602
      %1947 = vmatprep.subr.mxu0 0.0
      %1948 = vmatpush1.msra.mxu0 %v1603
      %1949 = vmatprep.subr.mxu0 0.0
      %1950 = vmatpush1.msra.mxu0 %v1604
      %1951 = vmatprep.subr.mxu0 0.0
      %1952 = vmatpush1.msra.mxu0 %v1605
      %1953 = vmatprep.subr.mxu0 0.0
      %1954 = vmatpush1.msra.mxu0 %v1606
      %1955 = vmatprep.subr.mxu0 0.0
      %1956 = vmatpush1.msra.mxu0 %v1607
      %1957 = vmatprep.subr.mxu0 0.0
      %1958 = vmatpush1.msra.mxu0 %v1608
      %1959 = vmatprep.subr.mxu0 0.0
      %1960 = vmatpush1.msra.mxu0 %v1609
      %1961 = vmatprep.subr.mxu0 0.0
      %1962 = vmatpush1.msra.mxu0 %v1610
      %1963 = vmatprep.subr.mxu0 0.0
      %1964 = vmatpush1.msra.mxu0 %v1611
      %1965 = vmatprep.subr.mxu0 0.0
      %1966 = vmatpush1.msra.mxu0 %v1612
      %1967 = vmatprep.subr.mxu0 0.0
      %1968 = vmatpush1.msra.mxu0 %v1613
      %1969 = vmatprep.subr.mxu0 0.0
      %1970 = vmatpush1.msra.mxu0 %v1614
      %1971 = vmatprep.subr.mxu0 0.0
      %1972 = vmatpush1.msra.mxu0 %v1615
      %1973 = vmatprep.subr.mxu0 0.0
      %1974 = vmatpush1.msra.mxu0 %v1616
      %1975 = vmatprep.subr.mxu0 0.0
      %1976 = vmatpush1.msra.mxu0 %v1617
      %1977 = vmatprep.subr.mxu0 0.0
      %1978 = vmatpush1.msra.mxu0 %v1618
      %1979 = vmatprep.subr.mxu0 0.0
      %1980 = vmatpush1.msra.mxu0 %v1619
      %1981 = vmatprep.subr.mxu0 0.0
      %1982 = vmatpush1.msra.mxu0 %v1620
      %1983 = vmatprep.subr.mxu0 0.0
      %1984 = vmatpush1.msra.mxu0 %v1621
      %1985 = vmatprep.subr.mxu0 0.0
      %1986 = vmatpush1.msra.mxu0 %v1622
      %1987 = vmatprep.subr.mxu0 0.0
      %1988 = vmatpush1.msra.mxu0 %v1623
      %1989 = vmatprep.subr.mxu0 0.0
      %1990 = vmatpush1.msra.mxu0 %v1624
      %1991 = vmatprep.subr.mxu0 0.0
      %1992 = vmatpush1.msra.mxu0 %v1625
      %1993 = vmatprep.subr.mxu0 0.0
      %1994 = vmatpush1.msra.mxu0 %v1626
      %1995 = vmatprep.subr.mxu0 0.0
      %1996 = vmatpush1.msra.mxu0 %v1627
      %1997 = vmatprep.mubr.f32.mxu0 %v1149
      %1998 = vmatmul.mubr.f32.gmra.mrb[0].mxu0 %v1451
      %v1999 = vpop.f32.mrb[0].mxu0
      %v2000 = vadd.f32 %v1775, %v1999
      %v2001 = vpop.f32.mrb[0].mxu0
      %2002 = vmatprep.mubr.f32.mxu0 %v1055
      %2003 = vmatmul.mubr.f32.gmra.mrb[0].mxu0 %v1453
      %v2004 = vpop.f32.mrb[0].mxu0
      %v2005 = vadd.f32 %v1780, %v2004
      %v2006 = vpop.f32.mrb[0].mxu0
      %2007 = vmatprep.mubr.f32.mxu0 %v1057
      %2008 = vmatmul.mubr.f32.gmra.mrb[0].mxu0 %v1455
      %v2009 = vpop.f32.mrb[0].mxu0
      %v2010 = vadd.f32 %v1785, %v2009
      %v2011 = vpop.f32.mrb[0].mxu0
      %2012 = vmatprep.mubr.f32.mxu0 %v1059
      %2013 = vmatmul.mubr.f32.gmra.mrb[0].mxu0 %v1457
      %v2014 = vpop.f32.mrb[0].mxu0
      %v2015 = vadd.f32 %v1790, %v2014
      %v2016 = vpop.f32.mrb[0].mxu0
      %2017 = vmatprep.mubr.f32.mxu0 %v1061
      %2018 = vmatmul.mubr.f32.gmra.mrb[0].mxu0 %v1459
      %v2019 = vpop.f32.mrb[0].mxu0
      %v2020 = vadd.f32 %v1795, %v2019
      %v2021 = vpop.f32.mrb[0].mxu0
      %2022 = vmatprep.mubr.f32.mxu0 %v1063
      %2023 = vmatmul.mubr.f32.gmra.mrb[0].mxu0 %v1461
      %v2024 = vpop.f32.mrb[0].mxu0
      %v2025 = vadd.f32 %v1800, %v2024
      %v2026 = vpop.f32.mrb[0].mxu0
      %2027 = vmatprep.mubr.f32.mxu0 %v1065
      %2028 = vmatmul.mubr.f32.gmra.mrb[0].mxu0 %v1463
      %v2029 = vpop.f32.mrb[0].mxu0
      %v2030 = vadd.f32 %v1805, %v2029
      %v2031 = vpop.f32.mrb[0].mxu0
      %2032 = vmatprep.mubr.f32.mxu0 %v1067
      %2033 = vmatmul.mubr.f32.gmra.mrb[0].mxu0 %v1465
      %v2034 = vpop.f32.mrb[0].mxu0
      %v2035 = vadd.f32 %v1810, %v2034
      %v2036 = vpop.f32.mrb[0].mxu0
      %2037 = vmatprep.mubr.f32.mxu0 %v1069
      %2038 = vmatmul.mubr.f32.gmra.mrb[0].mxu0 %v1467
      %v2039 = vpop.f32.mrb[0].mxu0
      %v2040 = vadd.f32 %v1815, %v2039
      %v2041 = vpop.f32.mrb[0].mxu0
      %2042 = vmatprep.mubr.f32.mxu0 %v1071
      %2043 = vmatmul.mubr.f32.gmra.mrb[0].mxu0 %v1469
      %v2044 = vpop.f32.mrb[0].mxu0
      %v2045 = vadd.f32 %v1820, %v2044
      %v2046 = vpop.f32.mrb[0].mxu0
      %2047 = vmatprep.mubr.f32.mxu0 %v1073
      %2048 = vmatmul.mubr.f32.gmra.mrb[0].mxu0 %v1471
      %v2049 = vpop.f32.mrb[0].mxu0
      %v2050 = vadd.f32 %v1825, %v2049
      %v2051 = vpop.f32.mrb[0].mxu0
      %2052 = vmatprep.mubr.f32.mxu0 %v1075
      %2053 = vmatmul.mubr.f32.gmra.mrb[0].mxu0 %v1473
      %v2054 = vpop.f32.mrb[0].mxu0
      %v2055 = vadd.f32 %v1830, %v2054
      %v2056 = vpop.f32.mrb[0].mxu0
      %2057 = vmatprep.mubr.f32.mxu0 %v1077
      %2058 = vmatmul.mubr.f32.gmra.mrb[0].mxu0 %v1475
      %v2059 = vpop.f32.mrb[0].mxu0
      %v2060 = vadd.f32 %v1835, %v2059
      %v2061 = vpop.f32.mrb[0].mxu0
      %2062 = vmatprep.mubr.f32.mxu0 %v1079
      %2063 = vmatmul.mubr.f32.gmra.mrb[0].mxu0 %v1477
      %v2064 = vpop.f32.mrb[0].mxu0
      %v2065 = vadd.f32 %v1840, %v2064
      %v2066 = vpop.f32.mrb[0].mxu0
      %2067 = vmatprep.mubr.f32.mxu0 %v1081
      %2068 = vmatmul.mubr.f32.gmra.mrb[0].mxu0 %v1479
      %v2069 = vpop.f32.mrb[0].mxu0
      %v2070 = vadd.f32 %v1845, %v2069
      %v2071 = vpop.f32.mrb[0].mxu0
      %2072 = vmatprep.mubr.f32.mxu0 %v1083
      %2073 = vmatmul.mubr.f32.gmra.mrb[0].mxu0 %v1481
      %v2074 = vpop.f32.mrb[0].mxu0
      %v2075 = vadd.f32 %v1850, %v2074
      %v2076 = vpop.f32.mrb[0].mxu0
      %2077 = vmatprep.mubr.f32.mxu0 %v1085
      %2078 = vmatmul.mubr.f32.gmra.mrb[0].mxu0 %v1483
      %v2079 = vpop.f32.mrb[0].mxu0
      %v2080 = vadd.f32 %v1855, %v2079
      %v2081 = vpop.f32.mrb[0].mxu0
      %2082 = vmatprep.mubr.f32.mxu0 %v1087
      %2083 = vmatmul.mubr.f32.gmra.mrb[0].mxu0 %v1485
      %v2084 = vpop.f32.mrb[0].mxu0
      %v2085 = vadd.f32 %v1860, %v2084
      %v2086 = vpop.f32.mrb[0].mxu0
      %2087 = vmatprep.mubr.f32.mxu0 %v1089
      %2088 = vmatmul.mubr.f32.gmra.mrb[0].mxu0 %v1487
      %v2089 = vpop.f32.mrb[0].mxu0
      %v2090 = vadd.f32 %v1865, %v2089
      %v2091 = vpop.f32.mrb[0].mxu0
      %2092 = vmatprep.mubr.f32.mxu0 %v1091
      %2093 = vmatmul.mubr.f32.gmra.mrb[0].mxu0 %v1489
      %v2094 = vpop.f32.mrb[0].mxu0
      %v2095 = vadd.f32 %v1870, %v2094
      %v2096 = vpop.f32.mrb[0].mxu0
      %2097 = vmatprep.mubr.f32.mxu0 %v1093
      %2098 = vmatmul.mubr.f32.gmra.mrb[0].mxu0 %v1491
      %v2099 = vpop.f32.mrb[0].mxu0
      %v2100 = vadd.f32 %v1875, %v2099
      %v2101 = vpop.f32.mrb[0].mxu0
      %2102 = vmatprep.mubr.f32.mxu0 %v1095
      %2103 = vmatmul.mubr.f32.gmra.mrb[0].mxu0 %v1493
      %v2104 = vpop.f32.mrb[0].mxu0
      %v2105 = vadd.f32 %v1880, %v2104
      %v2106 = vpop.f32.mrb[0].mxu0
      %2107 = vmatprep.mubr.f32.mxu0 %v1097
      %2108 = vmatmul.mubr.f32.gmra.mrb[0].mxu0 %v1495
      %v2109 = vpop.f32.mrb[0].mxu0
      %v2110 = vadd.f32 %v1885, %v2109
      %v2111 = vpop.f32.mrb[0].mxu0
      %2112 = vmatprep.mubr.f32.mxu0 %v1099
      %2113 = vmatmul.mubr.f32.gmra.mrb[0].mxu0 %v1497
      %v2114 = vpop.f32.mrb[0].mxu0
      %v2115 = vadd.f32 %v1890, %v2114
      %v2116 = vpop.f32.mrb[0].mxu0
      %2117 = vmatprep.mubr.f32.mxu0 %v1101
      %2118 = vmatmul.mubr.f32.gmra.mrb[0].mxu0 %v1499
      %v2119 = vpop.f32.mrb[0].mxu0
      %v2120 = vadd.f32 %v1895, %v2119
      %v2121 = vpop.f32.mrb[0].mxu0
      %2122 = vmatprep.mubr.f32.mxu0 %v1103
      %2123 = vmatmul.mubr.f32.gmra.mrb[0].mxu0 %v1501
      %v2124 = vpop.f32.mrb[0].mxu0
      %v2125 = vadd.f32 %v1900, %v2124
      %v2126 = vpop.f32.mrb[0].mxu0
      %2127 = vmatprep.mubr.f32.mxu0 %v1105
      %2128 = vmatmul.mubr.f32.gmra.mrb[0].mxu0 %v1503
      %v2129 = vpop.f32.mrb[0].mxu0
      %v2130 = vadd.f32 %v1905, %v2129
      %v2131 = vpop.f32.mrb[0].mxu0
      %2132 = vmatprep.mubr.f32.mxu0 %v1107
      %2133 = vmatmul.mubr.f32.gmra.mrb[0].mxu0 %v1505
      %v2134 = vpop.f32.mrb[0].mxu0
      %v2135 = vadd.f32 %v1910, %v2134
      %v2136 = vpop.f32.mrb[0].mxu0
      %2137 = vmatprep.mubr.f32.mxu0 %v1109
      %2138 = vmatmul.mubr.f32.gmra.mrb[0].mxu0 %v1507
      %v2139 = vpop.f32.mrb[0].mxu0
      %v2140 = vadd.f32 %v1915, %v2139
      %v2141 = vpop.f32.mrb[0].mxu0
      %2142 = vmatprep.mubr.f32.mxu0 %v1111
      %2143 = vmatmul.mubr.f32.gmra.mrb[0].mxu0 %v1509
      %v2144 = vpop.f32.mrb[0].mxu0
      %v2145 = vadd.f32 %v1920, %v2144
      %v2146 = vpop.f32.mrb[0].mxu0
      %2147 = vmatprep.mubr.f32.mxu0 %v1113
      %2148 = vmatmul.mubr.f32.gmra.mrb[0].mxu0 %v1511
      %v2149 = vpop.f32.mrb[0].mxu0
      %v2150 = vadd.f32 %v1925, %v2149
      %v2151 = vpop.f32.mrb[0].mxu0
      %2152 = vmatprep.mubr.f32.mxu0 %v1115
      %2153 = vmatmul.mubr.f32.gmra.mrb[0].mxu0 %v1513
      %v2154 = vpop.f32.mrb[0].mxu0
      %v2155 = vadd.f32 %v1930, %v2154
      %v2156 = vpop.f32.mrb[0].mxu0
      %2157 = vdwg.mxu0
      %2158 = vmatprep.subr.mxu0 0.0
      %2159 = vmatpush1.msra.mxu0 %v1628
      %2160 = vmatprep.subr.mxu0 0.0
      %2161 = vmatpush1.msra.mxu0 %v1629
      %2162 = vmatprep.subr.mxu0 0.0
      %2163 = vmatpush1.msra.mxu0 %v1630
      %2164 = vmatprep.subr.mxu0 0.0
      %2165 = vmatpush1.msra.mxu0 %v1631
      %2166 = vmatprep.subr.mxu0 0.0
      %2167 = vmatpush1.msra.mxu0 %v1632
      %2168 = vmatprep.subr.mxu0 0.0
      %2169 = vmatpush1.msra.mxu0 %v1633
      %2170 = vmatprep.subr.mxu0 0.0
      %2171 = vmatpush1.msra.mxu0 %v1634
      %2172 = vmatprep.subr.mxu0 0.0
      %2173 = vmatpush1.msra.mxu0 %v1635
      %2174 = vmatprep.subr.mxu0 0.0
      %2175 = vmatpush1.msra.mxu0 %v1636
      %2176 = vmatprep.subr.mxu0 0.0
      %2177 = vmatpush1.msra.mxu0 %v1637
      %2178 = vmatprep.subr.mxu0 0.0
      %2179 = vmatpush1.msra.mxu0 %v1638
      %2180 = vmatprep.subr.mxu0 0.0
      %2181 = vmatpush1.msra.mxu0 %v1639
      %2182 = vmatprep.subr.mxu0 0.0
      %2183 = vmatpush1.msra.mxu0 %v1640
      %2184 = vmatprep.subr.mxu0 0.0
      %2185 = vmatpush1.msra.mxu0 %v1641
      %2186 = vmatprep.subr.mxu0 0.0
      %2187 = vmatpush1.msra.mxu0 %v1642
      %2188 = vmatprep.subr.mxu0 0.0
      %2189 = vmatpush1.msra.mxu0 %v1643
      %2190 = vmatprep.subr.mxu0 0.0
      %2191 = vmatpush1.msra.mxu0 %v1644
      %2192 = vmatprep.subr.mxu0 0.0
      %2193 = vmatpush1.msra.mxu0 %v1645
      %2194 = vmatprep.subr.mxu0 0.0
      %2195 = vmatpush1.msra.mxu0 %v1646
      %2196 = vmatprep.subr.mxu0 0.0
      %2197 = vmatpush1.msra.mxu0 %v1647
      %2198 = vmatprep.subr.mxu0 0.0
      %2199 = vmatpush1.msra.mxu0 %v1648
      %2200 = vmatprep.subr.mxu0 0.0
      %2201 = vmatpush1.msra.mxu0 %v1649
      %2202 = vmatprep.subr.mxu0 0.0
      %2203 = vmatpush1.msra.mxu0 %v1650
      %2204 = vmatprep.subr.mxu0 0.0
      %2205 = vmatpush1.msra.mxu0 %v1651
      %2206 = vmatprep.subr.mxu0 0.0
      %2207 = vmatpush1.msra.mxu0 %v1652
      %2208 = vmatprep.subr.mxu0 0.0
      %2209 = vmatpush1.msra.mxu0 %v1653
      %2210 = vmatprep.subr.mxu0 0.0
      %2211 = vmatpush1.msra.mxu0 %v1654
      %2212 = vmatprep.subr.mxu0 0.0
      %2213 = vmatpush1.msra.mxu0 %v1655
      %2214 = vmatprep.subr.mxu0 0.0
      %2215 = vmatpush1.msra.mxu0 %v1656
      %2216 = vmatprep.subr.mxu0 0.0
      %2217 = vmatpush1.msra.mxu0 %v1657
      %2218 = vmatprep.subr.mxu0 0.0
      %2219 = vmatpush1.msra.mxu0 %v1658
      %2220 = vmatprep.subr.mxu0 0.0
      %2221 = vmatpush1.msra.mxu0 %v1659
      %2222 = vmatprep.mubr.f32.mxu0 %v1455
      %2223 = vmatmul.mubr.f32.gmra.mrb[0].mxu0 %v1357
      %v2224 = vpop.f32.mrb[0].mxu0
      %v2225 = vadd.f32 %v2000, %v2224
      %v2226 = vpop.f32.mrb[0].mxu0
      %2227 = vmatprep.mubr.f32.mxu0 %v1457
      %2228 = vmatmul.mubr.f32.gmra.mrb[0].mxu0 %v1359
      %v2229 = vpop.f32.mrb[0].mxu0
      %v2230 = vadd.f32 %v2005, %v2229
      %v2231 = vpop.f32.mrb[0].mxu0
      %2232 = vmatprep.mubr.f32.mxu0 %v1459
      %2233 = vmatmul.mubr.f32.gmra.mrb[0].mxu0 %v1361
      %v2234 = vpop.f32.mrb[0].mxu0
      %v2235 = vadd.f32 %v2010, %v2234
      %v2236 = vpop.f32.mrb[0].mxu0
      %2237 = vmatprep.mubr.f32.mxu0 %v1461
      %2238 = vmatmul.mubr.f32.gmra.mrb[0].mxu0 %v1363
      %v2239 = vpop.f32.mrb[0].mxu0
      %v2240 = vadd.f32 %v2015, %v2239
      %v2241 = vpop.f32.mrb[0].mxu0
      %2242 = vmatprep.mubr.f32.mxu0 %v1463
      %2243 = vmatmul.mubr.f32.gmra.mrb[0].mxu0 %v1365
      %v2244 = vpop.f32.mrb[0].mxu0
      %v2245 = vadd.f32 %v2020, %v2244
      %v2246 = vpop.f32.mrb[0].mxu0
      %2247 = vmatprep.mubr.f32.mxu0 %v1465
      %2248 = vmatmul.mubr.f32.gmra.mrb[0].mxu0 %v1367
      %v2249 = vpop.f32.mrb[0].mxu0
      %v2250 = vadd.f32 %v2025, %v2249
      %v2251 = vpop.f32.mrb[0].mxu0
      %2252 = vmatprep.mubr.f32.mxu0 %v1467
      %2253 = vmatmul.mubr.f32.gmra.mrb[0].mxu0 %v1369
      %v2254 = vpop.f32.mrb[0].mxu0
      %v2255 = vadd.f32 %v2030, %v2254
      %v2256 = vpop.f32.mrb[0].mxu0
      %2257 = vmatprep.mubr.f32.mxu0 %v1469
      %2258 = vmatmul.mubr.f32.gmra.mrb[0].mxu0 %v1371
      %v2259 = vpop.f32.mrb[0].mxu0
      %v2260 = vadd.f32 %v2035, %v2259
      %v2261 = vpop.f32.mrb[0].mxu0
      %2262 = vmatprep.mubr.f32.mxu0 %v1471
      %2263 = vmatmul.mubr.f32.gmra.mrb[0].mxu0 %v1373
      %v2264 = vpop.f32.mrb[0].mxu0
      %v2265 = vadd.f32 %v2040, %v2264
      %v2266 = vpop.f32.mrb[0].mxu0
      %2267 = vmatprep.mubr.f32.mxu0 %v1473
      %2268 = vmatmul.mubr.f32.gmra.mrb[0].mxu0 %v1375
      %v2269 = vpop.f32.mrb[0].mxu0
      %v2270 = vadd.f32 %v2045, %v2269
      %v2271 = vpop.f32.mrb[0].mxu0
      %2272 = vmatprep.mubr.f32.mxu0 %v1475
      %2273 = vmatmul.mubr.f32.gmra.mrb[0].mxu0 %v1377
      %v2274 = vpop.f32.mrb[0].mxu0
      %v2275 = vadd.f32 %v2050, %v2274
      %v2276 = vpop.f32.mrb[0].mxu0
      %2277 = vmatprep.mubr.f32.mxu0 %v1477
      %2278 = vmatmul.mubr.f32.gmra.mrb[0].mxu0 %v1379
      %v2279 = vpop.f32.mrb[0].mxu0
      %v2280 = vadd.f32 %v2055, %v2279
      %v2281 = vpop.f32.mrb[0].mxu0
      %2282 = vmatprep.mubr.f32.mxu0 %v1479
      %2283 = vmatmul.mubr.f32.gmra.mrb[0].mxu0 %v1381
      %v2284 = vpop.f32.mrb[0].mxu0
      %v2285 = vadd.f32 %v2060, %v2284
      %v2286 = vpop.f32.mrb[0].mxu0
      %2287 = vmatprep.mubr.f32.mxu0 %v1481
      %2288 = vmatmul.mubr.f32.gmra.mrb[0].mxu0 %v1383
      %v2289 = vpop.f32.mrb[0].mxu0
      %v2290 = vadd.f32 %v2065, %v2289
      %v2291 = vpop.f32.mrb[0].mxu0
      %2292 = vmatprep.mubr.f32.mxu0 %v1483
      %2293 = vmatmul.mubr.f32.gmra.mrb[0].mxu0 %v1385
      %v2294 = vpop.f32.mrb[0].mxu0
      %v2295 = vadd.f32 %v2070, %v2294
      %v2296 = vpop.f32.mrb[0].mxu0
      %2297 = vmatprep.mubr.f32.mxu0 %v1485
      %2298 = vmatmul.mubr.f32.gmra.mrb[0].mxu0 %v1387
      %v2299 = vpop.f32.mrb[0].mxu0
      %v2300 = vadd.f32 %v2075, %v2299
      %v2301 = vpop.f32.mrb[0].mxu0
      %2302 = vmatprep.mubr.f32.mxu0 %v1487
      %2303 = vmatmul.mubr.f32.gmra.mrb[0].mxu0 %v1389
      %v2304 = vpop.f32.mrb[0].mxu0
      %v2305 = vadd.f32 %v2080, %v2304
      %v2306 = vpop.f32.mrb[0].mxu0
      %2307 = vmatprep.mubr.f32.mxu0 %v1489
      %2308 = vmatmul.mubr.f32.gmra.mrb[0].mxu0 %v1391
      %v2309 = vpop.f32.mrb[0].mxu0
      %v2310 = vadd.f32 %v2085, %v2309
      %v2311 = vpop.f32.mrb[0].mxu0
      %2312 = vmatprep.mubr.f32.mxu0 %v1491
      %2313 = vmatmul.mubr.f32.gmra.mrb[0].mxu0 %v1393
      %v2314 = vpop.f32.mrb[0].mxu0
      %v2315 = vadd.f32 %v2090, %v2314
      %v2316 = vpop.f32.mrb[0].mxu0
      %2317 = vmatprep.mubr.f32.mxu0 %v1493
      %2318 = vmatmul.mubr.f32.gmra.mrb[0].mxu0 %v1395
      %v2319 = vpop.f32.mrb[0].mxu0
      %v2320 = vadd.f32 %v2095, %v2319
      %v2321 = vpop.f32.mrb[0].mxu0
      %2322 = vmatprep.mubr.f32.mxu0 %v1495
      %2323 = vmatmul.mubr.f32.gmra.mrb[0].mxu0 %v1397
      %v2324 = vpop.f32.mrb[0].mxu0
      %v2325 = vadd.f32 %v2100, %v2324
      %v2326 = vpop.f32.mrb[0].mxu0
      %2327 = vmatprep.mubr.f32.mxu0 %v1497
      %2328 = vmatmul.mubr.f32.gmra.mrb[0].mxu0 %v1399
      %v2329 = vpop.f32.mrb[0].mxu0
      %v2330 = vadd.f32 %v2105, %v2329
      %v2331 = vpop.f32.mrb[0].mxu0
      %2332 = vmatprep.mubr.f32.mxu0 %v1499
      %2333 = vmatmul.mubr.f32.gmra.mrb[0].mxu0 %v1401
      %v2334 = vpop.f32.mrb[0].mxu0
      %v2335 = vadd.f32 %v2110, %v2334
      %v2336 = vpop.f32.mrb[0].mxu0
      %2337 = vmatprep.mubr.f32.mxu0 %v1501
      %2338 = vmatmul.mubr.f32.gmra.mrb[0].mxu0 %v1403
      %v2339 = vpop.f32.mrb[0].mxu0
      %v2340 = vadd.f32 %v2115, %v2339
      %v2341 = vpop.f32.mrb[0].mxu0
      %2342 = vmatprep.mubr.f32.mxu0 %v1503
      %2343 = vmatmul.mubr.f32.gmra.mrb[0].mxu0 %v1405
      %v2344 = vpop.f32.mrb[0].mxu0
      %v2345 = vadd.f32 %v2120, %v2344
      %v2346 = vpop.f32.mrb[0].mxu0
      %2347 = vmatprep.mubr.f32.mxu0 %v1505
      %2348 = vmatmul.mubr.f32.gmra.mrb[0].mxu0 %v1407
      %v2349 = vpop.f32.mrb[0].mxu0
      %v2350 = vadd.f32 %v2125, %v2349
      %v2351 = vpop.f32.mrb[0].mxu0
      %2352 = vmatprep.mubr.f32.mxu0 %v1507
      %2353 = vmatmul.mubr.f32.gmra.mrb[0].mxu0 %v1409
      %v2354 = vpop.f32.mrb[0].mxu0
      %v2355 = vadd.f32 %v2130, %v2354
      %v2356 = vpop.f32.mrb[0].mxu0
      %2357 = vmatprep.mubr.f32.mxu0 %v1509
      %2358 = vmatmul.mubr.f32.gmra.mrb[0].mxu0 %v1411
      %v2359 = vpop.f32.mrb[0].mxu0
      %v2360 = vadd.f32 %v2135, %v2359
      %v2361 = vpop.f32.mrb[0].mxu0
      %2362 = vmatprep.mubr.f32.mxu0 %v1511
      %2363 = vmatmul.mubr.f32.gmra.mrb[0].mxu0 %v1413
      %v2364 = vpop.f32.mrb[0].mxu0
      %v2365 = vadd.f32 %v2140, %v2364
      %v2366 = vpop.f32.mrb[0].mxu0
      %2367 = vmatprep.mubr.f32.mxu0 %v1513
      %2368 = vmatmul.mubr.f32.gmra.mrb[0].mxu0 %v1415
      %v2369 = vpop.f32.mrb[0].mxu0
      %v2370 = vadd.f32 %v2145, %v2369
      %v2371 = vpop.f32.mrb[0].mxu0
      %2372 = vmatprep.mubr.f32.mxu0 %v1555
      %2373 = vmatmul.mubr.f32.gmra.mrb[0].mxu0 %v1548
      %v2374 = vpop.f32.mrb[0].mxu0
      %v2375 = vadd.f32 %v2150, %v2374
      %v2376 = vpop.f32.mrb[0].mxu0
      %2377 = vmatprep.mubr.f32.mxu0 %v1557
      %2378 = vmatmul.mubr.f32.gmra.mrb[0].mxu0 %v1550
      %v2379 = vpop.f32.mrb[0].mxu0
      %v2380 = vadd.f32 %v2155, %v2379
      %v2381 = vpop.f32.mrb[0].mxu0
      %2382 = vdwg.mxu0
      %2383 = vmatprep.subr.mxu0 0.0
      %2384 = vmatpush1.msra.mxu0 %v1660
      %2385 = vmatprep.subr.mxu0 0.0
      %2386 = vmatpush1.msra.mxu0 %v1661
      %2387 = vmatprep.subr.mxu0 0.0
      %2388 = vmatpush1.msra.mxu0 %v1662
      %2389 = vmatprep.subr.mxu0 0.0
      %2390 = vmatpush1.msra.mxu0 %v1663
      %2391 = vmatprep.subr.mxu0 0.0
      %2392 = vmatpush1.msra.mxu0 %v1664
      %2393 = vmatprep.subr.mxu0 0.0
      %2394 = vmatpush1.msra.mxu0 %v1665
      %2395 = vmatprep.subr.mxu0 0.0
      %2396 = vmatpush1.msra.mxu0 %v1666
      %2397 = vmatprep.subr.mxu0 0.0
      %2398 = vmatpush1.msra.mxu0 %v1667
      %2399 = vmatprep.subr.mxu0 0.0
      %2400 = vmatpush1.msra.mxu0 %v1668
      %2401 = vmatprep.subr.mxu0 0.0
      %2402 = vmatpush1.msra.mxu0 %v1669
      %2403 = vmatprep.subr.mxu0 0.0
      %2404 = vmatpush1.msra.mxu0 %v1670
      %2405 = vmatprep.subr.mxu0 0.0
      %2406 = vmatpush1.msra.mxu0 %v1671
      %2407 = vmatprep.subr.mxu0 0.0
      %2408 = vmatpush1.msra.mxu0 %v1672
      %2409 = vmatprep.subr.mxu0 0.0
      %2410 = vmatpush1.msra.mxu0 %v1673
      %2411 = vmatprep.subr.mxu0 0.0
      %2412 = vmatpush1.msra.mxu0 %v1674
      %2413 = vmatprep.subr.mxu0 0.0
      %2414 = vmatpush1.msra.mxu0 %v1675
      %2415 = vmatprep.subr.mxu0 0.0
      %2416 = vmatpush1.msra.mxu0 %v1676
      %2417 = vmatprep.subr.mxu0 0.0
      %2418 = vmatpush1.msra.mxu0 %v1677
      %2419 = vmatprep.subr.mxu0 0.0
      %2420 = vmatpush1.msra.mxu0 %v1678
      %2421 = vmatprep.subr.mxu0 0.0
      %2422 = vmatpush1.msra.mxu0 %v1679
      %2423 = vmatprep.subr.mxu0 0.0
      %2424 = vmatpush1.msra.mxu0 %v1680
      %2425 = vmatprep.subr.mxu0 0.0
      %2426 = vmatpush1.msra.mxu0 %v1681
      %2427 = vmatprep.subr.mxu0 0.0
      %2428 = vmatpush1.msra.mxu0 %v1682
      %2429 = vmatprep.subr.mxu0 0.0
      %2430 = vmatpush1.msra.mxu0 %v1683
      %2431 = vmatprep.subr.mxu0 0.0
      %2432 = vmatpush1.msra.mxu0 %v1684
      %2433 = vmatprep.subr.mxu0 0.0
      %2434 = vmatpush1.msra.mxu0 %v1685
      %2435 = vmatprep.subr.mxu0 0.0
      %2436 = vmatpush1.msra.mxu0 %v1686
      %2437 = vmatprep.subr.mxu0 0.0
      %2438 = vmatpush1.msra.mxu0 %v1687
      %2439 = vmatprep.subr.mxu0 0.0
      %2440 = vmatpush1.msra.mxu0 %v1688
      %2441 = vmatprep.subr.mxu0 0.0
      %2442 = vmatpush1.msra.mxu0 %v1689
      %2443 = vmatprep.subr.mxu0 0.0
      %2444 = vmatpush1.msra.mxu0 %v1690
      %2445 = vmatprep.subr.mxu0 0.0
      %2446 = vmatpush1.msra.mxu0 %v1691
      %2447 = vmatprep.mubr.f32.mxu0 %v1361
      %2448 = vmatmul.mubr.f32.gmra.mrb[0].mxu0 %v1057
      %v2449 = vpop.f32.mrb[0].mxu0
      %v2450 = vadd.f32 %v2225, %v2449
      %v2451 = vpop.f32.mrb[0].mxu0
      %2452 = vmatprep.mubr.f32.mxu0 %v1363
      %2453 = vmatmul.mubr.f32.gmra.mrb[0].mxu0 %v1059
      %v2454 = vpop.f32.mrb[0].mxu0
      %v2455 = vadd.f32 %v2230, %v2454
      %v2456 = vpop.f32.mrb[0].mxu0
      %2457 = vmatprep.mubr.f32.mxu0 %v1365
      %2458 = vmatmul.mubr.f32.gmra.mrb[0].mxu0 %v1061
      %v2459 = vpop.f32.mrb[0].mxu0
      %v2460 = vadd.f32 %v2235, %v2459
      %v2461 = vpop.f32.mrb[0].mxu0
      %2462 = vmatprep.mubr.f32.mxu0 %v1367
      %2463 = vmatmul.mubr.f32.gmra.mrb[0].mxu0 %v1063
      %v2464 = vpop.f32.mrb[0].mxu0
      %v2465 = vadd.f32 %v2240, %v2464
      %v2466 = vpop.f32.mrb[0].mxu0
      %2467 = vmatprep.mubr.f32.mxu0 %v1369
      %2468 = vmatmul.mubr.f32.gmra.mrb[0].mxu0 %v1065
      %v2469 = vpop.f32.mrb[0].mxu0
      %v2470 = vadd.f32 %v2245, %v2469
      %v2471 = vpop.f32.mrb[0].mxu0
      %2472 = vmatprep.mubr.f32.mxu0 %v1371
      %2473 = vmatmul.mubr.f32.gmra.mrb[0].mxu0 %v1067
      %v2474 = vpop.f32.mrb[0].mxu0
      %v2475 = vadd.f32 %v2250, %v2474
      %v2476 = vpop.f32.mrb[0].mxu0
      %2477 = vmatprep.mubr.f32.mxu0 %v1373
      %2478 = vmatmul.mubr.f32.gmra.mrb[0].mxu0 %v1069
      %v2479 = vpop.f32.mrb[0].mxu0
      %v2480 = vadd.f32 %v2255, %v2479
      %v2481 = vpop.f32.mrb[0].mxu0
      %2482 = vmatprep.mubr.f32.mxu0 %v1375
      %2483 = vmatmul.mubr.f32.gmra.mrb[0].mxu0 %v1071
      %v2484 = vpop.f32.mrb[0].mxu0
      %v2485 = vadd.f32 %v2260, %v2484
      %v2486 = vpop.f32.mrb[0].mxu0
      %2487 = vmatprep.mubr.f32.mxu0 %v1377
      %2488 = vmatmul.mubr.f32.gmra.mrb[0].mxu0 %v1073
      %v2489 = vpop.f32.mrb[0].mxu0
      %v2490 = vadd.f32 %v2265, %v2489
      %v2491 = vpop.f32.mrb[0].mxu0
      %2492 = vmatprep.mubr.f32.mxu0 %v1379
      %2493 = vmatmul.mubr.f32.gmra.mrb[0].mxu0 %v1075
      %v2494 = vpop.f32.mrb[0].mxu0
      %v2495 = vadd.f32 %v2270, %v2494
      %v2496 = vpop.f32.mrb[0].mxu0
      %2497 = vmatprep.mubr.f32.mxu0 %v1381
      %2498 = vmatmul.mubr.f32.gmra.mrb[0].mxu0 %v1077
      %v2499 = vpop.f32.mrb[0].mxu0
      %v2500 = vadd.f32 %v2275, %v2499
      %v2501 = vpop.f32.mrb[0].mxu0
      %2502 = vmatprep.mubr.f32.mxu0 %v1383
      %2503 = vmatmul.mubr.f32.gmra.mrb[0].mxu0 %v1079
      %v2504 = vpop.f32.mrb[0].mxu0
      %v2505 = vadd.f32 %v2280, %v2504
      %v2506 = vpop.f32.mrb[0].mxu0
      %2507 = vmatprep.mubr.f32.mxu0 %v1385
      %2508 = vmatmul.mubr.f32.gmra.mrb[0].mxu0 %v1081
      %v2509 = vpop.f32.mrb[0].mxu0
      %v2510 = vadd.f32 %v2285, %v2509
      %v2511 = vpop.f32.mrb[0].mxu0
      %2512 = vmatprep.mubr.f32.mxu0 %v1387
      %2513 = vmatmul.mubr.f32.gmra.mrb[0].mxu0 %v1083
      %v2514 = vpop.f32.mrb[0].mxu0
      %v2515 = vadd.f32 %v2290, %v2514
      %v2516 = vpop.f32.mrb[0].mxu0
      %2517 = vmatprep.mubr.f32.mxu0 %v1389
      %2518 = vmatmul.mubr.f32.gmra.mrb[0].mxu0 %v1085
      %v2519 = vpop.f32.mrb[0].mxu0
      %v2520 = vadd.f32 %v2295, %v2519
      %v2521 = vpop.f32.mrb[0].mxu0
      %2522 = vmatprep.mubr.f32.mxu0 %v1391
      %2523 = vmatmul.mubr.f32.gmra.mrb[0].mxu0 %v1087
      %v2524 = vpop.f32.mrb[0].mxu0
      %v2525 = vadd.f32 %v2300, %v2524
      %v2526 = vpop.f32.mrb[0].mxu0
      %2527 = vmatprep.mubr.f32.mxu0 %v1393
      %2528 = vmatmul.mubr.f32.gmra.mrb[0].mxu0 %v1089
      %v2529 = vpop.f32.mrb[0].mxu0
      %v2530 = vadd.f32 %v2305, %v2529
      %v2531 = vpop.f32.mrb[0].mxu0
      %2532 = vmatprep.mubr.f32.mxu0 %v1395
      %2533 = vmatmul.mubr.f32.gmra.mrb[0].mxu0 %v1091
      %v2534 = vpop.f32.mrb[0].mxu0
      %v2535 = vadd.f32 %v2310, %v2534
      %v2536 = vpop.f32.mrb[0].mxu0
      %2537 = vmatprep.mubr.f32.mxu0 %v1397
      %2538 = vmatmul.mubr.f32.gmra.mrb[0].mxu0 %v1093
      %v2539 = vpop.f32.mrb[0].mxu0
      %v2540 = vadd.f32 %v2315, %v2539
      %v2541 = vpop.f32.mrb[0].mxu0
      %2542 = vmatprep.mubr.f32.mxu0 %v1399
      %2543 = vmatmul.mubr.f32.gmra.mrb[0].mxu0 %v1095
      %v2544 = vpop.f32.mrb[0].mxu0
      %v2545 = vadd.f32 %v2320, %v2544
      %v2546 = vpop.f32.mrb[0].mxu0
      %2547 = vmatprep.mubr.f32.mxu0 %v1401
      %2548 = vmatmul.mubr.f32.gmra.mrb[0].mxu0 %v1097
      %v2549 = vpop.f32.mrb[0].mxu0
      %v2550 = vadd.f32 %v2325, %v2549
      %v2551 = vpop.f32.mrb[0].mxu0
      %2552 = vmatprep.mubr.f32.mxu0 %v1403
      %2553 = vmatmul.mubr.f32.gmra.mrb[0].mxu0 %v1099
      %v2554 = vpop.f32.mrb[0].mxu0
      %v2555 = vadd.f32 %v2330, %v2554
      %v2556 = vpop.f32.mrb[0].mxu0
      %2557 = vmatprep.mubr.f32.mxu0 %v1405
      %2558 = vmatmul.mubr.f32.gmra.mrb[0].mxu0 %v1101
      %v2559 = vpop.f32.mrb[0].mxu0
      %v2560 = vadd.f32 %v2335, %v2559
      %v2561 = vpop.f32.mrb[0].mxu0
      %2562 = vmatprep.mubr.f32.mxu0 %v1407
      %2563 = vmatmul.mubr.f32.gmra.mrb[0].mxu0 %v1103
      %v2564 = vpop.f32.mrb[0].mxu0
      %v2565 = vadd.f32 %v2340, %v2564
      %v2566 = vpop.f32.mrb[0].mxu0
      %2567 = vmatprep.mubr.f32.mxu0 %v1409
      %2568 = vmatmul.mubr.f32.gmra.mrb[0].mxu0 %v1105
      %v2569 = vpop.f32.mrb[0].mxu0
      %v2570 = vadd.f32 %v2345, %v2569
      %v2571 = vpop.f32.mrb[0].mxu0
      %2572 = vmatprep.mubr.f32.mxu0 %v1411
      %2573 = vmatmul.mubr.f32.gmra.mrb[0].mxu0 %v1107
      %v2574 = vpop.f32.mrb[0].mxu0
      %v2575 = vadd.f32 %v2350, %v2574
      %v2576 = vpop.f32.mrb[0].mxu0
      %2577 = vmatprep.mubr.f32.mxu0 %v1413
      %2578 = vmatmul.mubr.f32.gmra.mrb[0].mxu0 %v1109
      %v2579 = vpop.f32.mrb[0].mxu0
      %v2580 = vadd.f32 %v2355, %v2579
      %v2581 = vpop.f32.mrb[0].mxu0
      %2582 = vmatprep.mubr.f32.mxu0 %v1415
      %2583 = vmatmul.mubr.f32.gmra.mrb[0].mxu0 %v1111
      %v2584 = vpop.f32.mrb[0].mxu0
      %v2585 = vadd.f32 %v2360, %v2584
      %v2586 = vpop.f32.mrb[0].mxu0
      %2587 = vmatprep.mubr.f32.mxu0 %v1548
      %2588 = vmatmul.mubr.f32.gmra.mrb[0].mxu0 %v1113
      %v2589 = vpop.f32.mrb[0].mxu0
      %v2590 = vadd.f32 %v2365, %v2589
      %v2591 = vpop.f32.mrb[0].mxu0
      %2592 = vmatprep.mubr.f32.mxu0 %v1550
      %2593 = vmatmul.mubr.f32.gmra.mrb[0].mxu0 %v1115
      %v2594 = vpop.f32.mrb[0].mxu0
      %v2595 = vadd.f32 %v2370, %v2594
      %v2596 = vpop.f32.mrb[0].mxu0
      %2597 = vmatprep.mubr.f32.mxu0 %v1560
      %2598 = vmatmul.mubr.f32.gmra.mrb[0].mxu0 %v1150
      %v2599 = vpop.f32.mrb[0].mxu0
      %v2600 = vadd.f32 %v2375, %v2599
      %v2601 = vpop.f32.mrb[0].mxu0
      %2602 = vmatprep.mubr.f32.mxu0 %v1353
      %2603 = vmatmul.mubr.f32.gmra.mrb[0].mxu0 0.0
      %v2604 = vpop.f32.mrb[0].mxu0
      %v2605 = vadd.f32 %v2380, %v2604
      %v2606 = vpop.f32.mrb[0].mxu0
      %2607 = vdwg.mxu0
      %2608 = vmatprep.subr.mxu0 0.0
      %2609 = vmatpush1.msra.mxu0 %v1692
      %2610 = vmatprep.subr.mxu0 0.0
      %2611 = vmatpush1.msra.mxu0 %v1693
      %2612 = vmatprep.subr.mxu0 0.0
      %2613 = vmatpush1.msra.mxu0 %v1694
      %2614 = vmatprep.subr.mxu0 0.0
      %2615 = vmatpush1.msra.mxu0 %v1695
      %2616 = vmatprep.subr.mxu0 0.0
      %2617 = vmatpush1.msra.mxu0 %v1696
      %2618 = vmatprep.subr.mxu0 0.0
      %2619 = vmatpush1.msra.mxu0 %v1697
      %2620 = vmatprep.subr.mxu0 0.0
      %2621 = vmatpush1.msra.mxu0 %v1698
      %2622 = vmatprep.subr.mxu0 0.0
      %2623 = vmatpush1.msra.mxu0 %v1699
      %2624 = vmatprep.subr.mxu0 0.0
      %2625 = vmatpush1.msra.mxu0 %v1700
      %2626 = vmatprep.subr.mxu0 0.0
      %2627 = vmatpush1.msra.mxu0 %v1701
      %2628 = vmatprep.subr.mxu0 0.0
      %2629 = vmatpush1.msra.mxu0 %v1702
      %2630 = vmatprep.subr.mxu0 0.0
      %2631 = vmatpush1.msra.mxu0 %v1703
      %2632 = vmatprep.subr.mxu0 0.0
      %2633 = vmatpush1.msra.mxu0 %v1704
      %2634 = vmatprep.subr.mxu0 0.0
      %2635 = vmatpush1.msra.mxu0 %v1705
      %2636 = vmatprep.subr.mxu0 0.0
      %2637 = vmatpush1.msra.mxu0 %v1706
      %2638 = vmatprep.subr.mxu0 0.0
      %2639 = vmatpush1.msra.mxu0 %v1707
      %2640 = vmatprep.subr.mxu0 0.0
      %2641 = vmatpush1.msra.mxu0 0.0
      %2642 = vmatprep.subr.mxu0 0.0
      %2643 = vmatpush1.msra.mxu0 0.0
      %2644 = vmatprep.subr.mxu0 0.0
      %2645 = vmatpush1.msra.mxu0 0.0
      %2646 = vmatprep.subr.mxu0 0.0
      %2647 = vmatpush1.msra.mxu0 0.0
      %2648 = vmatprep.subr.mxu0 0.0
      %2649 = vmatpush1.msra.mxu0 0.0
      %2650 = vmatprep.subr.mxu0 0.0
      %2651 = vmatpush1.msra.mxu0 0.0
      %2652 = vmatprep.subr.mxu0 0.0
      %2653 = vmatpush1.msra.mxu0 0.0
      %2654 = vmatprep.subr.mxu0 0.0
      %2655 = vmatpush1.msra.mxu0 0.0
      %2656 = vmatprep.subr.mxu0 0.0
      %2657 = vmatpush1.msra.mxu0 0.0
      %2658 = vmatprep.subr.mxu0 0.0
      %2659 = vmatpush1.msra.mxu0 0.0
      %2660 = vmatprep.subr.mxu0 0.0
      %2661 = vmatpush1.msra.mxu0 0.0
      %2662 = vmatprep.subr.mxu0 0.0
      %2663 = vmatpush1.msra.mxu0 0.0
      %2664 = vmatprep.subr.mxu0 0.0
      %2665 = vmatpush1.msra.mxu0 0.0
      %2666 = vmatprep.subr.mxu0 0.0
      %2667 = vmatpush1.msra.mxu0 0.0
      %2668 = vmatprep.subr.mxu0 0.0
      %2669 = vmatpush1.msra.mxu0 0.0
      %2670 = vmatprep.subr.mxu0 0.0
      %2671 = vmatpush1.msra.mxu0 0.0
      %2672 = vmatprep.mubr.f32.mxu0 0.0
      %2673 = vmatmul.mubr.f32.gmra.mrb[0].mxu0 %v1459
      %v2674 = vpop.f32.mrb[0].mxu0
      %v2675 = vadd.f32 %v2450, %v2674
      %v2676 = vpop.f32.mrb[0].mxu0
      %2677 = vmatprep.mubr.f32.mxu0 0.0
      %2678 = vmatmul.mubr.f32.gmra.mrb[0].mxu0 %v1461
      %v2679 = vpop.f32.mrb[0].mxu0
      %v2680 = vadd.f32 %v2455, %v2679
      %v2681 = vpop.f32.mrb[0].mxu0
      %2682 = vmatprep.mubr.f32.mxu0 0.0
      %2683 = vmatmul.mubr.f32.gmra.mrb[0].mxu0 %v1463
      %v2684 = vpop.f32.mrb[0].mxu0
      %v2685 = vadd.f32 %v2460, %v2684
      %v2686 = vpop.f32.mrb[0].mxu0
      %2687 = vmatprep.mubr.f32.mxu0 0.0
      %2688 = vmatmul.mubr.f32.gmra.mrb[0].mxu0 %v1465
      %v2689 = vpop.f32.mrb[0].mxu0
      %v2690 = vadd.f32 %v2465, %v2689
      %v2691 = vpop.f32.mrb[0].mxu0
      %2692 = vmatprep.mubr.f32.mxu0 0.0
      %2693 = vmatmul.mubr.f32.gmra.mrb[0].mxu0 %v1467
      %v2694 = vpop.f32.mrb[0].mxu0
      %v2695 = vadd.f32 %v2470, %v2694
      %v2696 = vpop.f32.mrb[0].mxu0
      %2697 = vmatprep.mubr.f32.mxu0 0.0
      %2698 = vmatmul.mubr.f32.gmra.mrb[0].mxu0 %v1469
      %v2699 = vpop.f32.mrb[0].mxu0
      %v2700 = vadd.f32 %v2475, %v2699
      %v2701 = vpop.f32.mrb[0].mxu0
      %2702 = vmatprep.mubr.f32.mxu0 0.0
      %2703 = vmatmul.mubr.f32.gmra.mrb[0].mxu0 %v1471
      %v2704 = vpop.f32.mrb[0].mxu0
      %v2705 = vadd.f32 %v2480, %v2704
      %v2706 = vpop.f32.mrb[0].mxu0
      %2707 = vmatprep.mubr.f32.mxu0 0.0
      %2708 = vmatmul.mubr.f32.gmra.mrb[0].mxu0 %v1473
      %v2709 = vpop.f32.mrb[0].mxu0
      %v2710 = vadd.f32 %v2485, %v2709
      %v2711 = vpop.f32.mrb[0].mxu0
      %2712 = vmatprep.mubr.f32.mxu0 0.0
      %2713 = vmatmul.mubr.f32.gmra.mrb[0].mxu0 %v1475
      %v2714 = vpop.f32.mrb[0].mxu0
      %v2715 = vadd.f32 %v2490, %v2714
      %v2716 = vpop.f32.mrb[0].mxu0
      %2717 = vmatprep.mubr.f32.mxu0 0.0
      %2718 = vmatmul.mubr.f32.gmra.mrb[0].mxu0 %v1477
      %v2719 = vpop.f32.mrb[0].mxu0
      %v2720 = vadd.f32 %v2495, %v2719
      %v2721 = vpop.f32.mrb[0].mxu0
      %2722 = vmatprep.mubr.f32.mxu0 0.0
      %2723 = vmatmul.mubr.f32.gmra.mrb[0].mxu0 %v1479
      %v2724 = vpop.f32.mrb[0].mxu0
      %v2725 = vadd.f32 %v2500, %v2724
      %v2726 = vpop.f32.mrb[0].mxu0
      %2727 = vmatprep.mubr.f32.mxu0 0.0
      %2728 = vmatmul.mubr.f32.gmra.mrb[0].mxu0 %v1481
      %v2729 = vpop.f32.mrb[0].mxu0
      %v2730 = vadd.f32 %v2505, %v2729
      %v2731 = vpop.f32.mrb[0].mxu0
      %2732 = vmatprep.mubr.f32.mxu0 0.0
      %2733 = vmatmul.mubr.f32.gmra.mrb[0].mxu0 %v1483
      %v2734 = vpop.f32.mrb[0].mxu0
      %v2735 = vadd.f32 %v2510, %v2734
      %v2736 = vpop.f32.mrb[0].mxu0
      %2737 = vmatprep.mubr.f32.mxu0 0.0
      %2738 = vmatmul.mubr.f32.gmra.mrb[0].mxu0 %v1485
      %v2739 = vpop.f32.mrb[0].mxu0
      %v2740 = vadd.f32 %v2515, %v2739
      %v2741 = vpop.f32.mrb[0].mxu0
      %2742 = vmatprep.mubr.f32.mxu0 0.0
      %2743 = vmatmul.mubr.f32.gmra.mrb[0].mxu0 %v1487
      %v2744 = vpop.f32.mrb[0].mxu0
      %v2745 = vadd.f32 %v2520, %v2744
      %v2746 = vpop.f32.mrb[0].mxu0
      %2747 = vmatprep.mubr.f32.mxu0 0.0
      %2748 = vmatmul.mubr.f32.gmra.mrb[0].mxu0 %v1489
      %v2749 = vpop.f32.mrb[0].mxu0
      %v2750 = vadd.f32 %v2525, %v2749
      %v2751 = vpop.f32.mrb[0].mxu0
      %2752 = vmatprep.mubr.f32.mxu0 0.0
      %2753 = vmatmul.mubr.f32.gmra.mrb[0].mxu0 %v1491
      %v2754 = vpop.f32.mrb[0].mxu0
      %v2755 = vadd.f32 %v2530, %v2754
      %v2756 = vpop.f32.mrb[0].mxu0
      %2757 = vmatprep.mubr.f32.mxu0 0.0
      %2758 = vmatmul.mubr.f32.gmra.mrb[0].mxu0 %v1493
      %v2759 = vpop.f32.mrb[0].mxu0
      %v2760 = vadd.f32 %v2535, %v2759
      %v2761 = vpop.f32.mrb[0].mxu0
      %2762 = vmatprep.mubr.f32.mxu0 0.0
      %2763 = vmatmul.mubr.f32.gmra.mrb[0].mxu0 %v1495
      %v2764 = vpop.f32.mrb[0].mxu0
      %v2765 = vadd.f32 %v2540, %v2764
      %v2766 = vpop.f32.mrb[0].mxu0
      %2767 = vmatprep.mubr.f32.mxu0 0.0
      %2768 = vmatmul.mubr.f32.gmra.mrb[0].mxu0 %v1497
      %v2769 = vpop.f32.mrb[0].mxu0
      %v2770 = vadd.f32 %v2545, %v2769
      %v2771 = vpop.f32.mrb[0].mxu0
      %2772 = vmatprep.mubr.f32.mxu0 0.0
      %2773 = vmatmul.mubr.f32.gmra.mrb[0].mxu0 %v1499
      %v2774 = vpop.f32.mrb[0].mxu0
      %v2775 = vadd.f32 %v2550, %v2774
      %v2776 = vpop.f32.mrb[0].mxu0
      %2777 = vmatprep.mubr.f32.mxu0 0.0
      %2778 = vmatmul.mubr.f32.gmra.mrb[0].mxu0 %v1501
      %v2779 = vpop.f32.mrb[0].mxu0
      %v2780 = vadd.f32 %v2555, %v2779
      %v2781 = vpop.f32.mrb[0].mxu0
      %2782 = vmatprep.mubr.f32.mxu0 0.0
      %2783 = vmatmul.mubr.f32.gmra.mrb[0].mxu0 %v1503
      %v2784 = vpop.f32.mrb[0].mxu0
      %v2785 = vadd.f32 %v2560, %v2784
      %v2786 = vpop.f32.mrb[0].mxu0
      %2787 = vmatprep.mubr.f32.mxu0 0.0
      %2788 = vmatmul.mubr.f32.gmra.mrb[0].mxu0 %v1505
      %v2789 = vpop.f32.mrb[0].mxu0
      %v2790 = vadd.f32 %v2565, %v2789
      %v2791 = vpop.f32.mrb[0].mxu0
      %2792 = vmatprep.mubr.f32.mxu0 0.0
      %2793 = vmatmul.mubr.f32.gmra.mrb[0].mxu0 %v1507
      %v2794 = vpop.f32.mrb[0].mxu0
      %v2795 = vadd.f32 %v2570, %v2794
      %v2796 = vpop.f32.mrb[0].mxu0
      %2797 = vmatprep.mubr.f32.mxu0 0.0
      %2798 = vmatmul.mubr.f32.gmra.mrb[0].mxu0 %v1509
      %v2799 = vpop.f32.mrb[0].mxu0
      %v2800 = vadd.f32 %v2575, %v2799
      %v2801 = vpop.f32.mrb[0].mxu0
      %2802 = vmatprep.mubr.f32.mxu0 0.0
      %2803 = vmatmul.mubr.f32.gmra.mrb[0].mxu0 %v1511
      %v2804 = vpop.f32.mrb[0].mxu0
      %v2805 = vadd.f32 %v2580, %v2804
      %v2806 = vpop.f32.mrb[0].mxu0
      %2807 = vmatprep.mubr.f32.mxu0 0.0
      %2808 = vmatmul.mubr.f32.gmra.mrb[0].mxu0 %v1513
      %v2809 = vpop.f32.mrb[0].mxu0
      %v2810 = vadd.f32 %v2585, %v2809
      %v2811 = vpop.f32.mrb[0].mxu0
      %2812 = vmatprep.mubr.f32.mxu0 0.0
      %2813 = vmatmul.mubr.f32.gmra.mrb[0].mxu0 %v1555
      %v2814 = vpop.f32.mrb[0].mxu0
      %v2815 = vadd.f32 %v2590, %v2814
      %v2816 = vpop.f32.mrb[0].mxu0
      %2817 = vmatprep.mubr.f32.mxu0 0.0
      %2818 = vmatmul.mubr.f32.gmra.mrb[0].mxu0 %v1557
      %v2819 = vpop.f32.mrb[0].mxu0
      %v2820 = vadd.f32 %v2595, %v2819
      %v2821 = vpop.f32.mrb[0].mxu0
      %2822 = vmatprep.mubr.f32.mxu0 0.0
      %2823 = vmatmul.mubr.f32.gmra.mrb[0].mxu0 %v1562
      %v2824 = vpop.f32.mrb[0].mxu0
      %v2825 = vadd.f32 %v2600, %v2824
      %v2826 = vpop.f32.mrb[0].mxu0
      %2827 = vmatprep.mubr.f32.mxu0 0.0
      %2828 = vmatmul.mubr.f32.gmra.mrb[0].mxu0 %v1451
      %v2829 = vpop.f32.mrb[0].mxu0
      %v2830 = vadd.f32 %v2605, %v2829
      %v2831 = vpop.f32.mrb[0].mxu0
      %2832 = vdwg.mxu0
      %2833 = vst [vmem:[%s204] sm:$0xff] %v2675
      %2834 = vst [vmem:[%s204 + $0x8] sm:$0xff] %v2680
      %2835 = vst [vmem:[%s204 + $0x10] sm:$0xff] %v2685
      %2836 = vst [vmem:[%s204 + $0x18] sm:$0xff] %v2690
      %2837 = vst [vmem:[%s204 + $0x20] sm:$0xff] %v2695
      %2838 = vst [vmem:[%s204 + $0x28] sm:$0xff] %v2700
      %2839 = vst [vmem:[%s204 + $0x30] sm:$0xff] %v2705
      %2840 = vst [vmem:[%s204 + $0x38] sm:$0xff] %v2710
      %2841 = vst [vmem:[%s204 + $0x40] sm:$0xff] %v2715
      %2842 = vst [vmem:[%s204 + $0x48] sm:$0xff] %v2720
      %2843 = vst [vmem:[%s204 + $0x50] sm:$0xff] %v2725
      %2844 = vst [vmem:[%s204 + $0x58] sm:$0xff] %v2730
      %2845 = vst [vmem:[%s204 + $0x60] sm:$0xff] %v2735
      %2846 = vst [vmem:[%s204 + $0x68] sm:$0xff] %v2740
      %2847 = vst [vmem:[%s204 + $0x70] sm:$0xff] %v2745
      %2848 = vst [vmem:[%s204 + $0x78] sm:$0xff] %v2750
      %2849 = vst [vmem:[%s204 + $0x80] sm:$0xff] %v2755
      %2850 = vst [vmem:[%s204 + $0x88] sm:$0xff] %v2760
      %2851 = vst [vmem:[%s204 + $0x90] sm:$0xff] %v2765
      %2852 = vst [vmem:[%s204 + $0x98] sm:$0xff] %v2770
      %2853 = vst [vmem:[%s204 + $0xa0] sm:$0xff] %v2775
      %2854 = vst [vmem:[%s204 + $0xa8] sm:$0xff] %v2780
      %2855 = vst [vmem:[%s204 + $0xb0] sm:$0xff] %v2785
      %2856 = vst [vmem:[%s204 + $0xb8] sm:$0xff] %v2790
      %2857 = vst [vmem:[%s204 + $0xc0] sm:$0xff] %v2795
      %2858 = vst [vmem:[%s204 + $0xc8] sm:$0xff] %v2800
      %2859 = vst [vmem:[%s204 + $0xd0] sm:$0xff] %v2805
      %2860 = vst [vmem:[%s204 + $0xd8] sm:$0xff] %v2810
      %2861 = vst [vmem:[%s204 + $0xe0] sm:$0xff] %v2815
      %2862 = vst [vmem:[%s204 + $0xe8] sm:$0xff] %v2820
      %2863 = vst [vmem:[%s204 + $0xf0] sm:$0xff] %v2825
      %2864 = vst [vmem:[%s204 + $0xf8] sm:$0xff] %v2830
      %v2865 = vadd.f32 %v2675, %v2680
      %v2866 = vadd.f32 %v2865, %v2685
      %v2867 = vadd.f32 %v2866, %v2690
      %v2868 = vadd.f32 %v2867, %v2695
      %v2869 = vadd.f32 %v2868, %v2700
      %v2870 = vadd.f32 %v2869, %v2705
      %v2871 = vadd.f32 %v2870, %v2710
      %v2872 = vadd.f32 %v2871, %v2715
      %v2873 = vadd.f32 %v2872, %v2720
      %v2874 = vadd.f32 %v2873, %v2725
      %v2875 = vadd.f32 %v2874, %v2730
      %v2876 = vadd.f32 %v2875, %v2735
      %v2877 = vadd.f32 %v2876, %v2740
      %v2878 = vadd.f32 %v2877, %v2745
      %v2879 = vadd.f32 %v2878, %v2750
      %v2880 = vadd.f32 %v2879, %v2755
      %v2881 = vadd.f32 %v2880, %v2760
      %v2882 = vadd.f32 %v2881, %v2765
      %v2883 = vadd.f32 %v2882, %v2770
      %v2884 = vadd.f32 %v2883, %v2775
      %v2885 = vadd.f32 %v2884, %v2780
      %v2886 = vadd.f32 %v2885, %v2785
      %v2887 = vadd.f32 %v2886, %v2790
      %v2888 = vadd.f32 %v2887, %v2795
      %v2889 = vadd.f32 %v2888, %v2800
      %v2890 = vadd.f32 %v2889, %v2805
      %v2891 = vadd.f32 %v2890, %v2810
      %v2892 = vadd.f32 %v2891, %v2815
      %v2893 = vadd.f32 %v2892, %v2820
      %v2894 = vadd.f32 %v2893, %v2825
      %v2895 = vadd.f32 %v2894, %v2830
      %v2896 = vrot.slane %v2895, 4
      %v2897 = vadd.f32 %v2895, %v2896
      %v2898 = vrot.slane %v2897, 2
      %v2899 = vadd.f32 %v2897, %v2898
      %v2900 = vrot.slane %v2899, 1
      %v2901 = vadd.f32 %v2899, %v2900
      %2902 = vst [vmem:[%s208] sm:$0x1] %v2901
      %v2903 = vmul.f32 %v2675, %v2675
      %v2904 = vmul.f32 %v2680, %v2680
      %v2905 = vmul.f32 %v2685, %v2685
      %v2906 = vmul.f32 %v2690, %v2690
      %v2907 = vmul.f32 %v2695, %v2695
      %v2908 = vmul.f32 %v2700, %v2700
      %v2909 = vmul.f32 %v2705, %v2705
      %v2910 = vmul.f32 %v2710, %v2710
      %v2911 = vmul.f32 %v2715, %v2715
      %v2912 = vmul.f32 %v2720, %v2720
      %v2913 = vmul.f32 %v2725, %v2725
      %v2914 = vmul.f32 %v2730, %v2730
      %v2915 = vmul.f32 %v2735, %v2735
      %v2916 = vmul.f32 %v2740, %v2740
      %v2917 = vmul.f32 %v2745, %v2745
      %v2918 = vmul.f32 %v2750, %v2750
      %v2919 = vmul.f32 %v2755, %v2755
      %v2920 = vmul.f32 %v2760, %v2760
      %v2921 = vmul.f32 %v2765, %v2765
      %v2922 = vmul.f32 %v2770, %v2770
      %v2923 = vmul.f32 %v2775, %v2775
      %v2924 = vmul.f32 %v2780, %v2780
      %v2925 = vmul.f32 %v2785, %v2785
      %v2926 = vmul.f32 %v2790, %v2790
      %v2927 = vmul.f32 %v2795, %v2795
      %v2928 = vmul.f32 %v2800, %v2800
      %v2929 = vmul.f32 %v2805, %v2805
      %v2930 = vmul.f32 %v2810, %v2810
      %v2931 = vmul.f32 %v2815, %v2815
      %v2932 = vmul.f32 %v2820, %v2820
      %v2933 = vmul.f32 %v2825, %v2825
      %v2934 = vmul.f32 %v2830, %v2830
      %v2935 = vadd.f32 %v2903, %v2904
      %v2936 = vadd.f32 %v2935, %v2905
      %v2937 = vadd.f32 %v2936, %v2906
      %v2938 = vadd.f32 %v2937, %v2907
      %v2939 = vadd.f32 %v2938, %v2908
      %v2940 = vadd.f32 %v2939, %v2909
      %v2941 = vadd.f32 %v2940, %v2910
      %v2942 = vadd.f32 %v2941, %v2911
      %v2943 = vadd.f32 %v2942, %v2912
      %v2944 = vadd.f32 %v2943, %v2913
      %v2945 = vadd.f32 %v2944, %v2914
      %v2946 = vadd.f32 %v2945, %v2915
      %v2947 = vadd.f32 %v2946, %v2916
      %v2948 = vadd.f32 %v2947, %v2917
      %v2949 = vadd.f32 %v2948, %v2918
      %v2950 = vadd.f32 %v2949, %v2919
      %v2951 = vadd.f32 %v2950, %v2920
      %v2952 = vadd.f32 %v2951, %v2921
      %v2953 = vadd.f32 %v2952, %v2922
      %v2954 = vadd.f32 %v2953, %v2923
      %v2955 = vadd.f32 %v2954, %v2924
      %v2956 = vadd.f32 %v2955, %v2925
      %v2957 = vadd.f32 %v2956, %v2926
      %v2958 = vadd.f32 %v2957, %v2927
      %v2959 = vadd.f32 %v2958, %v2928
      %v2960 = vadd.f32 %v2959, %v2929
      %v2961 = vadd.f32 %v2960, %v2930
      %v2962 = vadd.f32 %v2961, %v2931
      %v2963 = vadd.f32 %v2962, %v2932
      %v2964 = vadd.f32 %v2963, %v2933
      %v2965 = vadd.f32 %v2964, %v2934
      %v2966 = vrot.slane %v2965, 4
      %v2967 = vadd.f32 %v2965, %v2966
      %v2968 = vrot.slane %v2967, 2
      %v2969 = vadd.f32 %v2967, %v2968
      %v2970 = vrot.slane %v2969, 1
      %v2971 = vadd.f32 %v2969, %v2970
      %2972 = vst [vmem:[%s208 + $0x1] sm:$0x1] %v2971
      %p2973 = scmp.lt.s32.totalorder %s16, 1
      %s2974 = scalar_select %p2973, %s16, 1
      %s2975 = smul.addr %s2974, 32
      %s2976 = smul.addr %s2975, 8
      %s2977 = scalar_lea.vmem %s3, %s2976
      %p2978 = scmp.lt.s32.totalorder %s16, 1
      %s2979 = scalar_select %p2978, %s16, 1
      %s2980 = smul.addr %s2979, 2
      %s2981 = scalar_lea.vmem %s4, %s2980
      // Predicated region
      $region33: #{bottleneck_forward.5} parent=31 // pred_check
        %p2982 = pneg %p102
      $region34: #{bottleneck_forward.5} parent=31 // pred_check_branch
        %2984 = sbr.rel (%p2982) target = $region36
      $region35: #{bottleneck_forward.5} parent=31 // pred_region
        _
      $region36: #{bottleneck_forward.5} parent=31 // pred_fallthru
        _
      // Predicated region
      $region37: #{bottleneck_forward.5} parent=31 // pred_check
        %p2985 = pneg %p128
      $region38: #{bottleneck_forward.5} parent=31 // pred_check_branch
        %2987 = sbr.rel (%p2985) target = $region40
      $region39: #{bottleneck_forward.5} parent=31 // pred_region
        _
      $region40: #{bottleneck_forward.5} parent=31 // pred_fallthru
        _
    $region32: #{bottleneck_forward.5} parent=5 // pred_fallthru
      _
    %p2988 = scmp.le.s32.totalorder 2, %s11
    // Predicated region
    $region41: #{bottleneck_forward.5} parent=5 // pred_check
      %p2989 = pneg %p2988
    $region42: #{bottleneck_forward.5} parent=5 // pred_check_branch
      %2991 = sbr.rel (%p2989) target = $region44
    $region43: #{bottleneck_forward.5} parent=5 // pred_region
      %s2992 = ssub.s32 %s11, 2
      // Predicated region
      $region45: #{bottleneck_forward.5} parent=43 // pred_check
        %p2993 = pneg %p108
      $region46: #{bottleneck_forward.5} parent=43 // pred_check_branch
        %2995 = sbr.rel (%p2993) target = $region48
      $region47: #{bottleneck_forward.5} parent=43 // pred_region
        %p2996 = scmp.lt.s32.totalorder %s17, 1
        %s2997 = scalar_select %p2996, %s17, 1
        %s2998 = smul.addr %s2997, 32
        %s2999 = smul.addr %s2998, 8
        %s3000 = scalar_lea.vmem %s3, %s2999
      $region48: #{bottleneck_forward.5} parent=43 // pred_fallthru
        _
      // Predicated region
      $region49: #{bottleneck_forward.5} parent=43 // pred_check
        %p3001 = pneg %p134
      $region50: #{bottleneck_forward.5} parent=43 // pred_check_branch
        %3003 = sbr.rel (%p3001) target = $region52
      $region51: #{bottleneck_forward.5} parent=43 // pred_region
        %p3004 = scmp.lt.s32.totalorder %s17, 1
        %s3005 = scalar_select %p3004, %s17, 1
        %s3006 = smul.addr %s3005, 2
        %s3007 = scalar_lea.vmem %s4, %s3006
      $region52: #{bottleneck_forward.5} parent=43 // pred_fallthru
        _
    $region44: #{bottleneck_forward.5} parent=5 // pred_fallthru
      _
  $region6: #{bottleneck_forward.5} parent=0 // loop_footer
    %s15 = sadd.s32 1, %s11
  $region7: #{bottleneck_forward.5} parent=0 // loop_footer_branch
    %10 = sbr.rel target = $region3
  $region8: #{bottleneck_forward.5} parent=0 // loop_exit
    _

</llo_original>
